<compile_context>
chip_gen: v5e
topology: v5e:2x2
jax: 0.10.0
libtpu: 0.0.40
codegen_flags: <defaults>
</compile_context>

<pallas_src>
import math
import functools

import numpy as np
import jax
import jax.numpy as jnp
from jax.experimental import pallas as pl
from jax.experimental.pallas import tpu as pltpu

EPS = 1e-5  # nn.LayerNorm default eps


# ----------------------------------------------------------------------------
# small math helpers usable inside kernels
# ----------------------------------------------------------------------------
def _erf(x):
    # Abramowitz-Stegun 7.1.26 (|err| < 1.5e-7).
    a1, a2, a3, a4, a5 = (0.254829592, -0.284496736, 1.421413741,
                          -1.453152027, 1.061405429)
    p = 0.3275911
    s = jnp.sign(x)
    a = jnp.abs(x)
    t = 1.0 / (1.0 + p * a)
    poly = ((((a5 * t + a4) * t + a3) * t + a2) * t + a1) * t
    return s * (1.0 - poly * jnp.exp(-a * a))


def _gelu_exact(x):
    return 0.5 * x * (1.0 + _erf(x * (1.0 / math.sqrt(2.0))))


def _layernorm(x, g, b):
    mu = jnp.mean(x, axis=-1, keepdims=True)
    var = jnp.mean((x - mu) ** 2, axis=-1, keepdims=True)
    return (x - mu) * jax.lax.rsqrt(var + EPS) * g + b


# ----------------------------------------------------------------------------
# Pallas kernels
# ----------------------------------------------------------------------------
def attn_kernel(x_ref, g_ref, b_ref, wqkv_ref, bqkv_ref, rb_ref, mask_ref,
                wp_ref, bp_ref, o_ref, *, num_heads, head_dim, win, n_ww):
    """One stripe of windows: norm1 + fused qkv proj + window attention +
    output projection, reading / writing the (B, H, W, C) image layout."""
    C = num_heads * head_dim
    N = win * win
    W = win * n_ww
    f32 = jnp.float32
    bf16 = jnp.bfloat16

    xb = x_ref[0].reshape(win * W, C)                           # (rows, C)
    xn = _layernorm(xb, g_ref[...], b_ref[...])
    qkv = jnp.dot(xn.astype(bf16), wqkv_ref[...],
                  preferred_element_type=f32) + bqkv_ref[...]   # (rows, 3C)
    qkv = qkv.reshape(win, W, 3 * C)

    rb = rb_ref[...]                                            # (nh, N, N)
    wp = wp_ref[...]                                            # (nh, hd, C) bf16
    bp = bp_ref[...]                                            # (1, C)
    n_mask = mask_ref.shape[1]

    for wi in range(n_ww):                                      # windows in stripe
        qkv_w = qkv[:, wi * win:(wi + 1) * win, :].reshape(N, 3 * C)
        m_w = mask_ref[0, wi % n_mask]                          # (N, N)
        q = qkv_w[:, :C]                                        # scale pre-folded
        k = qkv_w[:, C:2 * C]
        v = qkv_w[:, 2 * C:]
        out_acc = jnp.zeros((N, C), f32)
        for h in range(num_heads):
            sl = slice(h * head_dim, (h + 1) * head_dim)
            s = jax.lax.dot_general(
                q[:, sl].astype(bf16), k[:, sl].astype(bf16),
                dimension_numbers=(((1,), (1,)), ((), ())),
                preferred_element_type=f32)                     # (N, N)
            s = s + rb[h] + m_w
            mmax = jnp.max(s, axis=-1, keepdims=True)
            e = jnp.exp(s - mmax)
            p_attn = e * pl.reciprocal(jnp.sum(e, axis=-1, keepdims=True),
                                       approx=True)
            y_h = jnp.dot(p_attn.astype(bf16), v[:, sl].astype(bf16),
                          preferred_element_type=f32)           # (N, hd)
            out_acc = out_acc + jnp.dot(y_h.astype(bf16), wp[h],
                                        preferred_element_type=f32)
        out_acc = out_acc + bp
        o_ref[0, :, wi * win:(wi + 1) * win, :] = out_acc.reshape(win, win, C)


def leff_kernel(x_ref, a_ref, g_ref, b_ref, w1_ref, b1_ref, dww_ref, dwb_ref,
                w2_ref, b2_ref, o_ref, *, H, W):
    """Fused LeFF branch for one image:
       x1 = x + attn ; h = GELU(norm2(x1) @ W1 + b1) ;
       conv = GELU(dwconv3x3(h) + b_dw) ; out = x1 + conv @ W2 + b2."""
    hid = w1_ref.shape[1]
    L = H * W
    f32 = jnp.float32
    bf16 = jnp.bfloat16

    x1 = x_ref[0] + a_ref[0]                                    # (L, C)
    xn = _layernorm(x1, g_ref[...], b_ref[...])
    h = _gelu_exact(jnp.dot(xn.astype(bf16), w1_ref[...],
                            preferred_element_type=f32) + b1_ref[...])
    hm = h.reshape(H, W, hid)

    # 3x3 depthwise conv, padding=1 (cross-correlation, like nn.Conv2d).
    # dx shifts via sublane-axis concat with a zero column; dy shifts via
    # major-axis concat with a zero row.  No padded scratch, no HBM traffic.
    zc = jnp.zeros((H, 1, hid), f32)
    left = jnp.concatenate([zc, hm[:, :W - 1, :]], axis=1)      # h[y, x-1]
    right = jnp.concatenate([hm[:, 1:, :], zc], axis=1)         # h[y, x+1]
    dww = dww_ref[...]                                          # (9, hid)
    rows = []
    for ky in range(3):
        rows.append(left * dww[3 * ky + 0][None, None, :]
                    + hm * dww[3 * ky + 1][None, None, :]
                    + right * dww[3 * ky + 2][None, None, :])
    zr = jnp.zeros((1, W, hid), f32)
    conv = (jnp.concatenate([zr, rows[0][:H - 1]], axis=0)      # input row y-1
            + rows[1]                                           # input row y
            + jnp.concatenate([rows[2][1:], zr], axis=0))       # input row y+1
    conv = _gelu_exact(conv + dwb_ref[...][None])               # (H, W, hid)

    y = jnp.dot(conv.reshape(L, hid).astype(bf16), w2_ref[...],
                preferred_element_type=f32) + b2_ref[...]
    o_ref[0] = x1 + y


# ----------------------------------------------------------------------------
# JAX glue (parameter prep / window bookkeeping)
# ----------------------------------------------------------------------------
def _cparams(sem, est_bytes):
    limit = int(min(100 << 20, max(32 << 20, 2 * est_bytes)))
    return pltpu.CompilerParams(dimension_semantics=sem, vmem_limit_bytes=limit)


def window_partition_jax(x, w):
    B, H, W, C = x.shape
    x = x.reshape(B, H // w, w, W // w, w, C)
    x = jnp.transpose(x, (0, 1, 3, 2, 4, 5))
    return x.reshape(-1, w, w, C)


def window_reverse_jax(windows, w, H, W):
    B = windows.shape[0] // (H * W // (w * w))
    x = windows.reshape(B, H // w, W // w, w, w, -1)
    x = jnp.transpose(x, (0, 1, 3, 2, 4, 5))
    return x.reshape(B, H, W, -1)


def relative_position_bias(table, win_size, num_heads):
    coords = jnp.stack(jnp.meshgrid(jnp.arange(win_size), jnp.arange(win_size),
                                    indexing="ij"))               # (2, w, w)
    flat = coords.reshape(2, -1)                                   # (2, N)
    rel = flat[:, :, None] - flat[:, None, :]                      # (2, N, N)
    rel = jnp.transpose(rel, (1, 2, 0))
    idx = (rel[..., 0] + win_size - 1) * (2 * win_size - 1) + (rel[..., 1] + win_size - 1)
    N = win_size * win_size
    bias = table[idx.reshape(-1)].reshape(N, N, num_heads)
    return jnp.transpose(bias, (2, 0, 1))                          # (nh, N, N)


def build_shift_attn_mask(H, W, win_size, shift_size):
    m = np.zeros((1, H, W, 1), np.float32)
    if shift_size > 0:
        slices = (slice(0, -win_size), slice(-win_size, -shift_size),
                  slice(-shift_size, None))
    else:
        slices = (slice(0, None),)
    cnt = 0
    for hs in slices:
        for ws in slices:
            m[:, hs, ws, :] = cnt
            cnt += 1
    mw = window_partition_jax(jnp.asarray(m), win_size).reshape(-1, win_size * win_size)
    am = mw[:, None, :] - mw[:, :, None]
    return jnp.where(am != 0, -100.0, 0.0).astype(jnp.float32)    # (nW, N, N)


def fix_transformer_block_pallas(x, p, *, num_heads, win_size, shift_size=0):
    B, L, C = x.shape
    H = W = round(math.sqrt(L))
    assert H * W == L, "token grid must be square"
    assert H % win_size == 0 and W % win_size == 0, "resolution not divisible by win_size"
    nh = num_heads
    hd = C // nh
    assert nh * hd == C
    scale = hd ** -0.5
    hidden = p["leff_w1"].shape[0]
    N = win_size * win_size
    n_wh, n_ww = H // win_size, W // win_size
    f32, bf16 = jnp.float32, jnp.bfloat16

    # ---- parameter prep (tiny, once per call) -------------------------------
    ln1_w = p["ln1_w"].reshape(1, C).astype(f32)
    ln1_b = p["ln1_b"].reshape(1, C).astype(f32)
    wqkv = jnp.concatenate([p["wq"].T * scale, p["wkv"].T], axis=1).astype(bf16)  # (C,3C)
    bqkv = jnp.concatenate([p["bq"] * scale, p["bkv"]]).reshape(1, 3 * C).astype(f32)
    rel_bias = relative_position_bias(p["rpb"], win_size, nh).astype(f32)  # (nh,N,N)
    wp3 = p["proj_w"].T.reshape(nh, hd, C).astype(bf16)
    bp = p["proj_b"].reshape(1, C).astype(f32)

    x_img = x.reshape(B, H, W, C)
    if shift_size > 0:
        x_sh = jnp.roll(x_img, (-shift_size, -shift_size), (1, 2))
        mask = build_shift_attn_mask(H, W, win_size, shift_size)          # (nW,N,N)
        mask = mask.reshape(n_wh, n_ww, N, N)
        mask_spec = pl.BlockSpec((1, n_ww, N, N), lambda b, r: (r, 0, 0, 0))
    else:
        x_sh = x_img
        mask = jnp.zeros((1, 1, N, N), f32)
        mask_spec = pl.BlockSpec((1, 1, N, N), lambda b, r: (0, 0, 0, 0))

    # ---- kernel 1: fused norm1 + qkv + window attention + out proj ----------
    est_a = (2 * win_size * W * C * 4 * 2 + mask.size * 4 + rel_bias.size * 4
             + wqkv.size * 2 + wp3.size * 2 + (1 << 20))
    attn_img = pl.pallas_call(
        functools.partial(attn_kernel, num_heads=nh, head_dim=hd,
                          win=win_size, n_ww=n_ww),
        out_shape=jax.ShapeDtypeStruct((B, H, W, C), f32),
        grid=(B, n_wh),
        in_specs=[
            pl.BlockSpec((1, win_size, W, C), lambda b, r: (b, r, 0, 0)),
            pl.BlockSpec((1, C), lambda b, r: (0, 0)),
            pl.BlockSpec((1, C), lambda b, r: (0, 0)),
            pl.BlockSpec((C, 3 * C), lambda b, r: (0, 0)),
            pl.BlockSpec((1, 3 * C), lambda b, r: (0, 0)),
            pl.BlockSpec((nh, N, N), lambda b, r: (0, 0, 0)),
            mask_spec,
            pl.BlockSpec((nh, hd, C), lambda b, r: (0, 0, 0)),
            pl.BlockSpec((1, C), lambda b, r: (0, 0)),
        ],
        out_specs=pl.BlockSpec((1, win_size, W, C), lambda b, r: (b, r, 0, 0)),
        compiler_params=_cparams(("parallel", "parallel"), est_a),
    )(x_sh, ln1_w, ln1_b, wqkv, bqkv, rel_bias, mask, wp3, bp)

    if shift_size > 0:
        attn_img = jnp.roll(attn_img, (shift_size, shift_size), (1, 2))
    attn2d = attn_img.reshape(B, L, C)

    # ---- kernel 2: fully fused LeFF branch (per image) ----------------------
    ln2_w = p["ln2_w"].reshape(1, C).astype(f32)
    ln2_b = p["ln2_b"].reshape(1, C).astype(f32)
    w1 = p["leff_w1"].T.astype(bf16)                                 # (C, hidden)
    b1 = p["leff_b1"].reshape(1, hidden).astype(f32)
    dww = jnp.transpose(p["dw_w"][:, 0], (1, 2, 0)).reshape(9, hidden).astype(f32)
    dwb = p["dw_b"].reshape(1, hidden).astype(f32)
    w2 = p["leff_w2"].T.astype(bf16)                                 # (hidden, C)
    b2 = p["leff_b2"].reshape(1, C).astype(f32)

    est_b = (2 * L * C * 4 * 2 + L * C * 4 * 2 + 6 * L * hidden * 4
             + w1.size * 2 + w2.size * 2 + (1 << 20))
    out3d = pl.pallas_call(
        functools.partial(leff_kernel, H=H, W=W),
        out_shape=jax.ShapeDtypeStruct((B, L, C), f32),
        grid=(B,),
        in_specs=[
            pl.BlockSpec((1, L, C), lambda b: (b, 0, 0)),
            pl.BlockSpec((1, L, C), lambda b: (b, 0, 0)),
            pl.BlockSpec((1, C), lambda b: (0, 0)),
            pl.BlockSpec((1, C), lambda b: (0, 0)),
            pl.BlockSpec((C, hidden), lambda b: (0, 0)),
            pl.BlockSpec((1, hidden), lambda b: (0, 0)),
            pl.BlockSpec((9, hidden), lambda b: (0, 0)),
            pl.BlockSpec((1, hidden), lambda b: (0, 0)),
            pl.BlockSpec((hidden, C), lambda b: (0, 0)),
            pl.BlockSpec((1, C), lambda b: (0, 0)),
        ],
        out_specs=pl.BlockSpec((1, L, C), lambda b: (b, 0, 0)),
        compiler_params=_cparams(("parallel",), est_b),
    )(x, attn2d, ln2_w, ln2_b, w1, b1, dww, dwb, w2, b2)

    return out3d


# ----------------------------------------------------------------------------
# pure-JAX reference (mirrors the PyTorch forward) for a sanity check
# ----------------------------------------------------------------------------
def reference_forward(x, p, *, num_heads, win_size, shift_size=0):
    B, L, C = x.shape
    H = W = round(math.sqrt(L))
    nh, hd = num_heads, C // num_heads
    scale = hd ** -0.5
    N = win_size * win_size
    nW = (H // win_size) * (W // win_size)

    def ln(v, g, b):
        mu = v.mean(-1, keepdims=True)
        var = ((v - mu) ** 2).mean(-1, keepdims=True)
        return (v - mu) / jnp.sqrt(var + EPS) * g + b

    shortcut = x
    xn = ln(x, p["ln1_w"], p["ln1_b"])
    q = xn @ p["wq"].T + p["bq"]
    kv = xn @ p["wkv"].T + p["bkv"]
    q = q.reshape(B, H, W, C)
    kv = kv.reshape(B, H, W, 2 * C)
    if shift_size > 0:
        q = jnp.roll(q, (-shift_size, -shift_size), (1, 2))
        kv = jnp.roll(kv, (-shift_size, -shift_size), (1, 2))
    qw = window_partition_jax(q, win_size).reshape(-1, N, nh, hd).transpose(0, 2, 1, 3)
    kvw = window_partition_jax(kv, win_size).reshape(-1, N, 2, nh, hd).transpose(2, 0, 3, 1, 4)
    kw, vw = kvw[0], kvw[1]
    attn = jnp.einsum("bhnd,bhmd->bhnm", qw * scale, kw)
    attn = attn + relative_position_bias(p["rpb"], win_size, nh)[None]
    sm = build_shift_attn_mask(H, W, win_size, shift_size)
    attn = attn.reshape(B, nW, nh, N, N) + sm[None, :, None]
    attn = attn.reshape(-1, nh, N, N)
    attn = jax.nn.softmax(attn, axis=-1)
    y = jnp.einsum("bhnm,bhmd->bhnd", attn, vw).transpose(0, 2, 1, 3).reshape(-1, N, C)
    y = y @ p["proj_w"].T + p["proj_b"]
    xsp = window_reverse_jax(y.reshape(-1, win_size, win_size, C), win_size, H, W)
    if shift_size > 0:
        xsp = jnp.roll(xsp, (shift_size, shift_size), (1, 2))
    x1 = shortcut + xsp.reshape(B, L, C)

    xn2 = ln(x1, p["ln2_w"], p["ln2_b"])
    h = jax.nn.gelu(xn2 @ p["leff_w1"].T + p["leff_b1"], approximate=False)
    hidden = h.shape[-1]
    himg = h.reshape(B, H, W, hidden)
    kern = jnp.transpose(p["dw_w"], (2, 3, 1, 0))                  # HWIO (3,3,1,hid)
    conv = jax.lax.conv_general_dilated(
        himg, kern, window_strides=(1, 1), padding="SAME",
        dimension_numbers=("NHWC", "HWIO", "NHWC"),
        feature_group_count=hidden)
    conv = jax.nn.gelu(conv + p["dw_b"], approximate=False)
    h2 = conv.reshape(B, L, hidden)
    return x1 + (h2 @ p["leff_w2"].T + p["leff_b2"])


# ----------------------------------------------------------------------------
def make_params(key, dim, num_heads, win_size, hidden):
    ks = jax.random.split(key, 13)

    def rnd(k, shape, s=0.1):
        return s * jax.random.normal(k, shape, jnp.float32)

    return dict(
        ln1_w=jnp.ones((dim,), jnp.float32), ln1_b=jnp.zeros((dim,), jnp.float32),
        ln2_w=jnp.ones((dim,), jnp.float32), ln2_b=jnp.zeros((dim,), jnp.float32),
        wq=rnd(ks[0], (dim, dim)), bq=rnd(ks[1], (dim,), 0.05),
        wkv=rnd(ks[2], (2 * dim, dim)), bkv=rnd(ks[3], (2 * dim,), 0.05),
        # module inits this table to zeros; use small random values to exercise it
        rpb=rnd(ks[4], ((2 * win_size - 1) ** 2, num_heads), 0.02),
        proj_w=rnd(ks[5], (dim, dim)), proj_b=rnd(ks[6], (dim,), 0.05),
        leff_w1=rnd(ks[7], (hidden, dim)), leff_b1=rnd(ks[8], (hidden,), 0.05),
        dw_w=rnd(ks[9], (hidden, 1, 3, 3)), dw_b=rnd(ks[10], (hidden,), 0.05),
        leff_w2=rnd(ks[11], (dim, hidden)), leff_b2=rnd(ks[12], (dim,), 0.05),
    )


if __name__ == "__main__":
    dim, num_heads, win_size, mlp_ratio, depth = 32, 4, 8, 4.0, 2
    B, H, W = 2, 16, 16                  # 2x2 windows per image -> exercises both
    L = H * W                            # the stripe loop and the shifted block
    hidden = int(dim * mlp_ratio)

    root = jax.random.PRNGKey(0)
    keys = jax.random.split(root, depth + 1)
    kx, kblk = keys[0], keys[1:]
    params_list = [make_params(k, dim, num_heads, win_size, hidden) for k in kblk]
    x = jax.random.normal(kx, (B, L, dim), jnp.float32)

    # BasicFixformerLayer: `depth` blocks, shift_size = 0 / win_size//2 alternating
    out = x
    for i, p in enumerate(params_list):
        shift = 0 if i % 2 == 0 else win_size // 2
        out = fix_transformer_block_pallas(out, p, num_heads=num_heads,
                                           win_size=win_size, shift_size=shift)
    out = jax.block_until_ready(out)

    with jax.default_matmul_precision("highest"):
        ref = x
        for i, p in enumerate(params_list):
            shift = 0 if i % 2 == 0 else win_size // 2
            ref = reference_forward(ref, p, num_heads=num_heads,
                                    win_size=win_size, shift_size=shift)

    assert out.shape == (B, L, dim)
    assert bool(jnp.all(jnp.isfinite(out)))
    err = float(jnp.max(jnp.abs(out - ref)))
    # bf16 MXU operands in the kernels vs highest-precision f32 reference over
    # two chained blocks -> allow a few e-2 of matmul rounding noise.
    assert bool(jnp.allclose(out, ref, atol=5e-2, rtol=5e-2)), err
    print("KERNEL_OK")
</pallas_src>

<mosaic_0001>
module attributes {stable_mosaic.version = 11 : i64} {
  func.func @attn_kernel(%arg0: i32, %arg1: i32, %arg2: memref<1x8x16x32xf32, #tpu.memory_space<vmem>>, %arg3: memref<1x32xf32, #tpu.memory_space<vmem>>, %arg4: memref<1x32xf32, #tpu.memory_space<vmem>>, %arg5: memref<32x96xbf16, #tpu.memory_space<vmem>>, %arg6: memref<1x96xf32, #tpu.memory_space<vmem>>, %arg7: memref<4x64x64xf32, #tpu.memory_space<vmem>>, %arg8: memref<1x1x64x64xf32, #tpu.memory_space<vmem>>, %arg9: memref<4x8x32xbf16, #tpu.memory_space<vmem>>, %arg10: memref<1x32xf32, #tpu.memory_space<vmem>>, %arg11: memref<1x8x16x32xf32, #tpu.memory_space<vmem>>) attributes {dimension_semantics = [#tpu.dimension_semantics<parallel>, #tpu.dimension_semantics<parallel>], iteration_bounds = array<i64: 2, 2>, scalar_prefetch = 0 : i64, scratch_operands = 0 : i64, tpu.core_type = #tpu.core_type<tc>, window_params = [{transform_indices = @transform_0, window_bounds = array<i64: 1, 8, 16, 32>}, {pipeline_mode = #tpu.pipeline_mode<synchronous>, transform_indices = @transform_1, window_bounds = array<i64: 1, 32>}, {pipeline_mode = #tpu.pipeline_mode<synchronous>, transform_indices = @transform_2, window_bounds = array<i64: 1, 32>}, {pipeline_mode = #tpu.pipeline_mode<synchronous>, transform_indices = @transform_3, window_bounds = array<i64: 32, 96>}, {pipeline_mode = #tpu.pipeline_mode<synchronous>, transform_indices = @transform_4, window_bounds = array<i64: 1, 96>}, {pipeline_mode = #tpu.pipeline_mode<synchronous>, transform_indices = @transform_5, window_bounds = array<i64: 4, 64, 64>}, {pipeline_mode = #tpu.pipeline_mode<synchronous>, transform_indices = @transform_6, window_bounds = array<i64: 1, 1, 64, 64>}, {pipeline_mode = #tpu.pipeline_mode<synchronous>, transform_indices = @transform_7, window_bounds = array<i64: 4, 8, 32>}, {pipeline_mode = #tpu.pipeline_mode<synchronous>, transform_indices = @transform_8, window_bounds = array<i64: 1, 32>}, {transform_indices = @transform_9, window_bounds = array<i64: 1, 8, 16, 32>}]} {
    %c0 = arith.constant 0 : index
    %c0_0 = arith.constant 0 : index
    %c0_1 = arith.constant 0 : index
    %c0_2 = arith.constant 0 : index
    %0 = vector.load %arg2[%c0, %c0_0, %c0_1, %c0_2] : memref<1x8x16x32xf32, #tpu.memory_space<vmem>>, vector<1x8x16x32xf32>
    %1 = vector.shape_cast %0 : vector<1x8x16x32xf32> to vector<8x16x32xf32>
    %2 = vector.shape_cast %1 : vector<8x16x32xf32> to vector<128x32xf32>
    %c0_3 = arith.constant 0 : index
    %c0_4 = arith.constant 0 : index
    %3 = vector.load %arg3[%c0_3, %c0_4] : memref<1x32xf32, #tpu.memory_space<vmem>>, vector<1x32xf32>
    %c0_5 = arith.constant 0 : index
    %c0_6 = arith.constant 0 : index
    %4 = vector.load %arg4[%c0_5, %c0_6] : memref<1x32xf32, #tpu.memory_space<vmem>>, vector<1x32xf32>
    %cst = arith.constant dense<0.000000e+00> : vector<128xf32>
    %5 = vector.multi_reduction <add>, %2, %cst [1] : vector<128x32xf32> to vector<128xf32>
    %6 = vector.shape_cast %5 : vector<128xf32> to vector<128x1xf32>
    %cst_7 = arith.constant 3.200000e+01 : f32
    %7 = vector.broadcast %cst_7 : f32 to vector<128x1xf32>
    %8 = arith.divf %6, %7 : vector<128x1xf32>
    %9 = vector.broadcast %8 : vector<128x1xf32> to vector<128x32xf32>
    %10 = arith.subf %2, %9 : vector<128x32xf32>
    %11 = arith.mulf %10, %10 : vector<128x32xf32>
    %cst_8 = arith.constant dense<0.000000e+00> : vector<128xf32>
    %12 = vector.multi_reduction <add>, %11, %cst_8 [1] : vector<128x32xf32> to vector<128xf32>
    %13 = vector.shape_cast %12 : vector<128xf32> to vector<128x1xf32>
    %cst_9 = arith.constant 3.200000e+01 : f32
    %14 = vector.broadcast %cst_9 : f32 to vector<128x1xf32>
    %15 = arith.divf %13, %14 : vector<128x1xf32>
    %16 = vector.broadcast %8 : vector<128x1xf32> to vector<128x32xf32>
    %17 = arith.subf %2, %16 : vector<128x32xf32>
    %cst_10 = arith.constant 9.99999974E-6 : f32
    %18 = vector.broadcast %cst_10 : f32 to vector<128x1xf32>
    %19 = arith.addf %15, %18 : vector<128x1xf32>
    %20 = math.rsqrt %19 : vector<128x1xf32>
    %21 = vector.broadcast %20 : vector<128x1xf32> to vector<128x32xf32>
    %22 = arith.mulf %17, %21 : vector<128x32xf32>
    %23 = vector.broadcast %3 : vector<1x32xf32> to vector<128x32xf32>
    %24 = arith.mulf %22, %23 : vector<128x32xf32>
    %25 = vector.broadcast %4 : vector<1x32xf32> to vector<128x32xf32>
    %26 = arith.addf %24, %25 : vector<128x32xf32>
    %27 = arith.truncf %26 : vector<128x32xf32> to vector<128x32xbf16>
    %c0_11 = arith.constant 0 : index
    %c0_12 = arith.constant 0 : index
    %28 = vector.load %arg5[%c0_11, %c0_12] : memref<32x96xbf16, #tpu.memory_space<vmem>>, vector<32x96xbf16>
    %cst_13 = arith.constant dense<0.000000e+00> : vector<128x96xf32>
    %29 = tpu.matmul %27, %28, %cst_13 {dimension_numbers = #tpu.dot_dimension_numbers<[1], [0], [0], [1], [0, 0, 1, 1], [], []>} : vector<128x32xbf16>, vector<32x96xbf16>, vector<128x96xf32> -> vector<128x96xf32>
    %c0_14 = arith.constant 0 : index
    %c0_15 = arith.constant 0 : index
    %30 = vector.load %arg6[%c0_14, %c0_15] : memref<1x96xf32, #tpu.memory_space<vmem>>, vector<1x96xf32>
    %31 = vector.broadcast %30 : vector<1x96xf32> to vector<128x96xf32>
    %32 = arith.addf %29, %31 : vector<128x96xf32>
    %33 = vector.shape_cast %32 : vector<128x96xf32> to vector<8x16x96xf32>
    %c0_16 = arith.constant 0 : index
    %c0_17 = arith.constant 0 : index
    %c0_18 = arith.constant 0 : index
    %34 = vector.load %arg7[%c0_16, %c0_17, %c0_18] : memref<4x64x64xf32, #tpu.memory_space<vmem>>, vector<4x64x64xf32>
    %c0_19 = arith.constant 0 : index
    %c0_20 = arith.constant 0 : index
    %c0_21 = arith.constant 0 : index
    %35 = vector.load %arg9[%c0_19, %c0_20, %c0_21] : memref<4x8x32xbf16, #tpu.memory_space<vmem>>, vector<4x8x32xbf16>
    %c0_22 = arith.constant 0 : index
    %c0_23 = arith.constant 0 : index
    %36 = vector.load %arg10[%c0_22, %c0_23] : memref<1x32xf32, #tpu.memory_space<vmem>>, vector<1x32xf32>
    %37 = vector.extract_strided_slice %33 {offsets = [0, 0, 0], sizes = [8, 8, 96], strides = [1, 1, 1]} : vector<8x16x96xf32> to vector<8x8x96xf32>
    %38 = vector.shape_cast %37 : vector<8x8x96xf32> to vector<64x96xf32>
    %c0_24 = arith.constant 0 : index
    %c0_25 = arith.constant 0 : index
    %c0_26 = arith.constant 0 : index
    %c0_27 = arith.constant 0 : index
    %39 = vector.load %arg8[%c0_24, %c0_25, %c0_26, %c0_27] : memref<1x1x64x64xf32, #tpu.memory_space<vmem>>, vector<1x1x64x64xf32>
    %40 = vector.shape_cast %39 : vector<1x1x64x64xf32> to vector<64x64xf32>
    %41 = vector.extract_strided_slice %38 {offsets = [0, 0], sizes = [64, 32], strides = [1, 1]} : vector<64x96xf32> to vector<64x32xf32>
    %42 = vector.extract_strided_slice %38 {offsets = [0, 32], sizes = [64, 32], strides = [1, 1]} : vector<64x96xf32> to vector<64x32xf32>
    %43 = vector.extract_strided_slice %38 {offsets = [0, 64], sizes = [64, 32], strides = [1, 1]} : vector<64x96xf32> to vector<64x32xf32>
    %cst_28 = arith.constant 0.000000e+00 : f32
    %44 = vector.broadcast %cst_28 : f32 to vector<64x32xf32>
    %45 = vector.extract_strided_slice %41 {offsets = [0, 0], sizes = [64, 8], strides = [1, 1]} : vector<64x32xf32> to vector<64x8xf32>
    %46 = arith.truncf %45 : vector<64x8xf32> to vector<64x8xbf16>
    %47 = vector.extract_strided_slice %42 {offsets = [0, 0], sizes = [64, 8], strides = [1, 1]} : vector<64x32xf32> to vector<64x8xf32>
    %48 = arith.truncf %47 : vector<64x8xf32> to vector<64x8xbf16>
    %cst_29 = arith.constant dense<0.000000e+00> : vector<64x64xf32>
    %49 = tpu.matmul %46, %48, %cst_29 {dimension_numbers = #tpu.dot_dimension_numbers<[1], [1], [0], [0], [0, 0, 1, 0], [], []>} : vector<64x8xbf16>, vector<64x8xbf16>, vector<64x64xf32> -> vector<64x64xf32>
    %50 = vector.extract_strided_slice %34 {offsets = [0, 0, 0], sizes = [1, 64, 64], strides = [1, 1, 1]} : vector<4x64x64xf32> to vector<1x64x64xf32>
    %51 = vector.shape_cast %50 : vector<1x64x64xf32> to vector<64x64xf32>
    %52 = arith.addf %49, %51 : vector<64x64xf32>
    %53 = arith.addf %52, %40 : vector<64x64xf32>
    %cst_30 = arith.constant dense<0xFF800000> : vector<64xf32>
    %54 = vector.multi_reduction <maximumf>, %53, %cst_30 [1] : vector<64x64xf32> to vector<64xf32>
    %55 = vector.shape_cast %54 : vector<64xf32> to vector<64x1xf32>
    %56 = vector.broadcast %55 : vector<64x1xf32> to vector<64x64xf32>
    %57 = arith.subf %53, %56 : vector<64x64xf32>
    %58 = math.exp %57 : vector<64x64xf32>
    %cst_31 = arith.constant dense<0.000000e+00> : vector<64xf32>
    %59 = vector.multi_reduction <add>, %58, %cst_31 [1] : vector<64x64xf32> to vector<64xf32>
    %60 = vector.shape_cast %59 : vector<64xf32> to vector<64x1xf32>
    %61 = tpu.reciprocal %60 {approx = true} : vector<64x1xf32> -> vector<64x1xf32>
    %62 = vector.broadcast %61 : vector<64x1xf32> to vector<64x64xf32>
    %63 = arith.mulf %58, %62 : vector<64x64xf32>
    %64 = arith.truncf %63 : vector<64x64xf32> to vector<64x64xbf16>
    %65 = vector.extract_strided_slice %43 {offsets = [0, 0], sizes = [64, 8], strides = [1, 1]} : vector<64x32xf32> to vector<64x8xf32>
    %66 = arith.truncf %65 : vector<64x8xf32> to vector<64x8xbf16>
    %cst_32 = arith.constant dense<0.000000e+00> : vector<64x8xf32>
    %67 = tpu.matmul %64, %66, %cst_32 {dimension_numbers = #tpu.dot_dimension_numbers<[1], [0], [0], [1], [0, 0, 1, 1], [], []>} : vector<64x64xbf16>, vector<64x8xbf16>, vector<64x8xf32> -> vector<64x8xf32>
    %68 = arith.truncf %67 : vector<64x8xf32> to vector<64x8xbf16>
    %69 = vector.extract_strided_slice %35 {offsets = [0, 0, 0], sizes = [1, 8, 32], strides = [1, 1, 1]} : vector<4x8x32xbf16> to vector<1x8x32xbf16>
    %70 = vector.shape_cast %69 : vector<1x8x32xbf16> to vector<8x32xbf16>
    %cst_33 = arith.constant dense<0.000000e+00> : vector<64x32xf32>
    %71 = tpu.matmul %68, %70, %cst_33 {dimension_numbers = #tpu.dot_dimension_numbers<[1], [0], [0], [1], [0, 0, 1, 1], [], []>} : vector<64x8xbf16>, vector<8x32xbf16>, vector<64x32xf32> -> vector<64x32xf32>
    %72 = arith.addf %44, %71 : vector<64x32xf32>
    %73 = vector.extract_strided_slice %41 {offsets = [0, 8], sizes = [64, 8], strides = [1, 1]} : vector<64x32xf32> to vector<64x8xf32>
    %74 = arith.truncf %73 : vector<64x8xf32> to vector<64x8xbf16>
    %75 = vector.extract_strided_slice %42 {offsets = [0, 8], sizes = [64, 8], strides = [1, 1]} : vector<64x32xf32> to vector<64x8xf32>
    %76 = arith.truncf %75 : vector<64x8xf32> to vector<64x8xbf16>
    %cst_34 = arith.constant dense<0.000000e+00> : vector<64x64xf32>
    %77 = tpu.matmul %74, %76, %cst_34 {dimension_numbers = #tpu.dot_dimension_numbers<[1], [1], [0], [0], [0, 0, 1, 0], [], []>} : vector<64x8xbf16>, vector<64x8xbf16>, vector<64x64xf32> -> vector<64x64xf32>
    %78 = vector.extract_strided_slice %34 {offsets = [1, 0, 0], sizes = [1, 64, 64], strides = [1, 1, 1]} : vector<4x64x64xf32> to vector<1x64x64xf32>
    %79 = vector.shape_cast %78 : vector<1x64x64xf32> to vector<64x64xf32>
    %80 = arith.addf %77, %79 : vector<64x64xf32>
    %81 = arith.addf %80, %40 : vector<64x64xf32>
    %cst_35 = arith.constant dense<0xFF800000> : vector<64xf32>
    %82 = vector.multi_reduction <maximumf>, %81, %cst_35 [1] : vector<64x64xf32> to vector<64xf32>
    %83 = vector.shape_cast %82 : vector<64xf32> to vector<64x1xf32>
    %84 = vector.broadcast %83 : vector<64x1xf32> to vector<64x64xf32>
    %85 = arith.subf %81, %84 : vector<64x64xf32>
    %86 = math.exp %85 : vector<64x64xf32>
    %cst_36 = arith.constant dense<0.000000e+00> : vector<64xf32>
    %87 = vector.multi_reduction <add>, %86, %cst_36 [1] : vector<64x64xf32> to vector<64xf32>
    %88 = vector.shape_cast %87 : vector<64xf32> to vector<64x1xf32>
    %89 = tpu.reciprocal %88 {approx = true} : vector<64x1xf32> -> vector<64x1xf32>
    %90 = vector.broadcast %89 : vector<64x1xf32> to vector<64x64xf32>
    %91 = arith.mulf %86, %90 : vector<64x64xf32>
    %92 = arith.truncf %91 : vector<64x64xf32> to vector<64x64xbf16>
    %93 = vector.extract_strided_slice %43 {offsets = [0, 8], sizes = [64, 8], strides = [1, 1]} : vector<64x32xf32> to vector<64x8xf32>
    %94 = arith.truncf %93 : vector<64x8xf32> to vector<64x8xbf16>
    %cst_37 = arith.constant dense<0.000000e+00> : vector<64x8xf32>
    %95 = tpu.matmul %92, %94, %cst_37 {dimension_numbers = #tpu.dot_dimension_numbers<[1], [0], [0], [1], [0, 0, 1, 1], [], []>} : vector<64x64xbf16>, vector<64x8xbf16>, vector<64x8xf32> -> vector<64x8xf32>
    %96 = arith.truncf %95 : vector<64x8xf32> to vector<64x8xbf16>
    %97 = vector.extract_strided_slice %35 {offsets = [1, 0, 0], sizes = [1, 8, 32], strides = [1, 1, 1]} : vector<4x8x32xbf16> to vector<1x8x32xbf16>
    %98 = vector.shape_cast %97 : vector<1x8x32xbf16> to vector<8x32xbf16>
    %cst_38 = arith.constant dense<0.000000e+00> : vector<64x32xf32>
    %99 = tpu.matmul %96, %98, %cst_38 {dimension_numbers = #tpu.dot_dimension_numbers<[1], [0], [0], [1], [0, 0, 1, 1], [], []>} : vector<64x8xbf16>, vector<8x32xbf16>, vector<64x32xf32> -> vector<64x32xf32>
    %100 = arith.addf %72, %99 : vector<64x32xf32>
    %101 = vector.extract_strided_slice %41 {offsets = [0, 16], sizes = [64, 8], strides = [1, 1]} : vector<64x32xf32> to vector<64x8xf32>
    %102 = arith.truncf %101 : vector<64x8xf32> to vector<64x8xbf16>
    %103 = vector.extract_strided_slice %42 {offsets = [0, 16], sizes = [64, 8], strides = [1, 1]} : vector<64x32xf32> to vector<64x8xf32>
    %104 = arith.truncf %103 : vector<64x8xf32> to vector<64x8xbf16>
    %cst_39 = arith.constant dense<0.000000e+00> : vector<64x64xf32>
    %105 = tpu.matmul %102, %104, %cst_39 {dimension_numbers = #tpu.dot_dimension_numbers<[1], [1], [0], [0], [0, 0, 1, 0], [], []>} : vector<64x8xbf16>, vector<64x8xbf16>, vector<64x64xf32> -> vector<64x64xf32>
    %106 = vector.extract_strided_slice %34 {offsets = [2, 0, 0], sizes = [1, 64, 64], strides = [1, 1, 1]} : vector<4x64x64xf32> to vector<1x64x64xf32>
    %107 = vector.shape_cast %106 : vector<1x64x64xf32> to vector<64x64xf32>
    %108 = arith.addf %105, %107 : vector<64x64xf32>
    %109 = arith.addf %108, %40 : vector<64x64xf32>
    %cst_40 = arith.constant dense<0xFF800000> : vector<64xf32>
    %110 = vector.multi_reduction <maximumf>, %109, %cst_40 [1] : vector<64x64xf32> to vector<64xf32>
    %111 = vector.shape_cast %110 : vector<64xf32> to vector<64x1xf32>
    %112 = vector.broadcast %111 : vector<64x1xf32> to vector<64x64xf32>
    %113 = arith.subf %109, %112 : vector<64x64xf32>
    %114 = math.exp %113 : vector<64x64xf32>
    %cst_41 = arith.constant dense<0.000000e+00> : vector<64xf32>
    %115 = vector.multi_reduction <add>, %114, %cst_41 [1] : vector<64x64xf32> to vector<64xf32>
    %116 = vector.shape_cast %115 : vector<64xf32> to vector<64x1xf32>
    %117 = tpu.reciprocal %116 {approx = true} : vector<64x1xf32> -> vector<64x1xf32>
    %118 = vector.broadcast %117 : vector<64x1xf32> to vector<64x64xf32>
    %119 = arith.mulf %114, %118 : vector<64x64xf32>
    %120 = arith.truncf %119 : vector<64x64xf32> to vector<64x64xbf16>
    %121 = vector.extract_strided_slice %43 {offsets = [0, 16], sizes = [64, 8], strides = [1, 1]} : vector<64x32xf32> to vector<64x8xf32>
    %122 = arith.truncf %121 : vector<64x8xf32> to vector<64x8xbf16>
    %cst_42 = arith.constant dense<0.000000e+00> : vector<64x8xf32>
    %123 = tpu.matmul %120, %122, %cst_42 {dimension_numbers = #tpu.dot_dimension_numbers<[1], [0], [0], [1], [0, 0, 1, 1], [], []>} : vector<64x64xbf16>, vector<64x8xbf16>, vector<64x8xf32> -> vector<64x8xf32>
    %124 = arith.truncf %123 : vector<64x8xf32> to vector<64x8xbf16>
    %125 = vector.extract_strided_slice %35 {offsets = [2, 0, 0], sizes = [1, 8, 32], strides = [1, 1, 1]} : vector<4x8x32xbf16> to vector<1x8x32xbf16>
    %126 = vector.shape_cast %125 : vector<1x8x32xbf16> to vector<8x32xbf16>
    %cst_43 = arith.constant dense<0.000000e+00> : vector<64x32xf32>
    %127 = tpu.matmul %124, %126, %cst_43 {dimension_numbers = #tpu.dot_dimension_numbers<[1], [0], [0], [1], [0, 0, 1, 1], [], []>} : vector<64x8xbf16>, vector<8x32xbf16>, vector<64x32xf32> -> vector<64x32xf32>
    %128 = arith.addf %100, %127 : vector<64x32xf32>
    %129 = vector.extract_strided_slice %41 {offsets = [0, 24], sizes = [64, 8], strides = [1, 1]} : vector<64x32xf32> to vector<64x8xf32>
    %130 = arith.truncf %129 : vector<64x8xf32> to vector<64x8xbf16>
    %131 = vector.extract_strided_slice %42 {offsets = [0, 24], sizes = [64, 8], strides = [1, 1]} : vector<64x32xf32> to vector<64x8xf32>
    %132 = arith.truncf %131 : vector<64x8xf32> to vector<64x8xbf16>
    %cst_44 = arith.constant dense<0.000000e+00> : vector<64x64xf32>
    %133 = tpu.matmul %130, %132, %cst_44 {dimension_numbers = #tpu.dot_dimension_numbers<[1], [1], [0], [0], [0, 0, 1, 0], [], []>} : vector<64x8xbf16>, vector<64x8xbf16>, vector<64x64xf32> -> vector<64x64xf32>
    %134 = vector.extract_strided_slice %34 {offsets = [3, 0, 0], sizes = [1, 64, 64], strides = [1, 1, 1]} : vector<4x64x64xf32> to vector<1x64x64xf32>
    %135 = vector.shape_cast %134 : vector<1x64x64xf32> to vector<64x64xf32>
    %136 = arith.addf %133, %135 : vector<64x64xf32>
    %137 = arith.addf %136, %40 : vector<64x64xf32>
    %cst_45 = arith.constant dense<0xFF800000> : vector<64xf32>
    %138 = vector.multi_reduction <maximumf>, %137, %cst_45 [1] : vector<64x64xf32> to vector<64xf32>
    %139 = vector.shape_cast %138 : vector<64xf32> to vector<64x1xf32>
    %140 = vector.broadcast %139 : vector<64x1xf32> to vector<64x64xf32>
    %141 = arith.subf %137, %140 : vector<64x64xf32>
    %142 = math.exp %141 : vector<64x64xf32>
    %cst_46 = arith.constant dense<0.000000e+00> : vector<64xf32>
    %143 = vector.multi_reduction <add>, %142, %cst_46 [1] : vector<64x64xf32> to vector<64xf32>
    %144 = vector.shape_cast %143 : vector<64xf32> to vector<64x1xf32>
    %145 = tpu.reciprocal %144 {approx = true} : vector<64x1xf32> -> vector<64x1xf32>
    %146 = vector.broadcast %145 : vector<64x1xf32> to vector<64x64xf32>
    %147 = arith.mulf %142, %146 : vector<64x64xf32>
    %148 = arith.truncf %147 : vector<64x64xf32> to vector<64x64xbf16>
    %149 = vector.extract_strided_slice %43 {offsets = [0, 24], sizes = [64, 8], strides = [1, 1]} : vector<64x32xf32> to vector<64x8xf32>
    %150 = arith.truncf %149 : vector<64x8xf32> to vector<64x8xbf16>
    %cst_47 = arith.constant dense<0.000000e+00> : vector<64x8xf32>
    %151 = tpu.matmul %148, %150, %cst_47 {dimension_numbers = #tpu.dot_dimension_numbers<[1], [0], [0], [1], [0, 0, 1, 1], [], []>} : vector<64x64xbf16>, vector<64x8xbf16>, vector<64x8xf32> -> vector<64x8xf32>
    %152 = arith.truncf %151 : vector<64x8xf32> to vector<64x8xbf16>
    %153 = vector.extract_strided_slice %35 {offsets = [3, 0, 0], sizes = [1, 8, 32], strides = [1, 1, 1]} : vector<4x8x32xbf16> to vector<1x8x32xbf16>
    %154 = vector.shape_cast %153 : vector<1x8x32xbf16> to vector<8x32xbf16>
    %cst_48 = arith.constant dense<0.000000e+00> : vector<64x32xf32>
    %155 = tpu.matmul %152, %154, %cst_48 {dimension_numbers = #tpu.dot_dimension_numbers<[1], [0], [0], [1], [0, 0, 1, 1], [], []>} : vector<64x8xbf16>, vector<8x32xbf16>, vector<64x32xf32> -> vector<64x32xf32>
    %156 = arith.addf %128, %155 : vector<64x32xf32>
    %157 = vector.broadcast %36 : vector<1x32xf32> to vector<64x32xf32>
    %158 = arith.addf %156, %157 : vector<64x32xf32>
    %159 = vector.shape_cast %158 : vector<64x32xf32> to vector<8x8x32xf32>
    %c0_49 = arith.constant 0 : index
    %c0_50 = arith.constant 0 : index
    %c0_51 = arith.constant 0 : index
    %c0_52 = arith.constant 0 : index
    %160 = vector.load %arg11[%c0_49, %c0_50, %c0_51, %c0_52] : memref<1x8x16x32xf32, #tpu.memory_space<vmem>>, vector<1x8x8x32xf32>
    %161 = vector.shape_cast %160 : vector<1x8x8x32xf32> to vector<8x8x32xf32>
    %162 = vector.shape_cast %159 : vector<8x8x32xf32> to vector<1x8x8x32xf32>
    tpu.vector_store %arg11[%c0_49, %c0_50, %c0_51, %c0_52], %162 {strides = array<i32>} : memref<1x8x16x32xf32, #tpu.memory_space<vmem>>, vector<1x8x8x32xf32>,
    %163 = vector.extract_strided_slice %33 {offsets = [0, 8, 0], sizes = [8, 8, 96], strides = [1, 1, 1]} : vector<8x16x96xf32> to vector<8x8x96xf32>
    %164 = vector.shape_cast %163 : vector<8x8x96xf32> to vector<64x96xf32>
    %c0_53 = arith.constant 0 : index
    %c0_54 = arith.constant 0 : index
    %c0_55 = arith.constant 0 : index
    %c0_56 = arith.constant 0 : index
    %165 = vector.load %arg8[%c0_53, %c0_54, %c0_55, %c0_56] : memref<1x1x64x64xf32, #tpu.memory_space<vmem>>, vector<1x1x64x64xf32>
    %166 = vector.shape_cast %165 : vector<1x1x64x64xf32> to vector<64x64xf32>
    %167 = vector.extract_strided_slice %164 {offsets = [0, 0], sizes = [64, 32], strides = [1, 1]} : vector<64x96xf32> to vector<64x32xf32>
    %168 = vector.extract_strided_slice %164 {offsets = [0, 32], sizes = [64, 32], strides = [1, 1]} : vector<64x96xf32> to vector<64x32xf32>
    %169 = vector.extract_strided_slice %164 {offsets = [0, 64], sizes = [64, 32], strides = [1, 1]} : vector<64x96xf32> to vector<64x32xf32>
    %cst_57 = arith.constant 0.000000e+00 : f32
    %170 = vector.broadcast %cst_57 : f32 to vector<64x32xf32>
    %171 = vector.extract_strided_slice %167 {offsets = [0, 0], sizes = [64, 8], strides = [1, 1]} : vector<64x32xf32> to vector<64x8xf32>
    %172 = arith.truncf %171 : vector<64x8xf32> to vector<64x8xbf16>
    %173 = vector.extract_strided_slice %168 {offsets = [0, 0], sizes = [64, 8], strides = [1, 1]} : vector<64x32xf32> to vector<64x8xf32>
    %174 = arith.truncf %173 : vector<64x8xf32> to vector<64x8xbf16>
    %cst_58 = arith.constant dense<0.000000e+00> : vector<64x64xf32>
    %175 = tpu.matmul %172, %174, %cst_58 {dimension_numbers = #tpu.dot_dimension_numbers<[1], [1], [0], [0], [0, 0, 1, 0], [], []>} : vector<64x8xbf16>, vector<64x8xbf16>, vector<64x64xf32> -> vector<64x64xf32>
    %176 = vector.extract_strided_slice %34 {offsets = [0, 0, 0], sizes = [1, 64, 64], strides = [1, 1, 1]} : vector<4x64x64xf32> to vector<1x64x64xf32>
    %177 = vector.shape_cast %176 : vector<1x64x64xf32> to vector<64x64xf32>
    %178 = arith.addf %175, %177 : vector<64x64xf32>
    %179 = arith.addf %178, %166 : vector<64x64xf32>
    %cst_59 = arith.constant dense<0xFF800000> : vector<64xf32>
    %180 = vector.multi_reduction <maximumf>, %179, %cst_59 [1] : vector<64x64xf32> to vector<64xf32>
    %181 = vector.shape_cast %180 : vector<64xf32> to vector<64x1xf32>
    %182 = vector.broadcast %181 : vector<64x1xf32> to vector<64x64xf32>
    %183 = arith.subf %179, %182 : vector<64x64xf32>
    %184 = math.exp %183 : vector<64x64xf32>
    %cst_60 = arith.constant dense<0.000000e+00> : vector<64xf32>
    %185 = vector.multi_reduction <add>, %184, %cst_60 [1] : vector<64x64xf32> to vector<64xf32>
    %186 = vector.shape_cast %185 : vector<64xf32> to vector<64x1xf32>
    %187 = tpu.reciprocal %186 {approx = true} : vector<64x1xf32> -> vector<64x1xf32>
    %188 = vector.broadcast %187 : vector<64x1xf32> to vector<64x64xf32>
    %189 = arith.mulf %184, %188 : vector<64x64xf32>
    %190 = arith.truncf %189 : vector<64x64xf32> to vector<64x64xbf16>
    %191 = vector.extract_strided_slice %169 {offsets = [0, 0], sizes = [64, 8], strides = [1, 1]} : vector<64x32xf32> to vector<64x8xf32>
    %192 = arith.truncf %191 : vector<64x8xf32> to vector<64x8xbf16>
    %cst_61 = arith.constant dense<0.000000e+00> : vector<64x8xf32>
    %193 = tpu.matmul %190, %192, %cst_61 {dimension_numbers = #tpu.dot_dimension_numbers<[1], [0], [0], [1], [0, 0, 1, 1], [], []>} : vector<64x64xbf16>, vector<64x8xbf16>, vector<64x8xf32> -> vector<64x8xf32>
    %194 = arith.truncf %193 : vector<64x8xf32> to vector<64x8xbf16>
    %195 = vector.extract_strided_slice %35 {offsets = [0, 0, 0], sizes = [1, 8, 32], strides = [1, 1, 1]} : vector<4x8x32xbf16> to vector<1x8x32xbf16>
    %196 = vector.shape_cast %195 : vector<1x8x32xbf16> to vector<8x32xbf16>
    %cst_62 = arith.constant dense<0.000000e+00> : vector<64x32xf32>
    %197 = tpu.matmul %194, %196, %cst_62 {dimension_numbers = #tpu.dot_dimension_numbers<[1], [0], [0], [1], [0, 0, 1, 1], [], []>} : vector<64x8xbf16>, vector<8x32xbf16>, vector<64x32xf32> -> vector<64x32xf32>
    %198 = arith.addf %170, %197 : vector<64x32xf32>
    %199 = vector.extract_strided_slice %167 {offsets = [0, 8], sizes = [64, 8], strides = [1, 1]} : vector<64x32xf32> to vector<64x8xf32>
    %200 = arith.truncf %199 : vector<64x8xf32> to vector<64x8xbf16>
    %201 = vector.extract_strided_slice %168 {offsets = [0, 8], sizes = [64, 8], strides = [1, 1]} : vector<64x32xf32> to vector<64x8xf32>
    %202 = arith.truncf %201 : vector<64x8xf32> to vector<64x8xbf16>
    %cst_63 = arith.constant dense<0.000000e+00> : vector<64x64xf32>
    %203 = tpu.matmul %200, %202, %cst_63 {dimension_numbers = #tpu.dot_dimension_numbers<[1], [1], [0], [0], [0, 0, 1, 0], [], []>} : vector<64x8xbf16>, vector<64x8xbf16>, vector<64x64xf32> -> vector<64x64xf32>
    %204 = vector.extract_strided_slice %34 {offsets = [1, 0, 0], sizes = [1, 64, 64], strides = [1, 1, 1]} : vector<4x64x64xf32> to vector<1x64x64xf32>
    %205 = vector.shape_cast %204 : vector<1x64x64xf32> to vector<64x64xf32>
    %206 = arith.addf %203, %205 : vector<64x64xf32>
    %207 = arith.addf %206, %166 : vector<64x64xf32>
    %cst_64 = arith.constant dense<0xFF800000> : vector<64xf32>
    %208 = vector.multi_reduction <maximumf>, %207, %cst_64 [1] : vector<64x64xf32> to vector<64xf32>
    %209 = vector.shape_cast %208 : vector<64xf32> to vector<64x1xf32>
    %210 = vector.broadcast %209 : vector<64x1xf32> to vector<64x64xf32>
    %211 = arith.subf %207, %210 : vector<64x64xf32>
    %212 = math.exp %211 : vector<64x64xf32>
    %cst_65 = arith.constant dense<0.000000e+00> : vector<64xf32>
    %213 = vector.multi_reduction <add>, %212, %cst_65 [1] : vector<64x64xf32> to vector<64xf32>
    %214 = vector.shape_cast %213 : vector<64xf32> to vector<64x1xf32>
    %215 = tpu.reciprocal %214 {approx = true} : vector<64x1xf32> -> vector<64x1xf32>
    %216 = vector.broadcast %215 : vector<64x1xf32> to vector<64x64xf32>
    %217 = arith.mulf %212, %216 : vector<64x64xf32>
    %218 = arith.truncf %217 : vector<64x64xf32> to vector<64x64xbf16>
    %219 = vector.extract_strided_slice %169 {offsets = [0, 8], sizes = [64, 8], strides = [1, 1]} : vector<64x32xf32> to vector<64x8xf32>
    %220 = arith.truncf %219 : vector<64x8xf32> to vector<64x8xbf16>
    %cst_66 = arith.constant dense<0.000000e+00> : vector<64x8xf32>
    %221 = tpu.matmul %218, %220, %cst_66 {dimension_numbers = #tpu.dot_dimension_numbers<[1], [0], [0], [1], [0, 0, 1, 1], [], []>} : vector<64x64xbf16>, vector<64x8xbf16>, vector<64x8xf32> -> vector<64x8xf32>
    %222 = arith.truncf %221 : vector<64x8xf32> to vector<64x8xbf16>
    %223 = vector.extract_strided_slice %35 {offsets = [1, 0, 0], sizes = [1, 8, 32], strides = [1, 1, 1]} : vector<4x8x32xbf16> to vector<1x8x32xbf16>
    %224 = vector.shape_cast %223 : vector<1x8x32xbf16> to vector<8x32xbf16>
    %cst_67 = arith.constant dense<0.000000e+00> : vector<64x32xf32>
    %225 = tpu.matmul %222, %224, %cst_67 {dimension_numbers = #tpu.dot_dimension_numbers<[1], [0], [0], [1], [0, 0, 1, 1], [], []>} : vector<64x8xbf16>, vector<8x32xbf16>, vector<64x32xf32> -> vector<64x32xf32>
    %226 = arith.addf %198, %225 : vector<64x32xf32>
    %227 = vector.extract_strided_slice %167 {offsets = [0, 16], sizes = [64, 8], strides = [1, 1]} : vector<64x32xf32> to vector<64x8xf32>
    %228 = arith.truncf %227 : vector<64x8xf32> to vector<64x8xbf16>
    %229 = vector.extract_strided_slice %168 {offsets = [0, 16], sizes = [64, 8], strides = [1, 1]} : vector<64x32xf32> to vector<64x8xf32>
    %230 = arith.truncf %229 : vector<64x8xf32> to vector<64x8xbf16>
    %cst_68 = arith.constant dense<0.000000e+00> : vector<64x64xf32>
    %231 = tpu.matmul %228, %230, %cst_68 {dimension_numbers = #tpu.dot_dimension_numbers<[1], [1], [0], [0], [0, 0, 1, 0], [], []>} : vector<64x8xbf16>, vector<64x8xbf16>, vector<64x64xf32> -> vector<64x64xf32>
    %232 = vector.extract_strided_slice %34 {offsets = [2, 0, 0], sizes = [1, 64, 64], strides = [1, 1, 1]} : vector<4x64x64xf32> to vector<1x64x64xf32>
    %233 = vector.shape_cast %232 : vector<1x64x64xf32> to vector<64x64xf32>
    %234 = arith.addf %231, %233 : vector<64x64xf32>
    %235 = arith.addf %234, %166 : vector<64x64xf32>
    %cst_69 = arith.constant dense<0xFF800000> : vector<64xf32>
    %236 = vector.multi_reduction <maximumf>, %235, %cst_69 [1] : vector<64x64xf32> to vector<64xf32>
    %237 = vector.shape_cast %236 : vector<64xf32> to vector<64x1xf32>
    %238 = vector.broadcast %237 : vector<64x1xf32> to vector<64x64xf32>
    %239 = arith.subf %235, %238 : vector<64x64xf32>
    %240 = math.exp %239 : vector<64x64xf32>
    %cst_70 = arith.constant dense<0.000000e+00> : vector<64xf32>
    %241 = vector.multi_reduction <add>, %240, %cst_70 [1] : vector<64x64xf32> to vector<64xf32>
    %242 = vector.shape_cast %241 : vector<64xf32> to vector<64x1xf32>
    %243 = tpu.reciprocal %242 {approx = true} : vector<64x1xf32> -> vector<64x1xf32>
    %244 = vector.broadcast %243 : vector<64x1xf32> to vector<64x64xf32>
    %245 = arith.mulf %240, %244 : vector<64x64xf32>
    %246 = arith.truncf %245 : vector<64x64xf32> to vector<64x64xbf16>
    %247 = vector.extract_strided_slice %169 {offsets = [0, 16], sizes = [64, 8], strides = [1, 1]} : vector<64x32xf32> to vector<64x8xf32>
    %248 = arith.truncf %247 : vector<64x8xf32> to vector<64x8xbf16>
    %cst_71 = arith.constant dense<0.000000e+00> : vector<64x8xf32>
    %249 = tpu.matmul %246, %248, %cst_71 {dimension_numbers = #tpu.dot_dimension_numbers<[1], [0], [0], [1], [0, 0, 1, 1], [], []>} : vector<64x64xbf16>, vector<64x8xbf16>, vector<64x8xf32> -> vector<64x8xf32>
    %250 = arith.truncf %249 : vector<64x8xf32> to vector<64x8xbf16>
    %251 = vector.extract_strided_slice %35 {offsets = [2, 0, 0], sizes = [1, 8, 32], strides = [1, 1, 1]} : vector<4x8x32xbf16> to vector<1x8x32xbf16>
    %252 = vector.shape_cast %251 : vector<1x8x32xbf16> to vector<8x32xbf16>
    %cst_72 = arith.constant dense<0.000000e+00> : vector<64x32xf32>
    %253 = tpu.matmul %250, %252, %cst_72 {dimension_numbers = #tpu.dot_dimension_numbers<[1], [0], [0], [1], [0, 0, 1, 1], [], []>} : vector<64x8xbf16>, vector<8x32xbf16>, vector<64x32xf32> -> vector<64x32xf32>
    %254 = arith.addf %226, %253 : vector<64x32xf32>
    %255 = vector.extract_strided_slice %167 {offsets = [0, 24], sizes = [64, 8], strides = [1, 1]} : vector<64x32xf32> to vector<64x8xf32>
    %256 = arith.truncf %255 : vector<64x8xf32> to vector<64x8xbf16>
    %257 = vector.extract_strided_slice %168 {offsets = [0, 24], sizes = [64, 8], strides = [1, 1]} : vector<64x32xf32> to vector<64x8xf32>
    %258 = arith.truncf %257 : vector<64x8xf32> to vector<64x8xbf16>
    %cst_73 = arith.constant dense<0.000000e+00> : vector<64x64xf32>
    %259 = tpu.matmul %256, %258, %cst_73 {dimension_numbers = #tpu.dot_dimension_numbers<[1], [1], [0], [0], [0, 0, 1, 0], [], []>} : vector<64x8xbf16>, vector<64x8xbf16>, vector<64x64xf32> -> vector<64x64xf32>
    %260 = vector.extract_strided_slice %34 {offsets = [3, 0, 0], sizes = [1, 64, 64], strides = [1, 1, 1]} : vector<4x64x64xf32> to vector<1x64x64xf32>
    %261 = vector.shape_cast %260 : vector<1x64x64xf32> to vector<64x64xf32>
    %262 = arith.addf %259, %261 : vector<64x64xf32>
    %263 = arith.addf %262, %166 : vector<64x64xf32>
    %cst_74 = arith.constant dense<0xFF800000> : vector<64xf32>
    %264 = vector.multi_reduction <maximumf>, %263, %cst_74 [1] : vector<64x64xf32> to vector<64xf32>
    %265 = vector.shape_cast %264 : vector<64xf32> to vector<64x1xf32>
    %266 = vector.broadcast %265 : vector<64x1xf32> to vector<64x64xf32>
    %267 = arith.subf %263, %266 : vector<64x64xf32>
    %268 = math.exp %267 : vector<64x64xf32>
    %cst_75 = arith.constant dense<0.000000e+00> : vector<64xf32>
    %269 = vector.multi_reduction <add>, %268, %cst_75 [1] : vector<64x64xf32> to vector<64xf32>
    %270 = vector.shape_cast %269 : vector<64xf32> to vector<64x1xf32>
    %271 = tpu.reciprocal %270 {approx = true} : vector<64x1xf32> -> vector<64x1xf32>
    %272 = vector.broadcast %271 : vector<64x1xf32> to vector<64x64xf32>
    %273 = arith.mulf %268, %272 : vector<64x64xf32>
    %274 = arith.truncf %273 : vector<64x64xf32> to vector<64x64xbf16>
    %275 = vector.extract_strided_slice %169 {offsets = [0, 24], sizes = [64, 8], strides = [1, 1]} : vector<64x32xf32> to vector<64x8xf32>
    %276 = arith.truncf %275 : vector<64x8xf32> to vector<64x8xbf16>
    %cst_76 = arith.constant dense<0.000000e+00> : vector<64x8xf32>
    %277 = tpu.matmul %274, %276, %cst_76 {dimension_numbers = #tpu.dot_dimension_numbers<[1], [0], [0], [1], [0, 0, 1, 1], [], []>} : vector<64x64xbf16>, vector<64x8xbf16>, vector<64x8xf32> -> vector<64x8xf32>
    %278 = arith.truncf %277 : vector<64x8xf32> to vector<64x8xbf16>
    %279 = vector.extract_strided_slice %35 {offsets = [3, 0, 0], sizes = [1, 8, 32], strides = [1, 1, 1]} : vector<4x8x32xbf16> to vector<1x8x32xbf16>
    %280 = vector.shape_cast %279 : vector<1x8x32xbf16> to vector<8x32xbf16>
    %cst_77 = arith.constant dense<0.000000e+00> : vector<64x32xf32>
    %281 = tpu.matmul %278, %280, %cst_77 {dimension_numbers = #tpu.dot_dimension_numbers<[1], [0], [0], [1], [0, 0, 1, 1], [], []>} : vector<64x8xbf16>, vector<8x32xbf16>, vector<64x32xf32> -> vector<64x32xf32>
    %282 = arith.addf %254, %281 : vector<64x32xf32>
    %283 = vector.broadcast %36 : vector<1x32xf32> to vector<64x32xf32>
    %284 = arith.addf %282, %283 : vector<64x32xf32>
    %285 = vector.shape_cast %284 : vector<64x32xf32> to vector<8x8x32xf32>
    %c0_78 = arith.constant 0 : index
    %c0_79 = arith.constant 0 : index
    %c8 = arith.constant 8 : index
    %c0_80 = arith.constant 0 : index
    %286 = vector.load %arg11[%c0_78, %c0_79, %c8, %c0_80] : memref<1x8x16x32xf32, #tpu.memory_space<vmem>>, vector<1x8x8x32xf32>
    %287 = vector.shape_cast %286 : vector<1x8x8x32xf32> to vector<8x8x32xf32>
    %288 = vector.shape_cast %285 : vector<8x8x32xf32> to vector<1x8x8x32xf32>
    tpu.vector_store %arg11[%c0_78, %c0_79, %c8, %c0_80], %288 {strides = array<i32>} : memref<1x8x16x32xf32, #tpu.memory_space<vmem>>, vector<1x8x8x32xf32>,
    return
  }
  func.func @transform_0(%arg0: i32, %arg1: i32) -> (i32, i32, i32, i32) {
    %c0_i32 = arith.constant 0 : i32
    %c0_i32_0 = arith.constant 0 : i32
    %c0_i32_1 = arith.constant 0 : i32
    return %arg0, %arg1, %c0_i32, %c0_i32_0 : i32, i32, i32, i32
  }
  func.func @transform_1(%arg0: i32, %arg1: i32) -> (i32, i32) {
    %c0_i32 = arith.constant 0 : i32
    %c0_i32_0 = arith.constant 0 : i32
    %c0_i32_1 = arith.constant 0 : i32
    return %c0_i32, %c0_i32_0 : i32, i32
  }
  func.func @transform_2(%arg0: i32, %arg1: i32) -> (i32, i32) {
    %c0_i32 = arith.constant 0 : i32
    %c0_i32_0 = arith.constant 0 : i32
    %c0_i32_1 = arith.constant 0 : i32
    return %c0_i32, %c0_i32_0 : i32, i32
  }
  func.func @transform_3(%arg0: i32, %arg1: i32) -> (i32, i32) {
    %c0_i32 = arith.constant 0 : i32
    %c0_i32_0 = arith.constant 0 : i32
    %c0_i32_1 = arith.constant 0 : i32
    return %c0_i32, %c0_i32_0 : i32, i32
  }
  func.func @transform_4(%arg0: i32, %arg1: i32) -> (i32, i32) {
    %c0_i32 = arith.constant 0 : i32
    %c0_i32_0 = arith.constant 0 : i32
    %c0_i32_1 = arith.constant 0 : i32
    return %c0_i32, %c0_i32_0 : i32, i32
  }
  func.func @transform_5(%arg0: i32, %arg1: i32) -> (i32, i32, i32) {
    %c0_i32 = arith.constant 0 : i32
    %c0_i32_0 = arith.constant 0 : i32
    %c0_i32_1 = arith.constant 0 : i32
    %c0_i32_2 = arith.constant 0 : i32
    return %c0_i32, %c0_i32_0, %c0_i32_1 : i32, i32, i32
  }
  func.func @transform_6(%arg0: i32, %arg1: i32) -> (i32, i32, i32, i32) {
    %c0_i32 = arith.constant 0 : i32
    %c0_i32_0 = arith.constant 0 : i32
    %c0_i32_1 = arith.constant 0 : i32
    %c0_i32_2 = arith.constant 0 : i32
    %c0_i32_3 = arith.constant 0 : i32
    return %c0_i32, %c0_i32_0, %c0_i32_1, %c0_i32_2 : i32, i32, i32, i32
  }
  func.func @transform_7(%arg0: i32, %arg1: i32) -> (i32, i32, i32) {
    %c0_i32 = arith.constant 0 : i32
    %c0_i32_0 = arith.constant 0 : i32
    %c0_i32_1 = arith.constant 0 : i32
    %c0_i32_2 = arith.constant 0 : i32
    return %c0_i32, %c0_i32_0, %c0_i32_1 : i32, i32, i32
  }
  func.func @transform_8(%arg0: i32, %arg1: i32) -> (i32, i32) {
    %c0_i32 = arith.constant 0 : i32
    %c0_i32_0 = arith.constant 0 : i32
    %c0_i32_1 = arith.constant 0 : i32
    return %c0_i32, %c0_i32_0 : i32, i32
  }
  func.func @transform_9(%arg0: i32, %arg1: i32) -> (i32, i32, i32, i32) {
    %c0_i32 = arith.constant 0 : i32
    %c0_i32_0 = arith.constant 0 : i32
    %c0_i32_1 = arith.constant 0 : i32
    return %arg0, %arg1, %c0_i32, %c0_i32_0 : i32, i32, i32, i32
  }
}

</mosaic_0001>

<llo_original>
// kernel: tpu_custom_call.1
$region0: #{tpu_custom_call.1}
  #allocation0 [shape = 'u32[]', space=smem, size = 0x4, offset = 0x4, fixed_abs, tag = 'smem constant byte address 0x4 - core index']
  #allocation1 [shape = 'u32[72,128]{1,0:T(1,128)}', space=vmem, size = 0x9000, scoped, tag = 'internal scratch']
  %s0 = inlined_call_operand.hbm [shape: f32[2,16,16,32], index: 0, kind: input, shape index: {}]
  %s1 = inlined_call_operand.hbm [shape: f32[1,32], index: 1, kind: input, shape index: {}]
  %s2 = inlined_call_operand.vmem [shape: f32[1,32], index: 2, kind: input, shape index: {}]
  %s3 = inlined_call_operand.hbm [shape: bf16[32,96], index: 3, kind: input, shape index: {}]
  %s4 = inlined_call_operand.vmem [shape: f32[1,96], index: 4, kind: input, shape index: {}]
  %s5 = inlined_call_operand.hbm [shape: f32[4,64,64], index: 5, kind: input, shape index: {}]
  %s6 = inlined_call_operand.hbm [shape: f32[1,1,64,64], index: 6, kind: input, shape index: {}]
  %s7 = inlined_call_operand.hbm [shape: bf16[4,8,32], index: 7, kind: input, shape index: {}]
  %s8 = inlined_call_operand.vmem [shape: f32[1,32], index: 8, kind: input, shape index: {}]
  %s9 = inlined_call_operand.hbm [shape: f32[2,16,16,32], index: 9, kind: output, shape index: {}]
  %s10 = sld [smem:[#allocation0]]
  $region93: #{tpu_custom_call.1} parent=0
    _
  %s12 = ssub.s32 1, %s10
  %s13 = scalar_select 0, %s12, %s10
  $region1: #{tpu_custom_call.1} parent=0
    #allocation2 [shape = 'u8[131072]{0}', space=vmem, size = 0x20000, scoped, tag = 'input window, operand 0']
    #allocation3 [shape = 's32[2]{0}', space=sflag, size = 0x8, scoped, tag = 'scoped memory for tpu_custom_call.1']
    #allocation4 [shape = 's32[2]{0}', space=sflag, size = 0x8, scoped, tag = 'scoped memory for tpu_custom_call.1']
    #allocation5 [shape = 'u8[512]{0}', space=vmem, size = 0x400, scoped, tag = 'input window, operand 1, single buffered']
    #allocation6 [shape = 's32[1]{0}', space=sflag, size = 0x4, scoped, tag = 'scoped memory for tpu_custom_call.1']
    #allocation7 [shape = 'u8[8192]{0}', space=vmem, size = 0x2000, scoped, tag = 'input window, operand 3, single buffered']
    #allocation8 [shape = 'u8[131072]{0}', space=vmem, size = 0x20000, scoped, tag = 'input window, operand 5, single buffered']
    #allocation9 [shape = 's32[1]{0}', space=sflag, size = 0x4, scoped, tag = 'scoped memory for tpu_custom_call.1']
    #allocation10 [shape = 'u8[32768]{0}', space=vmem, size = 0x8000, scoped, tag = 'input window, operand 6, single buffered']
    #allocation11 [shape = 'u8[8192]{0}', space=vmem, size = 0x2000, scoped, tag = 'input window, operand 7, single buffered']
    #allocation12 [shape = 's32[1]{0}', space=sflag, size = 0x4, scoped, tag = 'scoped memory for tpu_custom_call.1']
    #allocation13 [shape = 'u8[131072]{0}', space=vmem, size = 0x20000, scoped, tag = 'output window, operand 0']
    %14 = vsyncpa [#allocation3], 0
    %s15 = scalar_lea.sflag [#allocation3], 1
    %16 = vsyncpa %s15, 0
    %17 = vsyncpa [#allocation6], 0
    %18 = vsyncpa [#allocation9], 0
    %19 = vsyncpa [#allocation12], 0
    %20 = vsyncpa [#allocation4], 0
    %s21 = scalar_lea.sflag [#allocation4], 1
    %22 = vsyncpa %s21, 0
    loop: start=0, step=1, limit=6
    $region2: #{tpu_custom_call.1} parent=1 // loop_pre_header
      _
    $region3: #{tpu_custom_call.1} parent=1 // loop_header
      %s24 = sphi 0, %s28
      %p25 = scmp.ge.s32.totalorder %s24, 6
      %s31 = sphi 0, %s43
      %s32 = sphi 0, %s39
      %s33 = sphi 0, %s31
      %s34 = sphi 0, %s32
      %s35 = sphi 0, %s33
      %s36 = sphi 0, %s34
      %s48 = sphi 0, %s50
      %s51 = sphi 0, %s48
      %s52 = sphi 0, %s51
      %s68 = sphi 0, %s52
      %s72 = sphi 0, %s72
      %s74 = sphi 0, %s72
      %s75 = sphi 0, %s74
      %s89 = sphi 0, %s75
      %s93 = sphi 0, %s93
      %s95 = sphi 0, %s93
      %s96 = sphi 0, %s95
      %s110 = sphi 0, %s96
      %s114 = sphi 0, %s114
      %s116 = sphi 0, %s114
      %s117 = sphi 0, %s116
      %s131 = sphi 0, %s117
      %s135 = sphi 0, %s135
      %s137 = sphi 0, %s135
      %s138 = sphi 0, %s137
      %s152 = sphi 0, %s138
      %s156 = sphi 0, %s156
      %s158 = sphi 0, %s156
      %s159 = sphi 0, %s158
      %s173 = sphi 0, %s159
      %s177 = sphi 0, %s177
      %s179 = sphi 0, %s177
      %s180 = sphi 0, %s179
      %s194 = sphi 0, %s180
      %s198 = sphi 0, %s198
      %s200 = sphi 0, %s198
      %s201 = sphi 0, %s200
      %s215 = sphi 0, %s201
      %s219 = sphi 0, %s219
      %s221 = sphi 0, %s219
      %s222 = sphi 0, %s221
      %s236 = sphi 0, %s222
      %s244 = sphi 0, %s246
      %s247 = sphi 0, %s244
      %s248 = sphi 0, %s247
      %s264 = sphi 0, %s248
    $region4: #{tpu_custom_call.1} parent=1 // loop_header_branch
      %27 = sbr.rel (%p25) target = $region8
    $region5: #{tpu_custom_call.1} parent=1 // loop_body
      %s29 = ssub.s32 %s24, 1
      %s30 = ssub.s32 %s24, 2
      %s37 = sadd.s32 1, %s32
      %p38 = scmp.ge.s32.totalorder %s37, 2
      %s39 = scalar_select %p38, 0, %s37
      %s40 = sadd.s32 1, %s31
      %s41 = scalar_select %p38, %s40, %s31
      %p42 = scmp.ge.s32.totalorder %s41, 2
      %s43 = scalar_select %p42, 0, %s41
      %s44 = ssub.s32 %s31, %s43
      %s45 = ssub.s32 %s32, %s39
      %s46 = sor.u32 %s44, %s45
      %p47 = scmp.eq.s32.totalorder %s46, 0
      %s49 = sadd.s32 %s48, 1
      %s50 = scalar_select %p47, %s48, %s49
      %p53 = pneg %p47
      %p54 = scmp.eq.s32.totalorder %s24, 3
      %p55 = por %p53, %p54
      %p56 = scmp.ne.s32.totalorder %s48, %s51
      %p57 = scmp.eq.s32.totalorder %s24, 0
      %p58 = por %p56, %p57
      %p59 = scmp.ne.s32.totalorder %s48, %s51
      %p60 = scmp.eq.s32.totalorder %s29, 3
      %p61 = por %p59, %p60
      %p62 = scmp.ne.s32.totalorder %s51, %s52
      %p63 = scmp.eq.s32.totalorder %s29, 0
      %p64 = por %p62, %p63
      %p65 = scmp.ne.s32.totalorder %s51, %s52
      %p66 = scmp.eq.s32.totalorder %s30, 3
      %p67 = por %p65, %p66
      %p69 = scmp.ne.s32.totalorder %s52, %s68
      %p70 = scmp.eq.s32.totalorder %s30, 0
      %p71 = por %p69, %p70
      %s73 = sadd.s32 %s72, 1
      %p76 = scmp.eq.s32.totalorder %s24, 3
      %p77 = scmp.ne.s32.totalorder %s72, %s74
      %p78 = scmp.eq.s32.totalorder %s24, 0
      %p79 = por %p77, %p78
      %p80 = scmp.ne.s32.totalorder %s72, %s74
      %p81 = scmp.eq.s32.totalorder %s29, 3
      %p82 = por %p80, %p81
      %p83 = scmp.ne.s32.totalorder %s74, %s75
      %p84 = scmp.eq.s32.totalorder %s29, 0
      %p85 = por %p83, %p84
      %p86 = scmp.ne.s32.totalorder %s74, %s75
      %p87 = scmp.eq.s32.totalorder %s30, 3
      %p88 = por %p86, %p87
      %p90 = scmp.ne.s32.totalorder %s75, %s89
      %p91 = scmp.eq.s32.totalorder %s30, 0
      %p92 = por %p90, %p91
      %s94 = sadd.s32 %s93, 1
      %p97 = scmp.eq.s32.totalorder %s24, 3
      %p98 = scmp.ne.s32.totalorder %s93, %s95
      %p99 = scmp.eq.s32.totalorder %s24, 0
      %p100 = por %p98, %p99
      %p101 = scmp.ne.s32.totalorder %s93, %s95
      %p102 = scmp.eq.s32.totalorder %s29, 3
      %p103 = por %p101, %p102
      %p104 = scmp.ne.s32.totalorder %s95, %s96
      %p105 = scmp.eq.s32.totalorder %s29, 0
      %p106 = por %p104, %p105
      %p107 = scmp.ne.s32.totalorder %s95, %s96
      %p108 = scmp.eq.s32.totalorder %s30, 3
      %p109 = por %p107, %p108
      %p111 = scmp.ne.s32.totalorder %s96, %s110
      %p112 = scmp.eq.s32.totalorder %s30, 0
      %p113 = por %p111, %p112
      %s115 = sadd.s32 %s114, 1
      %p118 = scmp.eq.s32.totalorder %s24, 3
      %p119 = scmp.ne.s32.totalorder %s114, %s116
      %p120 = scmp.eq.s32.totalorder %s24, 0
      %p121 = por %p119, %p120
      %p122 = scmp.ne.s32.totalorder %s114, %s116
      %p123 = scmp.eq.s32.totalorder %s29, 3
      %p124 = por %p122, %p123
      %p125 = scmp.ne.s32.totalorder %s116, %s117
      %p126 = scmp.eq.s32.totalorder %s29, 0
      %p127 = por %p125, %p126
      %p128 = scmp.ne.s32.totalorder %s116, %s117
      %p129 = scmp.eq.s32.totalorder %s30, 3
      %p130 = por %p128, %p129
      %p132 = scmp.ne.s32.totalorder %s117, %s131
      %p133 = scmp.eq.s32.totalorder %s30, 0
      %p134 = por %p132, %p133
      %s136 = sadd.s32 %s135, 1
      %p139 = scmp.eq.s32.totalorder %s24, 3
      %p140 = scmp.ne.s32.totalorder %s135, %s137
      %p141 = scmp.eq.s32.totalorder %s24, 0
      %p142 = por %p140, %p141
      %p143 = scmp.ne.s32.totalorder %s135, %s137
      %p144 = scmp.eq.s32.totalorder %s29, 3
      %p145 = por %p143, %p144
      %p146 = scmp.ne.s32.totalorder %s137, %s138
      %p147 = scmp.eq.s32.totalorder %s29, 0
      %p148 = por %p146, %p147
      %p149 = scmp.ne.s32.totalorder %s137, %s138
      %p150 = scmp.eq.s32.totalorder %s30, 3
      %p151 = por %p149, %p150
      %p153 = scmp.ne.s32.totalorder %s138, %s152
      %p154 = scmp.eq.s32.totalorder %s30, 0
      %p155 = por %p153, %p154
      %s157 = sadd.s32 %s156, 1
      %p160 = scmp.eq.s32.totalorder %s24, 3
      %p161 = scmp.ne.s32.totalorder %s156, %s158
      %p162 = scmp.eq.s32.totalorder %s24, 0
      %p163 = por %p161, %p162
      %p164 = scmp.ne.s32.totalorder %s156, %s158
      %p165 = scmp.eq.s32.totalorder %s29, 3
      %p166 = por %p164, %p165
      %p167 = scmp.ne.s32.totalorder %s158, %s159
      %p168 = scmp.eq.s32.totalorder %s29, 0
      %p169 = por %p167, %p168
      %p170 = scmp.ne.s32.totalorder %s158, %s159
      %p171 = scmp.eq.s32.totalorder %s30, 3
      %p172 = por %p170, %p171
      %p174 = scmp.ne.s32.totalorder %s159, %s173
      %p175 = scmp.eq.s32.totalorder %s30, 0
      %p176 = por %p174, %p175
      %s178 = sadd.s32 %s177, 1
      %p181 = scmp.eq.s32.totalorder %s24, 3
      %p182 = scmp.ne.s32.totalorder %s177, %s179
      %p183 = scmp.eq.s32.totalorder %s24, 0
      %p184 = por %p182, %p183
      %p185 = scmp.ne.s32.totalorder %s177, %s179
      %p186 = scmp.eq.s32.totalorder %s29, 3
      %p187 = por %p185, %p186
      %p188 = scmp.ne.s32.totalorder %s179, %s180
      %p189 = scmp.eq.s32.totalorder %s29, 0
      %p190 = por %p188, %p189
      %p191 = scmp.ne.s32.totalorder %s179, %s180
      %p192 = scmp.eq.s32.totalorder %s30, 3
      %p193 = por %p191, %p192
      %p195 = scmp.ne.s32.totalorder %s180, %s194
      %p196 = scmp.eq.s32.totalorder %s30, 0
      %p197 = por %p195, %p196
      %s199 = sadd.s32 %s198, 1
      %p202 = scmp.eq.s32.totalorder %s24, 3
      %p203 = scmp.ne.s32.totalorder %s198, %s200
      %p204 = scmp.eq.s32.totalorder %s24, 0
      %p205 = por %p203, %p204
      %p206 = scmp.ne.s32.totalorder %s198, %s200
      %p207 = scmp.eq.s32.totalorder %s29, 3
      %p208 = por %p206, %p207
      %p209 = scmp.ne.s32.totalorder %s200, %s201
      %p210 = scmp.eq.s32.totalorder %s29, 0
      %p211 = por %p209, %p210
      %p212 = scmp.ne.s32.totalorder %s200, %s201
      %p213 = scmp.eq.s32.totalorder %s30, 3
      %p214 = por %p212, %p213
      %p216 = scmp.ne.s32.totalorder %s201, %s215
      %p217 = scmp.eq.s32.totalorder %s30, 0
      %p218 = por %p216, %p217
      %s220 = sadd.s32 %s219, 1
      %p223 = scmp.eq.s32.totalorder %s24, 3
      %p224 = scmp.ne.s32.totalorder %s219, %s221
      %p225 = scmp.eq.s32.totalorder %s24, 0
      %p226 = por %p224, %p225
      %p227 = scmp.ne.s32.totalorder %s219, %s221
      %p228 = scmp.eq.s32.totalorder %s29, 3
      %p229 = por %p227, %p228
      %p230 = scmp.ne.s32.totalorder %s221, %s222
      %p231 = scmp.eq.s32.totalorder %s29, 0
      %p232 = por %p230, %p231
      %p233 = scmp.ne.s32.totalorder %s221, %s222
      %p234 = scmp.eq.s32.totalorder %s30, 3
      %p235 = por %p233, %p234
      %p237 = scmp.ne.s32.totalorder %s222, %s236
      %p238 = scmp.eq.s32.totalorder %s30, 0
      %p239 = por %p237, %p238
      %s240 = ssub.s32 %s31, %s43
      %s241 = ssub.s32 %s32, %s39
      %s242 = sor.u32 %s240, %s241
      %p243 = scmp.eq.s32.totalorder %s242, 0
      %s245 = sadd.s32 %s244, 1
      %s246 = scalar_select %p243, %s244, %s245
      %p249 = pneg %p243
      %p250 = scmp.eq.s32.totalorder %s24, 3
      %p251 = por %p249, %p250
      %p252 = scmp.ne.s32.totalorder %s244, %s247
      %p253 = scmp.eq.s32.totalorder %s24, 0
      %p254 = por %p252, %p253
      %p255 = scmp.ne.s32.totalorder %s244, %s247
      %p256 = scmp.eq.s32.totalorder %s29, 3
      %p257 = por %p255, %p256
      %p258 = scmp.ne.s32.totalorder %s247, %s248
      %p259 = scmp.eq.s32.totalorder %s29, 0
      %p260 = por %p258, %p259
      %p261 = scmp.ne.s32.totalorder %s247, %s248
      %p262 = scmp.eq.s32.totalorder %s30, 3
      %p263 = por %p261, %p262
      %p265 = scmp.ne.s32.totalorder %s248, %s264
      %p266 = scmp.eq.s32.totalorder %s30, 0
      %p267 = por %p265, %p266
      %p268 = scmp.le.s32.totalorder 1, %s24
      %p269 = scmp.lt.s32.totalorder %s24, 5
      %p270 = pnand %p268, %p269
      %p271 = pneg %p270
      // Predicated region
      $region9: #{tpu_custom_call.1} parent=5 // pred_check
        _
      $region10: #{tpu_custom_call.1} parent=5 // pred_check_branch
        %273 = sbr.rel (%p270) target = $region12
      $region11: #{tpu_custom_call.1} parent=5 // pred_region
        %s274 = ssub.s32 %s24, 1
        // Predicated region
        $region13: #{tpu_custom_call.1} parent=11 // pred_check
          %p275 = pneg %p85
        $region14: #{tpu_custom_call.1} parent=11 // pred_check_branch
          %277 = sbr.rel (%p275) target = $region16
        $region15: #{tpu_custom_call.1} parent=11 // pred_region
          %279 = vsyncadd [#allocation6], 0
          %s281 = sshll.u32 %s1, 4
          %s282 = int_to_ptr.hbm [resolvable:$true] %s281
          %s283 = sshll.u32 [#allocation5], 4
          %s284 = int_to_ptr.vmem [resolvable:$true] %s283
          %286 = dma.hbm_to_vmem [thread:$0]  %s282, 16, %s284, [#allocation6]
        $region16: #{tpu_custom_call.1} parent=11 // pred_fallthru
          _
        // Predicated region
        $region17: #{tpu_custom_call.1} parent=11 // pred_check
          %p287 = pneg %p106
        $region18: #{tpu_custom_call.1} parent=11 // pred_check_branch
          %289 = sbr.rel (%p287) target = $region20
        $region19: #{tpu_custom_call.1} parent=11 // pred_region
          _
        $region20: #{tpu_custom_call.1} parent=11 // pred_fallthru
          _
        // Predicated region
        $region21: #{tpu_custom_call.1} parent=11 // pred_check
          %p290 = pneg %p127
        $region22: #{tpu_custom_call.1} parent=11 // pred_check_branch
          %292 = sbr.rel (%p290) target = $region24
        $region23: #{tpu_custom_call.1} parent=11 // pred_region
          %294 = vsyncadd [#allocation6], 0
          %s295 = sshll.u32 %s3, 4
          %s296 = int_to_ptr.hbm [resolvable:$true] %s295
          %s297 = sshll.u32 [#allocation7], 4
          %s298 = int_to_ptr.vmem [resolvable:$true] %s297
          %303 = dma.hbm_to_vmem [thread:$0]  %s296, 256, %s298, [#allocation6], 64, 64, 4
        $region24: #{tpu_custom_call.1} parent=11 // pred_fallthru
          _
        // Predicated region
        $region25: #{tpu_custom_call.1} parent=11 // pred_check
          %p304 = pneg %p148
        $region26: #{tpu_custom_call.1} parent=11 // pred_check_branch
          %306 = sbr.rel (%p304) target = $region28
        $region27: #{tpu_custom_call.1} parent=11 // pred_region
          _
        $region28: #{tpu_custom_call.1} parent=11 // pred_fallthru
          _
        // Predicated region
        $region29: #{tpu_custom_call.1} parent=11 // pred_check
          %p307 = pneg %p169
        $region30: #{tpu_custom_call.1} parent=11 // pred_check_branch
          %309 = sbr.rel (%p307) target = $region32
        $region31: #{tpu_custom_call.1} parent=11 // pred_region
          %311 = vsyncadd [#allocation9], 0
          %s312 = sshll.u32 %s5, 4
          %s313 = int_to_ptr.hbm [resolvable:$true] %s312
          %s314 = sshll.u32 [#allocation8], 4
          %s315 = int_to_ptr.vmem [resolvable:$true] %s314
          %320 = dma.hbm_to_vmem [thread:$0]  %s313, 4096, %s315, [#allocation9], 128, 128, 8
        $region32: #{tpu_custom_call.1} parent=11 // pred_fallthru
          _
        // Predicated region
        $region33: #{tpu_custom_call.1} parent=11 // pred_check
          %p321 = pneg %p190
        $region34: #{tpu_custom_call.1} parent=11 // pred_check_branch
          %323 = sbr.rel (%p321) target = $region36
        $region35: #{tpu_custom_call.1} parent=11 // pred_region
          %325 = vsyncadd [#allocation9], 0
          %s326 = sshll.u32 %s6, 4
          %s327 = int_to_ptr.hbm [resolvable:$true] %s326
          %s328 = sshll.u32 [#allocation10], 4
          %s329 = int_to_ptr.vmem [resolvable:$true] %s328
          %334 = dma.hbm_to_vmem [thread:$0]  %s327, 1024, %s329, [#allocation9], 128, 128, 8
        $region36: #{tpu_custom_call.1} parent=11 // pred_fallthru
          _
        // Predicated region
        $region37: #{tpu_custom_call.1} parent=11 // pred_check
          %p335 = pneg %p211
        $region38: #{tpu_custom_call.1} parent=11 // pred_check_branch
          %337 = sbr.rel (%p335) target = $region40
        $region39: #{tpu_custom_call.1} parent=11 // pred_region
          %339 = vsyncadd [#allocation12], 0
          %s340 = sshll.u32 %s7, 4
          %s341 = int_to_ptr.hbm [resolvable:$true] %s340
          %s342 = sshll.u32 [#allocation11], 4
          %s343 = int_to_ptr.vmem [resolvable:$true] %s342
          %348 = dma.hbm_to_vmem [thread:$0]  %s341, 256, %s343, [#allocation12], 64, 64, 4
        $region40: #{tpu_custom_call.1} parent=11 // pred_fallthru
          _
        // Predicated region
        $region41: #{tpu_custom_call.1} parent=11 // pred_check
          %p349 = pneg %p232
        $region42: #{tpu_custom_call.1} parent=11 // pred_check_branch
          %351 = sbr.rel (%p349) target = $region44
        $region43: #{tpu_custom_call.1} parent=11 // pred_region
          _
        $region44: #{tpu_custom_call.1} parent=11 // pred_fallthru
          _
      $region12: #{tpu_custom_call.1} parent=5 // pred_fallthru
        _
      %p352 = scmp.lt.s32.totalorder %s24, 4
      // Predicated region
      $region45: #{tpu_custom_call.1} parent=5 // pred_check
        %p353 = pneg %p352
      $region46: #{tpu_custom_call.1} parent=5 // pred_check_branch
        %355 = sbr.rel (%p353) target = $region48
      $region47: #{tpu_custom_call.1} parent=5 // pred_region
        // Predicated region
        $region49: #{tpu_custom_call.1} parent=47 // pred_check
          %p356 = pneg %p58
        $region50: #{tpu_custom_call.1} parent=47 // pred_check_branch
          %358 = sbr.rel (%p356) target = $region52
        $region51: #{tpu_custom_call.1} parent=47 // pred_region
          %s359 = sand.u32 %s48, 1
          %s360 = scalar_lea.sflag [#allocation3], %s359
          %s361 = sand.u32 %s48, 1
          %s362 = smul.addr %s361, 128
          %s363 = scalar_lea.vmem [#allocation2], %s362
          %s364 = smul.u32 8, %s32
          %366 = vsyncadd %s360, 0
          %s367 = smul.addr %s364, 2
          %s368 = smul.addr %s31, 32
          %s369 = sadd.s32 %s367, %s368
          %s370 = smul.addr %s369, 8
          %s371 = scalar_lea.hbm %s0, %s370
          %s372 = sshll.u32 %s371, 4
          %s373 = int_to_ptr.hbm [resolvable:$true] %s372
          %s374 = sshll.u32 %s363, 4
          %s375 = int_to_ptr.vmem [resolvable:$true] %s374
          %380 = dma.hbm_to_vmem [thread:$0]  %s373, 2048, %s375, %s360, 128, 128, 8
        $region52: #{tpu_custom_call.1} parent=47 // pred_fallthru
          _
      $region48: #{tpu_custom_call.1} parent=5 // pred_fallthru
        _
      %p381 = scmp.le.s32.totalorder 1, %s24
      %p382 = scmp.lt.s32.totalorder %s24, 5
      %p383 = pnand %p381, %p382
      %p384 = pneg %p383
      // Predicated region
      $region53: #{tpu_custom_call.1} parent=5 // pred_check
        _
      $region54: #{tpu_custom_call.1} parent=5 // pred_check_branch
        %386 = sbr.rel (%p383) target = $region56
      $region55: #{tpu_custom_call.1} parent=5 // pred_region
        %s387 = ssub.s32 %s24, 1
        %s388 = sand.u32 %s51, 1
        %s389 = scalar_lea.sflag [#allocation3], %s388
        %s390 = sand.u32 %s51, 1
        %s391 = smul.addr %s390, 128
        %s392 = scalar_lea.vmem [#allocation2], %s391
        // Predicated region
        $region57: #{tpu_custom_call.1} parent=55 // pred_check
          %p393 = pneg %p64
        $region58: #{tpu_custom_call.1} parent=55 // pred_check_branch
          %395 = sbr.rel (%p393) target = $region60
        $region59: #{tpu_custom_call.1} parent=55 // pred_region
          %397 = dma.done %s389, 2048
        $region60: #{tpu_custom_call.1} parent=55 // pred_fallthru
          _
        // Predicated region
        $region61: #{tpu_custom_call.1} parent=55 // pred_check
          %p398 = pneg %p85
        $region62: #{tpu_custom_call.1} parent=55 // pred_check_branch
          %400 = sbr.rel (%p398) target = $region64
        $region63: #{tpu_custom_call.1} parent=55 // pred_region
          %402 = dma.done [#allocation6], 16
        $region64: #{tpu_custom_call.1} parent=55 // pred_fallthru
          _
        // Predicated region
        $region65: #{tpu_custom_call.1} parent=55 // pred_check
          %p403 = pneg %p127
        $region66: #{tpu_custom_call.1} parent=55 // pred_check_branch
          %405 = sbr.rel (%p403) target = $region68
        $region67: #{tpu_custom_call.1} parent=55 // pred_region
          %407 = dma.done [#allocation6], 256
        $region68: #{tpu_custom_call.1} parent=55 // pred_fallthru
          _
        // Predicated region
        $region69: #{tpu_custom_call.1} parent=55 // pred_check
          %p408 = pneg %p169
        $region70: #{tpu_custom_call.1} parent=55 // pred_check_branch
          %410 = sbr.rel (%p408) target = $region72
        $region71: #{tpu_custom_call.1} parent=55 // pred_region
          %412 = dma.done [#allocation9], 4096
        $region72: #{tpu_custom_call.1} parent=55 // pred_fallthru
          _
        // Predicated region
        $region73: #{tpu_custom_call.1} parent=55 // pred_check
          %p413 = pneg %p190
        $region74: #{tpu_custom_call.1} parent=55 // pred_check_branch
          %415 = sbr.rel (%p413) target = $region76
        $region75: #{tpu_custom_call.1} parent=55 // pred_region
          %417 = dma.done [#allocation9], 1024
        $region76: #{tpu_custom_call.1} parent=55 // pred_fallthru
          _
        // Predicated region
        $region77: #{tpu_custom_call.1} parent=55 // pred_check
          %p418 = pneg %p211
        $region78: #{tpu_custom_call.1} parent=55 // pred_check_branch
          %420 = sbr.rel (%p418) target = $region80
        $region79: #{tpu_custom_call.1} parent=55 // pred_region
          %422 = dma.done [#allocation12], 256
        $region80: #{tpu_custom_call.1} parent=55 // pred_fallthru
          _
        %s423 = sand.u32 %s51, 1
        %s424 = scalar_lea.sflag [#allocation3], %s423
        %s425 = sand.u32 %s51, 1
        %s426 = smul.addr %s425, 128
        %s427 = scalar_lea.vmem [#allocation2], %s426
        %p428 = pneg %p64
        %p429 = pneg %p61
        %p430 = pneg %p85
        %p431 = pneg %p82
        %p432 = pneg %p106
        %p433 = pneg %p103
        %p434 = pneg %p127
        %p435 = pneg %p124
        %p436 = pneg %p148
        %p437 = pneg %p145
        %p438 = pneg %p169
        %p439 = pneg %p166
        %p440 = pneg %p190
        %p441 = pneg %p187
        %p442 = pneg %p211
        %p443 = pneg %p208
        %p444 = pneg %p232
        %p445 = pneg %p229
        %p446 = pneg %p260
        %p447 = pneg %p257
        %s448 = sand.u32 %s247, 1
        %s449 = scalar_lea.sflag [#allocation4], %s448
        %s450 = sand.u32 %s247, 1
        %s451 = smul.addr %s450, 128
        %s452 = scalar_lea.vmem [#allocation13], %s451
        %s453 = smul.u32 8, %s34
        %s454 = smul.u32 8, %s34
        %v456 = vld [vmem:[%s392] sm:$0xff]
        %v457 = vld [vmem:[%s392 + $0x8] sm:$0xff]
        %v458 = vld [vmem:[%s392 + $0x10] sm:$0xff]
        %v459 = vld [vmem:[%s392 + $0x18] sm:$0xff]
        %v460 = vld [vmem:[%s392 + $0x20] sm:$0xff]
        %v461 = vld [vmem:[%s392 + $0x28] sm:$0xff]
        %v462 = vld [vmem:[%s392 + $0x30] sm:$0xff]
        %v463 = vld [vmem:[%s392 + $0x38] sm:$0xff]
        %v464 = vld [vmem:[%s392 + $0x40] sm:$0xff]
        %v465 = vld [vmem:[%s392 + $0x48] sm:$0xff]
        %v466 = vld [vmem:[%s392 + $0x50] sm:$0xff]
        %v467 = vld [vmem:[%s392 + $0x58] sm:$0xff]
        %v468 = vld [vmem:[%s392 + $0x60] sm:$0xff]
        %v469 = vld [vmem:[%s392 + $0x68] sm:$0xff]
        %v470 = vld [vmem:[%s392 + $0x70] sm:$0xff]
        %v471 = vld [vmem:[%s392 + $0x78] sm:$0xff]
        %v472 = vld [vmem:[#allocation5] sm:$0x1]
        %v473 = vld [vmem:[%s2] sm:$0x1]
        %vm474 = vcmask 261120
        %v475 = vsel %vm474, %v456, 0.0
        %476 = vadd.xlane.f32.xlu0 %v475
        %v477 = vpop.xlane.xlu0 %476
        %v478 = vsel %vm474, %v457, 0.0
        %479 = vadd.xlane.f32.xlu0 %v478
        %v480 = vpop.xlane.xlu0 %479
        %v481 = vsel %vm474, %v458, 0.0
        %482 = vadd.xlane.f32.xlu0 %v481
        %v483 = vpop.xlane.xlu0 %482
        %v484 = vsel %vm474, %v459, 0.0
        %485 = vadd.xlane.f32.xlu0 %v484
        %v486 = vpop.xlane.xlu0 %485
        %v487 = vsel %vm474, %v460, 0.0
        %488 = vadd.xlane.f32.xlu0 %v487
        %v489 = vpop.xlane.xlu0 %488
        %v490 = vsel %vm474, %v461, 0.0
        %491 = vadd.xlane.f32.xlu0 %v490
        %v492 = vpop.xlane.xlu0 %491
        %v493 = vsel %vm474, %v462, 0.0
        %494 = vadd.xlane.f32.xlu0 %v493
        %v495 = vpop.xlane.xlu0 %494
        %v496 = vsel %vm474, %v463, 0.0
        %497 = vadd.xlane.f32.xlu0 %v496
        %v498 = vpop.xlane.xlu0 %497
        %v499 = vsel %vm474, %v464, 0.0
        %500 = vadd.xlane.f32.xlu0 %v499
        %v501 = vpop.xlane.xlu0 %500
        %v502 = vsel %vm474, %v465, 0.0
        %503 = vadd.xlane.f32.xlu0 %v502
        %v504 = vpop.xlane.xlu0 %503
        %v505 = vsel %vm474, %v466, 0.0
        %506 = vadd.xlane.f32.xlu0 %v505
        %v507 = vpop.xlane.xlu0 %506
        %v508 = vsel %vm474, %v467, 0.0
        %509 = vadd.xlane.f32.xlu0 %v508
        %v510 = vpop.xlane.xlu0 %509
        %v511 = vsel %vm474, %v468, 0.0
        %512 = vadd.xlane.f32.xlu0 %v511
        %v513 = vpop.xlane.xlu0 %512
        %v514 = vsel %vm474, %v469, 0.0
        %515 = vadd.xlane.f32.xlu0 %v514
        %v516 = vpop.xlane.xlu0 %515
        %v517 = vsel %vm474, %v470, 0.0
        %518 = vadd.xlane.f32.xlu0 %v517
        %v519 = vpop.xlane.xlu0 %518
        %v520 = vsel %vm474, %v471, 0.0
        %521 = vadd.xlane.f32.xlu0 %v520
        %v522 = vpop.xlane.xlu0 %521
        %v523 = vrcp.pop 32.0
        %v524 = vmul.f32 32.0, %v523
        %v525 = vsub.f32 1.0, %v524
        %v526 = vmul.f32 %v523, %v525
        %v527 = vadd.f32 %v523, %v526
        %vm528 = vweird.f32 %v523
        %v529 = vsel %vm528, %v523, %v527
        %v530 = vmul.f32 %v477, %v529
        %v531 = vmul.f32 %v480, %v529
        %v532 = vmul.f32 %v483, %v529
        %v533 = vmul.f32 %v486, %v529
        %v534 = vmul.f32 %v489, %v529
        %v535 = vmul.f32 %v492, %v529
        %v536 = vmul.f32 %v495, %v529
        %v537 = vmul.f32 %v498, %v529
        %v538 = vmul.f32 %v501, %v529
        %v539 = vmul.f32 %v504, %v529
        %v540 = vmul.f32 %v507, %v529
        %v541 = vmul.f32 %v510, %v529
        %v542 = vmul.f32 %v513, %v529
        %v543 = vmul.f32 %v516, %v529
        %v544 = vmul.f32 %v519, %v529
        %v545 = vmul.f32 %v522, %v529
        %v546 = vsub.f32 %v456, %v530
        %v547 = vsub.f32 %v457, %v531
        %v548 = vsub.f32 %v458, %v532
        %v549 = vsub.f32 %v459, %v533
        %v550 = vsub.f32 %v460, %v534
        %v551 = vsub.f32 %v461, %v535
        %v552 = vsub.f32 %v462, %v536
        %v553 = vsub.f32 %v463, %v537
        %v554 = vsub.f32 %v464, %v538
        %v555 = vsub.f32 %v465, %v539
        %v556 = vsub.f32 %v466, %v540
        %v557 = vsub.f32 %v467, %v541
        %v558 = vsub.f32 %v468, %v542
        %v559 = vsub.f32 %v469, %v543
        %v560 = vsub.f32 %v470, %v544
        %v561 = vsub.f32 %v471, %v545
        %v562 = vmul.f32 %v546, %v546
        %v563 = vmul.f32 %v547, %v547
        %v564 = vmul.f32 %v548, %v548
        %v565 = vmul.f32 %v549, %v549
        %v566 = vmul.f32 %v550, %v550
        %v567 = vmul.f32 %v551, %v551
        %v568 = vmul.f32 %v552, %v552
        %v569 = vmul.f32 %v553, %v553
        %v570 = vmul.f32 %v554, %v554
        %v571 = vmul.f32 %v555, %v555
        %v572 = vmul.f32 %v556, %v556
        %v573 = vmul.f32 %v557, %v557
        %v574 = vmul.f32 %v558, %v558
        %v575 = vmul.f32 %v559, %v559
        %v576 = vmul.f32 %v560, %v560
        %v577 = vmul.f32 %v561, %v561
        %v578 = vsel %vm474, %v562, 0.0
        %579 = vadd.xlane.f32.xlu0 %v578
        %v580 = vpop.xlane.xlu0 %579
        %v581 = vsel %vm474, %v563, 0.0
        %582 = vadd.xlane.f32.xlu0 %v581
        %v583 = vpop.xlane.xlu0 %582
        %v584 = vsel %vm474, %v564, 0.0
        %585 = vadd.xlane.f32.xlu0 %v584
        %v586 = vpop.xlane.xlu0 %585
        %v587 = vsel %vm474, %v565, 0.0
        %588 = vadd.xlane.f32.xlu0 %v587
        %v589 = vpop.xlane.xlu0 %588
        %v590 = vsel %vm474, %v566, 0.0
        %591 = vadd.xlane.f32.xlu0 %v590
        %v592 = vpop.xlane.xlu0 %591
        %v593 = vsel %vm474, %v567, 0.0
        %594 = vadd.xlane.f32.xlu0 %v593
        %v595 = vpop.xlane.xlu0 %594
        %v596 = vsel %vm474, %v568, 0.0
        %597 = vadd.xlane.f32.xlu0 %v596
        %v598 = vpop.xlane.xlu0 %597
        %v599 = vsel %vm474, %v569, 0.0
        %600 = vadd.xlane.f32.xlu0 %v599
        %v601 = vpop.xlane.xlu0 %600
        %v602 = vsel %vm474, %v570, 0.0
        %603 = vadd.xlane.f32.xlu0 %v602
        %v604 = vpop.xlane.xlu0 %603
        %v605 = vsel %vm474, %v571, 0.0
        %606 = vadd.xlane.f32.xlu0 %v605
        %v607 = vpop.xlane.xlu0 %606
        %v608 = vsel %vm474, %v572, 0.0
        %609 = vadd.xlane.f32.xlu0 %v608
        %v610 = vpop.xlane.xlu0 %609
        %v611 = vsel %vm474, %v573, 0.0
        %612 = vadd.xlane.f32.xlu0 %v611
        %v613 = vpop.xlane.xlu0 %612
        %v614 = vsel %vm474, %v574, 0.0
        %615 = vadd.xlane.f32.xlu0 %v614
        %v616 = vpop.xlane.xlu0 %615
        %v617 = vsel %vm474, %v575, 0.0
        %618 = vadd.xlane.f32.xlu0 %v617
        %v619 = vpop.xlane.xlu0 %618
        %v620 = vsel %vm474, %v576, 0.0
        %621 = vadd.xlane.f32.xlu0 %v620
        %v622 = vpop.xlane.xlu0 %621
        %v623 = vsel %vm474, %v577, 0.0
        %624 = vadd.xlane.f32.xlu0 %v623
        %v625 = vpop.xlane.xlu0 %624
        %v626 = vmul.f32 %v580, %v529
        %v627 = vmul.f32 %v583, %v529
        %v628 = vmul.f32 %v586, %v529
        %v629 = vmul.f32 %v589, %v529
        %v630 = vmul.f32 %v592, %v529
        %v631 = vmul.f32 %v595, %v529
        %v632 = vmul.f32 %v598, %v529
        %v633 = vmul.f32 %v601, %v529
        %v634 = vmul.f32 %v604, %v529
        %v635 = vmul.f32 %v607, %v529
        %v636 = vmul.f32 %v610, %v529
        %v637 = vmul.f32 %v613, %v529
        %v638 = vmul.f32 %v616, %v529
        %v639 = vmul.f32 %v619, %v529
        %v640 = vmul.f32 %v622, %v529
        %v641 = vmul.f32 %v625, %v529
        %v642 = vadd.f32 %v626, 1e-05
        %v643 = vadd.f32 %v627, 1e-05
        %v644 = vadd.f32 %v628, 1e-05
        %v645 = vadd.f32 %v629, 1e-05
        %v646 = vadd.f32 %v630, 1e-05
        %v647 = vadd.f32 %v631, 1e-05
        %v648 = vadd.f32 %v632, 1e-05
        %v649 = vadd.f32 %v633, 1e-05
        %v650 = vadd.f32 %v634, 1e-05
        %v651 = vadd.f32 %v635, 1e-05
        %v652 = vadd.f32 %v636, 1e-05
        %v653 = vadd.f32 %v637, 1e-05
        %v654 = vadd.f32 %v638, 1e-05
        %v655 = vadd.f32 %v639, 1e-05
        %v656 = vadd.f32 %v640, 1e-05
        %v657 = vadd.f32 %v641, 1e-05
        %v658 = vrsqrt.pop %v642
        %v659 = vmul.f32 %v658, %v642
        %v660 = vmul.f32 %v659, %v658
        %v661 = vmul.f32 0.5, %v660
        %v662 = vsub.f32 1.5, %v661
        %v663 = vmul.f32 %v658, %v662
        %vm664 = vweird.f32 %v642
        %vm665 = vweird.f32 %v658
        %vm666 = vmor %vm664, %vm665
        %v667 = vsel %vm666, %v658, %v663
        %v668 = vrsqrt.pop %v643
        %v669 = vmul.f32 %v668, %v643
        %v670 = vmul.f32 %v669, %v668
        %v671 = vmul.f32 0.5, %v670
        %v672 = vsub.f32 1.5, %v671
        %v673 = vmul.f32 %v668, %v672
        %vm674 = vweird.f32 %v643
        %vm675 = vweird.f32 %v668
        %vm676 = vmor %vm674, %vm675
        %v677 = vsel %vm676, %v668, %v673
        %v678 = vrsqrt.pop %v644
        %v679 = vmul.f32 %v678, %v644
        %v680 = vmul.f32 %v679, %v678
        %v681 = vmul.f32 0.5, %v680
        %v682 = vsub.f32 1.5, %v681
        %v683 = vmul.f32 %v678, %v682
        %vm684 = vweird.f32 %v644
        %vm685 = vweird.f32 %v678
        %vm686 = vmor %vm684, %vm685
        %v687 = vsel %vm686, %v678, %v683
        %v688 = vrsqrt.pop %v645
        %v689 = vmul.f32 %v688, %v645
        %v690 = vmul.f32 %v689, %v688
        %v691 = vmul.f32 0.5, %v690
        %v692 = vsub.f32 1.5, %v691
        %v693 = vmul.f32 %v688, %v692
        %vm694 = vweird.f32 %v645
        %vm695 = vweird.f32 %v688
        %vm696 = vmor %vm694, %vm695
        %v697 = vsel %vm696, %v688, %v693
        %v698 = vrsqrt.pop %v646
        %v699 = vmul.f32 %v698, %v646
        %v700 = vmul.f32 %v699, %v698
        %v701 = vmul.f32 0.5, %v700
        %v702 = vsub.f32 1.5, %v701
        %v703 = vmul.f32 %v698, %v702
        %vm704 = vweird.f32 %v646
        %vm705 = vweird.f32 %v698
        %vm706 = vmor %vm704, %vm705
        %v707 = vsel %vm706, %v698, %v703
        %v708 = vrsqrt.pop %v647
        %v709 = vmul.f32 %v708, %v647
        %v710 = vmul.f32 %v709, %v708
        %v711 = vmul.f32 0.5, %v710
        %v712 = vsub.f32 1.5, %v711
        %v713 = vmul.f32 %v708, %v712
        %vm714 = vweird.f32 %v647
        %vm715 = vweird.f32 %v708
        %vm716 = vmor %vm714, %vm715
        %v717 = vsel %vm716, %v708, %v713
        %v718 = vrsqrt.pop %v648
        %v719 = vmul.f32 %v718, %v648
        %v720 = vmul.f32 %v719, %v718
        %v721 = vmul.f32 0.5, %v720
        %v722 = vsub.f32 1.5, %v721
        %v723 = vmul.f32 %v718, %v722
        %vm724 = vweird.f32 %v648
        %vm725 = vweird.f32 %v718
        %vm726 = vmor %vm724, %vm725
        %v727 = vsel %vm726, %v718, %v723
        %v728 = vrsqrt.pop %v649
        %v729 = vmul.f32 %v728, %v649
        %v730 = vmul.f32 %v729, %v728
        %v731 = vmul.f32 0.5, %v730
        %v732 = vsub.f32 1.5, %v731
        %v733 = vmul.f32 %v728, %v732
        %vm734 = vweird.f32 %v649
        %vm735 = vweird.f32 %v728
        %vm736 = vmor %vm734, %vm735
        %v737 = vsel %vm736, %v728, %v733
        %v738 = vrsqrt.pop %v650
        %v739 = vmul.f32 %v738, %v650
        %v740 = vmul.f32 %v739, %v738
        %v741 = vmul.f32 0.5, %v740
        %v742 = vsub.f32 1.5, %v741
        %v743 = vmul.f32 %v738, %v742
        %vm744 = vweird.f32 %v650
        %vm745 = vweird.f32 %v738
        %vm746 = vmor %vm744, %vm745
        %v747 = vsel %vm746, %v738, %v743
        %v748 = vrsqrt.pop %v651
        %v749 = vmul.f32 %v748, %v651
        %v750 = vmul.f32 %v749, %v748
        %v751 = vmul.f32 0.5, %v750
        %v752 = vsub.f32 1.5, %v751
        %v753 = vmul.f32 %v748, %v752
        %vm754 = vweird.f32 %v651
        %vm755 = vweird.f32 %v748
        %vm756 = vmor %vm754, %vm755
        %v757 = vsel %vm756, %v748, %v753
        %v758 = vrsqrt.pop %v652
        %v759 = vmul.f32 %v758, %v652
        %v760 = vmul.f32 %v759, %v758
        %v761 = vmul.f32 0.5, %v760
        %v762 = vsub.f32 1.5, %v761
        %v763 = vmul.f32 %v758, %v762
        %vm764 = vweird.f32 %v652
        %vm765 = vweird.f32 %v758
        %vm766 = vmor %vm764, %vm765
        %v767 = vsel %vm766, %v758, %v763
        %v768 = vrsqrt.pop %v653
        %v769 = vmul.f32 %v768, %v653
        %v770 = vmul.f32 %v769, %v768
        %v771 = vmul.f32 0.5, %v770
        %v772 = vsub.f32 1.5, %v771
        %v773 = vmul.f32 %v768, %v772
        %vm774 = vweird.f32 %v653
        %vm775 = vweird.f32 %v768
        %vm776 = vmor %vm774, %vm775
        %v777 = vsel %vm776, %v768, %v773
        %v778 = vrsqrt.pop %v654
        %v779 = vmul.f32 %v778, %v654
        %v780 = vmul.f32 %v779, %v778
        %v781 = vmul.f32 0.5, %v780
        %v782 = vsub.f32 1.5, %v781
        %v783 = vmul.f32 %v778, %v782
        %vm784 = vweird.f32 %v654
        %vm785 = vweird.f32 %v778
        %vm786 = vmor %vm784, %vm785
        %v787 = vsel %vm786, %v778, %v783
        %v788 = vrsqrt.pop %v655
        %v789 = vmul.f32 %v788, %v655
        %v790 = vmul.f32 %v789, %v788
        %v791 = vmul.f32 0.5, %v790
        %v792 = vsub.f32 1.5, %v791
        %v793 = vmul.f32 %v788, %v792
        %vm794 = vweird.f32 %v655
        %vm795 = vweird.f32 %v788
        %vm796 = vmor %vm794, %vm795
        %v797 = vsel %vm796, %v788, %v793
        %v798 = vrsqrt.pop %v656
        %v799 = vmul.f32 %v798, %v656
        %v800 = vmul.f32 %v799, %v798
        %v801 = vmul.f32 0.5, %v800
        %v802 = vsub.f32 1.5, %v801
        %v803 = vmul.f32 %v798, %v802
        %vm804 = vweird.f32 %v656
        %vm805 = vweird.f32 %v798
        %vm806 = vmor %vm804, %vm805
        %v807 = vsel %vm806, %v798, %v803
        %v808 = vrsqrt.pop %v657
        %v809 = vmul.f32 %v808, %v657
        %v810 = vmul.f32 %v809, %v808
        %v811 = vmul.f32 0.5, %v810
        %v812 = vsub.f32 1.5, %v811
        %v813 = vmul.f32 %v808, %v812
        %vm814 = vweird.f32 %v657
        %vm815 = vweird.f32 %v808
        %vm816 = vmor %vm814, %vm815
        %v817 = vsel %vm816, %v808, %v813
        %v818 = vmul.f32 %v546, %v667
        %v819 = vmul.f32 %v547, %v677
        %v820 = vmul.f32 %v548, %v687
        %v821 = vmul.f32 %v549, %v697
        %v822 = vmul.f32 %v550, %v707
        %v823 = vmul.f32 %v551, %v717
        %v824 = vmul.f32 %v552, %v727
        %v825 = vmul.f32 %v553, %v737
        %v826 = vmul.f32 %v554, %v747
        %v827 = vmul.f32 %v555, %v757
        %v828 = vmul.f32 %v556, %v767
        %v829 = vmul.f32 %v557, %v777
        %v830 = vmul.f32 %v558, %v787
        %v831 = vmul.f32 %v559, %v797
        %v832 = vmul.f32 %v560, %v807
        %v833 = vmul.f32 %v561, %v817
        %v835 = vperm.slane %v472, 0
        %v837 = vmul.f32 %v818, %v835
        %v838 = vmul.f32 %v819, %v835
        %v839 = vmul.f32 %v820, %v835
        %v840 = vmul.f32 %v821, %v835
        %v841 = vmul.f32 %v822, %v835
        %v842 = vmul.f32 %v823, %v835
        %v843 = vmul.f32 %v824, %v835
        %v844 = vmul.f32 %v825, %v835
        %v845 = vmul.f32 %v826, %v835
        %v846 = vmul.f32 %v827, %v835
        %v847 = vmul.f32 %v828, %v835
        %v848 = vmul.f32 %v829, %v835
        %v849 = vmul.f32 %v830, %v835
        %v850 = vmul.f32 %v831, %v835
        %v851 = vmul.f32 %v832, %v835
        %v852 = vmul.f32 %v833, %v835
        %v854 = vperm.slane %v473, 0
        %v856 = vadd.f32 %v837, %v854
        %v857 = vadd.f32 %v838, %v854
        %v858 = vadd.f32 %v839, %v854
        %v859 = vadd.f32 %v840, %v854
        %v860 = vadd.f32 %v841, %v854
        %v861 = vadd.f32 %v842, %v854
        %v862 = vadd.f32 %v843, %v854
        %v863 = vadd.f32 %v844, %v854
        %v864 = vadd.f32 %v845, %v854
        %v865 = vadd.f32 %v846, %v854
        %v866 = vadd.f32 %v847, %v854
        %v867 = vadd.f32 %v848, %v854
        %v868 = vadd.f32 %v849, %v854
        %v869 = vadd.f32 %v850, %v854
        %v870 = vadd.f32 %v851, %v854
        %v871 = vadd.f32 %v852, %v854
        %v872 = vpack.c.bf16 %v857, %v856
        %v873 = vpack.c.bf16 %v859, %v858
        %v874 = vpack.c.bf16 %v861, %v860
        %v875 = vpack.c.bf16 %v863, %v862
        %v876 = vpack.c.bf16 %v865, %v864
        %v877 = vpack.c.bf16 %v867, %v866
        %v878 = vpack.c.bf16 %v869, %v868
        %v879 = vpack.c.bf16 %v871, %v870
        %v880 = vld [vmem:[#allocation7] sm:$0xf]
        %v881 = vld [vmem:[#allocation7 + $0x4] sm:$0xf]
        %v882 = vld [vmem:[#allocation7 + $0x8] sm:$0xf]
        %v883 = vld [vmem:[#allocation7 + $0xc] sm:$0xf]
        %v884 = vld [vmem:[%s4] sm:$0x1]
        %v886 = vperm.slane %v884, 0
        %v892 = vunpack.c.l.b16 %v880
        %v893 = vunpack.c.l.b16 %v881
        %v894 = vunpack.c.l.b16 %v882
        %v895 = vunpack.c.l.b16 %v883
        %v896 = vpack.c.b16 %v893, %v892
        %v897 = vpack.c.b16 %v895, %v894
        %v901 = vsel %vm474, %v872, 0
        %v904 = vsel %vm474, %v873, 0
        %v907 = vsel %vm474, %v874, 0
        %v910 = vsel %vm474, %v875, 0
        %v913 = vsel %vm474, %v876, 0
        %v916 = vsel %vm474, %v877, 0
        %v919 = vsel %vm474, %v878, 0
        %v922 = vsel %vm474, %v879, 0
        %924 = vmatpush.bf16.msra.mxu0 0
        %925 = vmatpush.bf16.msra.mxu0 0
        %926 = vmatpush.bf16.msra.mxu0 0
        %927 = vmatpush.bf16.msra.mxu0 0
        %928 = vmatpush.bf16.msra.mxu0 0
        %929 = vmatpush.bf16.msra.mxu0 0
        %930 = vmatpush.bf16.msra.mxu0 %v897
        %931 = vmatpush.bf16.msra.mxu0 %v896
        %932 = vmatmul.bf16.gmra.mxu0 %v901
        %v933 = vpop.f32.mrf.mxu0
        %v934 = vadd.f32 %v886, %v933
        %v935 = vpop.f32.mrf.mxu0
        %v936 = vadd.f32 %v886, %v935
        %937 = vmatmul.bf16.gmra.mxu0 %v904
        %v938 = vpop.f32.mrf.mxu0
        %v939 = vadd.f32 %v886, %v938
        %v940 = vpop.f32.mrf.mxu0
        %v941 = vadd.f32 %v886, %v940
        %942 = vmatmul.bf16.gmra.mxu0 %v907
        %v943 = vpop.f32.mrf.mxu0
        %v944 = vadd.f32 %v886, %v943
        %v945 = vpop.f32.mrf.mxu0
        %v946 = vadd.f32 %v886, %v945
        %947 = vmatmul.bf16.gmra.mxu0 %v910
        %v948 = vpop.f32.mrf.mxu0
        %v949 = vadd.f32 %v886, %v948
        %v950 = vpop.f32.mrf.mxu0
        %v951 = vadd.f32 %v886, %v950
        %952 = vmatmul.bf16.gmra.mxu0 %v913
        %v953 = vpop.f32.mrf.mxu0
        %v954 = vadd.f32 %v886, %v953
        %v955 = vpop.f32.mrf.mxu0
        %v956 = vadd.f32 %v886, %v955
        %957 = vmatmul.bf16.gmra.mxu0 %v916
        %v958 = vpop.f32.mrf.mxu0
        %v959 = vadd.f32 %v886, %v958
        %v960 = vpop.f32.mrf.mxu0
        %v961 = vadd.f32 %v886, %v960
        %962 = vmatmul.bf16.gmra.mxu0 %v919
        %v963 = vpop.f32.mrf.mxu0
        %v964 = vadd.f32 %v886, %v963
        %v965 = vpop.f32.mrf.mxu0
        %v966 = vadd.f32 %v886, %v965
        %967 = vmatmul.bf16.gmra.mxu0 %v922
        %v968 = vpop.f32.mrf.mxu0
        %v969 = vadd.f32 %v886, %v968
        %v970 = vpop.f32.mrf.mxu0
        %v971 = vadd.f32 %v886, %v970
        %972 = vdwg.mxu0
        %v973 = vld [vmem:[#allocation8] sm:$0xff]
        %v974 = vld [vmem:[#allocation8 + $0x8] sm:$0xff]
        %v975 = vld [vmem:[#allocation8 + $0x10] sm:$0xff]
        %v976 = vld [vmem:[#allocation8 + $0x18] sm:$0xff]
        %v977 = vld [vmem:[#allocation8 + $0x20] sm:$0xff]
        %v978 = vld [vmem:[#allocation8 + $0x28] sm:$0xff]
        %v979 = vld [vmem:[#allocation8 + $0x30] sm:$0xff]
        %v980 = vld [vmem:[#allocation8 + $0x38] sm:$0xff]
        %v981 = vld [vmem:[#allocation8 + $0x40] sm:$0xff]
        %v982 = vld [vmem:[#allocation8 + $0x48] sm:$0xff]
        %v983 = vld [vmem:[#allocation8 + $0x50] sm:$0xff]
        %v984 = vld [vmem:[#allocation8 + $0x58] sm:$0xff]
        %v985 = vld [vmem:[#allocation8 + $0x60] sm:$0xff]
        %v986 = vld [vmem:[#allocation8 + $0x68] sm:$0xff]
        %v987 = vld [vmem:[#allocation8 + $0x70] sm:$0xff]
        %v988 = vld [vmem:[#allocation8 + $0x78] sm:$0xff]
        %v989 = vld [vmem:[#allocation8 + $0x80] sm:$0xff]
        %v990 = vld [vmem:[#allocation8 + $0x88] sm:$0xff]
        %v991 = vld [vmem:[#allocation8 + $0x90] sm:$0xff]
        %v992 = vld [vmem:[#allocation8 + $0x98] sm:$0xff]
        %v993 = vld [vmem:[#allocation8 + $0xa0] sm:$0xff]
        %v994 = vld [vmem:[#allocation8 + $0xa8] sm:$0xff]
        %v995 = vld [vmem:[#allocation8 + $0xb0] sm:$0xff]
        %v996 = vld [vmem:[#allocation8 + $0xb8] sm:$0xff]
        %v997 = vld [vmem:[#allocation8 + $0xc0] sm:$0xff]
        %v998 = vld [vmem:[#allocation8 + $0xc8] sm:$0xff]
        %v999 = vld [vmem:[#allocation8 + $0xd0] sm:$0xff]
        %v1000 = vld [vmem:[#allocation8 + $0xd8] sm:$0xff]
        %v1001 = vld [vmem:[#allocation8 + $0xe0] sm:$0xff]
        %v1002 = vld [vmem:[#allocation8 + $0xe8] sm:$0xff]
        %v1003 = vld [vmem:[#allocation8 + $0xf0] sm:$0xff]
        %v1004 = vld [vmem:[#allocation8 + $0xf8] sm:$0xff]
        %v1005 = vld [vmem:[#allocation11] sm:$0xf]
        %v1006 = vld [vmem:[#allocation11 + $0x4] sm:$0xf]
        %v1007 = vld [vmem:[#allocation11 + $0x8] sm:$0xf]
        %v1008 = vld [vmem:[#allocation11 + $0xc] sm:$0xf]
        %v1009 = vld [vmem:[%s8] sm:$0x1]
        %v1010 = vld [vmem:[#allocation10] sm:$0xff]
        %v1011 = vld [vmem:[#allocation10 + $0x8] sm:$0xff]
        %v1012 = vld [vmem:[#allocation10 + $0x10] sm:$0xff]
        %v1013 = vld [vmem:[#allocation10 + $0x18] sm:$0xff]
        %v1014 = vld [vmem:[#allocation10 + $0x20] sm:$0xff]
        %v1015 = vld [vmem:[#allocation10 + $0x28] sm:$0xff]
        %v1016 = vld [vmem:[#allocation10 + $0x30] sm:$0xff]
        %v1017 = vld [vmem:[#allocation10 + $0x38] sm:$0xff]
        %v1018 = vpack.c.bf16 %v939, %v934
        %v1019 = vpack.c.bf16 %v949, %v944
        %v1020 = vpack.c.bf16 %v959, %v954
        %v1021 = vpack.c.bf16 %v969, %v964
        %1026 = vrot.lane.b32.xlu0 %v1018, 96
        %v1027 = vpop.permute.xlu0 %1026
        %1028 = vrot.lane.b32.xlu0 %v1019, 96
        %v1029 = vpop.permute.xlu0 %1028
        %1030 = vrot.lane.b32.xlu0 %v1020, 96
        %v1031 = vpop.permute.xlu0 %1030
        %1032 = vrot.lane.b32.xlu0 %v1021, 96
        %v1033 = vpop.permute.xlu0 %1032
        %vm1034 = vcmask 64512
        %v1036 = vsel %vm1034, %v1018, 0
        %v1039 = vsel %vm1034, %v1019, 0
        %v1042 = vsel %vm1034, %v1020, 0
        %v1045 = vsel %vm1034, %v1021, 0
        %v1048 = vsel %vm1034, %v1027, 0
        %v1051 = vsel %vm1034, %v1029, 0
        %v1054 = vsel %vm1034, %v1031, 0
        %v1057 = vsel %vm1034, %v1033, 0
        %1059 = vmatpush.bf16.xpose.msra.mxu0 0
        %1060 = vmatpush.bf16.xpose.msra.mxu0 0
        %1061 = vmatpush.bf16.xpose.msra.mxu0 0
        %1062 = vmatpush.bf16.xpose.msra.mxu0 0
        %1063 = vmatpush.bf16.xpose.msra.mxu0 %v1057
        %1064 = vmatpush.bf16.xpose.msra.mxu0 %v1054
        %1065 = vmatpush.bf16.xpose.msra.mxu0 %v1051
        %1066 = vmatpush.bf16.xpose.msra.mxu0 %v1048
        %1067 = vmatmul.bf16.gmra.mxu0 %v1036
        %v1068 = vpop.f32.mrf.mxu0
        %v1069 = vadd.f32 %v973, %v1068
        %v1070 = vpop.f32.mrf.mxu0
        %v1071 = vadd.f32 %v974, %v1070
        %1072 = vmatmul.bf16.gmra.mxu0 %v1039
        %v1073 = vpop.f32.mrf.mxu0
        %v1074 = vadd.f32 %v975, %v1073
        %v1075 = vpop.f32.mrf.mxu0
        %v1076 = vadd.f32 %v976, %v1075
        %1077 = vmatmul.bf16.gmra.mxu0 %v1042
        %v1078 = vpop.f32.mrf.mxu0
        %v1079 = vadd.f32 %v977, %v1078
        %v1080 = vpop.f32.mrf.mxu0
        %v1081 = vadd.f32 %v978, %v1080
        %1082 = vmatmul.bf16.gmra.mxu0 %v1045
        %v1083 = vpop.f32.mrf.mxu0
        %v1084 = vadd.f32 %v979, %v1083
        %v1085 = vpop.f32.mrf.mxu0
        %v1086 = vadd.f32 %v980, %v1085
        %1087 = vdwg.mxu0
        %v1088 = vadd.f32 %v1069, %v1010
        %v1089 = vadd.f32 %v1071, %v1011
        %v1090 = vadd.f32 %v1074, %v1012
        %v1091 = vadd.f32 %v1076, %v1013
        %v1092 = vadd.f32 %v1079, %v1014
        %v1093 = vadd.f32 %v1081, %v1015
        %v1094 = vadd.f32 %v1084, %v1016
        %v1095 = vadd.f32 %v1086, %v1017
        %vm1096 = vcmask 523264
        %v1097 = vsel %vm1096, %v1088, -inf
        %1098 = vmax.xlane.f32.xlu0 %v1097
        %v1099 = vpop.xlane.xlu0 %1098
        %v1100 = vsel %vm1096, %v1089, -inf
        %1101 = vmax.xlane.f32.xlu0 %v1100
        %v1102 = vpop.xlane.xlu0 %1101
        %v1103 = vsel %vm1096, %v1090, -inf
        %1104 = vmax.xlane.f32.xlu0 %v1103
        %v1105 = vpop.xlane.xlu0 %1104
        %v1106 = vsel %vm1096, %v1091, -inf
        %1107 = vmax.xlane.f32.xlu0 %v1106
        %v1108 = vpop.xlane.xlu0 %1107
        %v1109 = vsel %vm1096, %v1092, -inf
        %1110 = vmax.xlane.f32.xlu0 %v1109
        %v1111 = vpop.xlane.xlu0 %1110
        %v1112 = vsel %vm1096, %v1093, -inf
        %1113 = vmax.xlane.f32.xlu0 %v1112
        %v1114 = vpop.xlane.xlu0 %1113
        %v1115 = vsel %vm1096, %v1094, -inf
        %1116 = vmax.xlane.f32.xlu0 %v1115
        %v1117 = vpop.xlane.xlu0 %1116
        %v1118 = vsel %vm1096, %v1095, -inf
        %1119 = vmax.xlane.f32.xlu0 %v1118
        %v1120 = vpop.xlane.xlu0 %1119
        %v1121 = vsub.f32 %v1088, %v1099
        %v1122 = vsub.f32 %v1089, %v1102
        %v1123 = vsub.f32 %v1090, %v1105
        %v1124 = vsub.f32 %v1091, %v1108
        %v1125 = vsub.f32 %v1092, %v1111
        %v1126 = vsub.f32 %v1093, %v1114
        %v1127 = vsub.f32 %v1094, %v1117
        %v1128 = vsub.f32 %v1095, %v1120
        %v1129 = vmul.f32 %v1121, 1.442695
        %v1130 = vpow.pop %v1129
        %v1131 = vmul.f32 %v1122, 1.442695
        %v1132 = vpow.pop %v1131
        %v1133 = vmul.f32 %v1123, 1.442695
        %v1134 = vpow.pop %v1133
        %v1135 = vmul.f32 %v1124, 1.442695
        %v1136 = vpow.pop %v1135
        %v1137 = vmul.f32 %v1125, 1.442695
        %v1138 = vpow.pop %v1137
        %v1139 = vmul.f32 %v1126, 1.442695
        %v1140 = vpow.pop %v1139
        %v1141 = vmul.f32 %v1127, 1.442695
        %v1142 = vpow.pop %v1141
        %v1143 = vmul.f32 %v1128, 1.442695
        %v1144 = vpow.pop %v1143
        %v1145 = vsel %vm1096, %v1130, 0.0
        %1146 = vadd.xlane.f32.xlu0 %v1145
        %v1147 = vpop.xlane.xlu0 %1146
        %v1148 = vsel %vm1096, %v1132, 0.0
        %1149 = vadd.xlane.f32.xlu0 %v1148
        %v1150 = vpop.xlane.xlu0 %1149
        %v1151 = vsel %vm1096, %v1134, 0.0
        %1152 = vadd.xlane.f32.xlu0 %v1151
        %v1153 = vpop.xlane.xlu0 %1152
        %v1154 = vsel %vm1096, %v1136, 0.0
        %1155 = vadd.xlane.f32.xlu0 %v1154
        %v1156 = vpop.xlane.xlu0 %1155
        %v1157 = vsel %vm1096, %v1138, 0.0
        %1158 = vadd.xlane.f32.xlu0 %v1157
        %v1159 = vpop.xlane.xlu0 %1158
        %v1160 = vsel %vm1096, %v1140, 0.0
        %1161 = vadd.xlane.f32.xlu0 %v1160
        %v1162 = vpop.xlane.xlu0 %1161
        %v1163 = vsel %vm1096, %v1142, 0.0
        %1164 = vadd.xlane.f32.xlu0 %v1163
        %v1165 = vpop.xlane.xlu0 %1164
        %v1166 = vsel %vm1096, %v1144, 0.0
        %1167 = vadd.xlane.f32.xlu0 %v1166
        %v1168 = vpop.xlane.xlu0 %1167
        %v1169 = vrcp.pop %v1147
        %v1170 = vrcp.pop %v1150
        %v1171 = vrcp.pop %v1153
        %v1172 = vrcp.pop %v1156
        %v1173 = vrcp.pop %v1159
        %v1174 = vrcp.pop %v1162
        %v1175 = vrcp.pop %v1165
        %v1176 = vrcp.pop %v1168
        %v1177 = vmul.f32 %v1130, %v1169
        %v1178 = vmul.f32 %v1132, %v1170
        %v1179 = vmul.f32 %v1134, %v1171
        %v1180 = vmul.f32 %v1136, %v1172
        %v1181 = vmul.f32 %v1138, %v1173
        %v1182 = vmul.f32 %v1140, %v1174
        %v1183 = vmul.f32 %v1142, %v1175
        %v1184 = vmul.f32 %v1144, %v1176
        %v1185 = vpack.c.bf16 %v1178, %v1177
        %v1186 = vpack.c.bf16 %v1180, %v1179
        %v1187 = vpack.c.bf16 %v1182, %v1181
        %v1188 = vpack.c.bf16 %v1184, %v1183
        %1189 = vrot.lane.b32.xlu0 %v1018, 64
        %v1190 = vpop.permute.xlu0 %1189
        %1191 = vrot.lane.b32.xlu0 %v1019, 64
        %v1192 = vpop.permute.xlu0 %1191
        %1193 = vrot.lane.b32.xlu0 %v1020, 64
        %v1194 = vpop.permute.xlu0 %1193
        %1195 = vrot.lane.b32.xlu0 %v1021, 64
        %v1196 = vpop.permute.xlu0 %1195
        %v1202 = vsel %vm1096, %v1185, 0
        %v1205 = vsel %vm1096, %v1186, 0
        %v1208 = vsel %vm1096, %v1187, 0
        %v1211 = vsel %vm1096, %v1188, 0
        %1213 = vmatpush.bf16.msra.mxu0 0
        %1214 = vmatpush.bf16.msra.mxu0 0
        %1215 = vmatpush.bf16.msra.mxu0 0
        %1216 = vmatpush.bf16.msra.mxu0 0
        %1217 = vmatpush.bf16.msra.mxu0 %v1196
        %1218 = vmatpush.bf16.msra.mxu0 %v1194
        %1219 = vmatpush.bf16.msra.mxu0 %v1192
        %1220 = vmatpush.bf16.msra.mxu0 %v1190
        %1221 = vmatmul.bf16.gmra.mxu0 %v1202
        %v1222 = vpop.f32.mrf.mxu0
        %v1223 = vadd.f32 0.0, %v1222
        %v1224 = vpop.f32.mrf.mxu0
        %v1225 = vadd.f32 0.0, %v1224
        %1226 = vmatmul.bf16.gmra.mxu0 %v1205
        %v1227 = vpop.f32.mrf.mxu0
        %v1228 = vadd.f32 0.0, %v1227
        %v1229 = vpop.f32.mrf.mxu0
        %v1230 = vadd.f32 0.0, %v1229
        %1231 = vmatmul.bf16.gmra.mxu0 %v1208
        %v1232 = vpop.f32.mrf.mxu0
        %v1233 = vadd.f32 0.0, %v1232
        %v1234 = vpop.f32.mrf.mxu0
        %v1235 = vadd.f32 0.0, %v1234
        %1236 = vmatmul.bf16.gmra.mxu0 %v1211
        %v1237 = vpop.f32.mrf.mxu0
        %v1238 = vadd.f32 0.0, %v1237
        %v1239 = vpop.f32.mrf.mxu0
        %v1240 = vadd.f32 0.0, %v1239
        %1241 = vdwg.mxu0
        %v1242 = vpack.c.bf16 %v1225, %v1223
        %v1243 = vpack.c.bf16 %v1230, %v1228
        %v1244 = vpack.c.bf16 %v1235, %v1233
        %v1245 = vpack.c.bf16 %v1240, %v1238
        %1246 = vrot.lane.b32.xlu0 %v1018, 120
        %v1247 = vpop.permute.xlu0 %1246
        %1248 = vrot.lane.b32.xlu0 %v1019, 120
        %v1249 = vpop.permute.xlu0 %1248
        %1250 = vrot.lane.b32.xlu0 %v1020, 120
        %v1251 = vpop.permute.xlu0 %1250
        %1252 = vrot.lane.b32.xlu0 %v1021, 120
        %v1253 = vpop.permute.xlu0 %1252
        %1254 = vrot.lane.b32.xlu0 %v1018, 88
        %v1255 = vpop.permute.xlu0 %1254
        %1256 = vrot.lane.b32.xlu0 %v1019, 88
        %v1257 = vpop.permute.xlu0 %1256
        %1258 = vrot.lane.b32.xlu0 %v1020, 88
        %v1259 = vpop.permute.xlu0 %1258
        %1260 = vrot.lane.b32.xlu0 %v1021, 88
        %v1261 = vpop.permute.xlu0 %1260
        %v1263 = vsel %vm1034, %v1247, 0
        %v1266 = vsel %vm1034, %v1249, 0
        %v1269 = vsel %vm1034, %v1251, 0
        %v1272 = vsel %vm1034, %v1253, 0
        %v1275 = vsel %vm1034, %v1255, 0
        %v1278 = vsel %vm1034, %v1257, 0
        %v1281 = vsel %vm1034, %v1259, 0
        %v1284 = vsel %vm1034, %v1261, 0
        %1286 = vmatpush.bf16.xpose.msra.mxu0 0
        %1287 = vmatpush.bf16.xpose.msra.mxu0 0
        %1288 = vmatpush.bf16.xpose.msra.mxu0 0
        %1289 = vmatpush.bf16.xpose.msra.mxu0 0
        %1290 = vmatpush.bf16.xpose.msra.mxu0 %v1284
        %1291 = vmatpush.bf16.xpose.msra.mxu0 %v1281
        %1292 = vmatpush.bf16.xpose.msra.mxu0 %v1278
        %1293 = vmatpush.bf16.xpose.msra.mxu0 %v1275
        %1294 = vmatmul.bf16.gmra.mxu0 %v1263
        %v1295 = vpop.f32.mrf.mxu0
        %v1296 = vadd.f32 %v981, %v1295
        %v1297 = vpop.f32.mrf.mxu0
        %v1298 = vadd.f32 %v982, %v1297
        %1299 = vmatmul.bf16.gmra.mxu0 %v1266
        %v1300 = vpop.f32.mrf.mxu0
        %v1301 = vadd.f32 %v983, %v1300
        %v1302 = vpop.f32.mrf.mxu0
        %v1303 = vadd.f32 %v984, %v1302
        %1304 = vmatmul.bf16.gmra.mxu0 %v1269
        %v1305 = vpop.f32.mrf.mxu0
        %v1306 = vadd.f32 %v985, %v1305
        %v1307 = vpop.f32.mrf.mxu0
        %v1308 = vadd.f32 %v986, %v1307
        %1309 = vmatmul.bf16.gmra.mxu0 %v1272
        %v1310 = vpop.f32.mrf.mxu0
        %v1311 = vadd.f32 %v987, %v1310
        %v1312 = vpop.f32.mrf.mxu0
        %v1313 = vadd.f32 %v988, %v1312
        %1314 = vdwg.mxu0
        %v1315 = vadd.f32 %v1296, %v1010
        %v1316 = vadd.f32 %v1298, %v1011
        %v1317 = vadd.f32 %v1301, %v1012
        %v1318 = vadd.f32 %v1303, %v1013
        %v1319 = vadd.f32 %v1306, %v1014
        %v1320 = vadd.f32 %v1308, %v1015
        %v1321 = vadd.f32 %v1311, %v1016
        %v1322 = vadd.f32 %v1313, %v1017
        %v1323 = vsel %vm1096, %v1315, -inf
        %1324 = vmax.xlane.f32.xlu0 %v1323
        %v1325 = vpop.xlane.xlu0 %1324
        %v1326 = vsel %vm1096, %v1316, -inf
        %1327 = vmax.xlane.f32.xlu0 %v1326
        %v1328 = vpop.xlane.xlu0 %1327
        %v1329 = vsel %vm1096, %v1317, -inf
        %1330 = vmax.xlane.f32.xlu0 %v1329
        %v1331 = vpop.xlane.xlu0 %1330
        %v1332 = vsel %vm1096, %v1318, -inf
        %1333 = vmax.xlane.f32.xlu0 %v1332
        %v1334 = vpop.xlane.xlu0 %1333
        %v1335 = vsel %vm1096, %v1319, -inf
        %1336 = vmax.xlane.f32.xlu0 %v1335
        %v1337 = vpop.xlane.xlu0 %1336
        %v1338 = vsel %vm1096, %v1320, -inf
        %1339 = vmax.xlane.f32.xlu0 %v1338
        %v1340 = vpop.xlane.xlu0 %1339
        %v1341 = vsel %vm1096, %v1321, -inf
        %1342 = vmax.xlane.f32.xlu0 %v1341
        %v1343 = vpop.xlane.xlu0 %1342
        %v1344 = vsel %vm1096, %v1322, -inf
        %1345 = vmax.xlane.f32.xlu0 %v1344
        %v1346 = vpop.xlane.xlu0 %1345
        %v1347 = vsub.f32 %v1315, %v1325
        %v1348 = vsub.f32 %v1316, %v1328
        %v1349 = vsub.f32 %v1317, %v1331
        %v1350 = vsub.f32 %v1318, %v1334
        %v1351 = vsub.f32 %v1319, %v1337
        %v1352 = vsub.f32 %v1320, %v1340
        %v1353 = vsub.f32 %v1321, %v1343
        %v1354 = vsub.f32 %v1322, %v1346
        %v1355 = vmul.f32 %v1347, 1.442695
        %v1356 = vpow.pop %v1355
        %v1357 = vmul.f32 %v1348, 1.442695
        %v1358 = vpow.pop %v1357
        %v1359 = vmul.f32 %v1349, 1.442695
        %v1360 = vpow.pop %v1359
        %v1361 = vmul.f32 %v1350, 1.442695
        %v1362 = vpow.pop %v1361
        %v1363 = vmul.f32 %v1351, 1.442695
        %v1364 = vpow.pop %v1363
        %v1365 = vmul.f32 %v1352, 1.442695
        %v1366 = vpow.pop %v1365
        %v1367 = vmul.f32 %v1353, 1.442695
        %v1368 = vpow.pop %v1367
        %v1369 = vmul.f32 %v1354, 1.442695
        %v1370 = vpow.pop %v1369
        %v1371 = vsel %vm1096, %v1356, 0.0
        %1372 = vadd.xlane.f32.xlu0 %v1371
        %v1373 = vpop.xlane.xlu0 %1372
        %v1374 = vsel %vm1096, %v1358, 0.0
        %1375 = vadd.xlane.f32.xlu0 %v1374
        %v1376 = vpop.xlane.xlu0 %1375
        %v1377 = vsel %vm1096, %v1360, 0.0
        %1378 = vadd.xlane.f32.xlu0 %v1377
        %v1379 = vpop.xlane.xlu0 %1378
        %v1380 = vsel %vm1096, %v1362, 0.0
        %1381 = vadd.xlane.f32.xlu0 %v1380
        %v1382 = vpop.xlane.xlu0 %1381
        %v1383 = vsel %vm1096, %v1364, 0.0
        %1384 = vadd.xlane.f32.xlu0 %v1383
        %v1385 = vpop.xlane.xlu0 %1384
        %v1386 = vsel %vm1096, %v1366, 0.0
        %1387 = vadd.xlane.f32.xlu0 %v1386
        %v1388 = vpop.xlane.xlu0 %1387
        %v1389 = vsel %vm1096, %v1368, 0.0
        %1390 = vadd.xlane.f32.xlu0 %v1389
        %v1391 = vpop.xlane.xlu0 %1390
        %v1392 = vsel %vm1096, %v1370, 0.0
        %1393 = vadd.xlane.f32.xlu0 %v1392
        %v1394 = vpop.xlane.xlu0 %1393
        %v1395 = vrcp.pop %v1373
        %v1396 = vrcp.pop %v1376
        %v1397 = vrcp.pop %v1379
        %v1398 = vrcp.pop %v1382
        %v1399 = vrcp.pop %v1385
        %v1400 = vrcp.pop %v1388
        %v1401 = vrcp.pop %v1391
        %v1402 = vrcp.pop %v1394
        %v1403 = vmul.f32 %v1356, %v1395
        %v1404 = vmul.f32 %v1358, %v1396
        %v1405 = vmul.f32 %v1360, %v1397
        %v1406 = vmul.f32 %v1362, %v1398
        %v1407 = vmul.f32 %v1364, %v1399
        %v1408 = vmul.f32 %v1366, %v1400
        %v1409 = vmul.f32 %v1368, %v1401
        %v1410 = vmul.f32 %v1370, %v1402
        %v1411 = vpack.c.bf16 %v1404, %v1403
        %v1412 = vpack.c.bf16 %v1406, %v1405
        %v1413 = vpack.c.bf16 %v1408, %v1407
        %v1414 = vpack.c.bf16 %v1410, %v1409
        %1415 = vrot.lane.b32.xlu0 %v1018, 56
        %v1416 = vpop.permute.xlu0 %1415
        %1417 = vrot.lane.b32.xlu0 %v1019, 56
        %v1418 = vpop.permute.xlu0 %1417
        %1419 = vrot.lane.b32.xlu0 %v1020, 56
        %v1420 = vpop.permute.xlu0 %1419
        %1421 = vrot.lane.b32.xlu0 %v1021, 56
        %v1422 = vpop.permute.xlu0 %1421
        %v1428 = vsel %vm1096, %v1411, 0
        %v1431 = vsel %vm1096, %v1412, 0
        %v1434 = vsel %vm1096, %v1413, 0
        %v1437 = vsel %vm1096, %v1414, 0
        %1439 = vmatpush.bf16.msra.mxu0 0
        %1440 = vmatpush.bf16.msra.mxu0 0
        %1441 = vmatpush.bf16.msra.mxu0 0
        %1442 = vmatpush.bf16.msra.mxu0 0
        %1443 = vmatpush.bf16.msra.mxu0 %v1422
        %1444 = vmatpush.bf16.msra.mxu0 %v1420
        %1445 = vmatpush.bf16.msra.mxu0 %v1418
        %1446 = vmatpush.bf16.msra.mxu0 %v1416
        %1447 = vmatmul.bf16.gmra.mxu0 %v1428
        %v1448 = vpop.f32.mrf.mxu0
        %v1449 = vadd.f32 0.0, %v1448
        %v1450 = vpop.f32.mrf.mxu0
        %v1451 = vadd.f32 0.0, %v1450
        %1452 = vmatmul.bf16.gmra.mxu0 %v1431
        %v1453 = vpop.f32.mrf.mxu0
        %v1454 = vadd.f32 0.0, %v1453
        %v1455 = vpop.f32.mrf.mxu0
        %v1456 = vadd.f32 0.0, %v1455
        %1457 = vmatmul.bf16.gmra.mxu0 %v1434
        %v1458 = vpop.f32.mrf.mxu0
        %v1459 = vadd.f32 0.0, %v1458
        %v1460 = vpop.f32.mrf.mxu0
        %v1461 = vadd.f32 0.0, %v1460
        %1462 = vmatmul.bf16.gmra.mxu0 %v1437
        %v1463 = vpop.f32.mrf.mxu0
        %v1464 = vadd.f32 0.0, %v1463
        %v1465 = vpop.f32.mrf.mxu0
        %v1466 = vadd.f32 0.0, %v1465
        %1467 = vdwg.mxu0
        %v1468 = vpack.c.bf16 %v1451, %v1449
        %v1469 = vpack.c.bf16 %v1456, %v1454
        %v1470 = vpack.c.bf16 %v1461, %v1459
        %v1471 = vpack.c.bf16 %v1466, %v1464
        %v1473 = vsel %vm1034, %v1468, 0
        %v1476 = vsel %vm1034, %v1469, 0
        %v1479 = vsel %vm1034, %v1470, 0
        %v1482 = vsel %vm1034, %v1471, 0
        %vm1484 = vcmask 1043456
        %v1486 = vsel %vm1484, %v1006, 0
        %1488 = vmatpush.bf16.msra.mxu0 0
        %1489 = vmatpush.bf16.msra.mxu0 0
        %1490 = vmatpush.bf16.msra.mxu0 0
        %1491 = vmatpush.bf16.msra.mxu0 0
        %1492 = vmatpush.bf16.msra.mxu0 0
        %1493 = vmatpush.bf16.msra.mxu0 0
        %1494 = vmatpush.bf16.msra.mxu0 0
        %1495 = vmatpush.bf16.msra.mxu0 %v1486
        %1496 = vmatmul.bf16.gmra.mxu0 %v1473
        %v1497 = vpop.f32.mrf.mxu0
        %v1498 = vadd.f32 0.0, %v1497
        %v1499 = vpop.f32.mrf.mxu0
        %v1500 = vadd.f32 0.0, %v1499
        %1501 = vmatmul.bf16.gmra.mxu0 %v1476
        %v1502 = vpop.f32.mrf.mxu0
        %v1503 = vadd.f32 0.0, %v1502
        %v1504 = vpop.f32.mrf.mxu0
        %v1505 = vadd.f32 0.0, %v1504
        %1506 = vmatmul.bf16.gmra.mxu0 %v1479
        %v1507 = vpop.f32.mrf.mxu0
        %v1508 = vadd.f32 0.0, %v1507
        %v1509 = vpop.f32.mrf.mxu0
        %v1510 = vadd.f32 0.0, %v1509
        %1511 = vmatmul.bf16.gmra.mxu0 %v1482
        %v1512 = vpop.f32.mrf.mxu0
        %v1513 = vadd.f32 0.0, %v1512
        %v1514 = vpop.f32.mrf.mxu0
        %v1515 = vadd.f32 0.0, %v1514
        %1516 = vdwg.mxu0
        %v1518 = vsel %vm1034, %v1242, 0
        %v1521 = vsel %vm1034, %v1243, 0
        %v1524 = vsel %vm1034, %v1244, 0
        %v1527 = vsel %vm1034, %v1245, 0
        %v1530 = vsel %vm1484, %v1005, 0
        %1532 = vmatpush.bf16.msra.mxu0 0
        %1533 = vmatpush.bf16.msra.mxu0 0
        %1534 = vmatpush.bf16.msra.mxu0 0
        %1535 = vmatpush.bf16.msra.mxu0 0
        %1536 = vmatpush.bf16.msra.mxu0 0
        %1537 = vmatpush.bf16.msra.mxu0 0
        %1538 = vmatpush.bf16.msra.mxu0 0
        %1539 = vmatpush.bf16.msra.mxu0 %v1530
        %1540 = vmatmul.bf16.gmra.mxu0 %v1518
        %v1541 = vpop.f32.mrf.mxu0
        %v1542 = vadd.f32 %v1498, %v1541
        %v1543 = vpop.f32.mrf.mxu0
        %v1544 = vadd.f32 %v1500, %v1543
        %1545 = vmatmul.bf16.gmra.mxu0 %v1521
        %v1546 = vpop.f32.mrf.mxu0
        %v1547 = vadd.f32 %v1503, %v1546
        %v1548 = vpop.f32.mrf.mxu0
        %v1549 = vadd.f32 %v1505, %v1548
        %1550 = vmatmul.bf16.gmra.mxu0 %v1524
        %v1551 = vpop.f32.mrf.mxu0
        %v1552 = vadd.f32 %v1508, %v1551
        %v1553 = vpop.f32.mrf.mxu0
        %v1554 = vadd.f32 %v1510, %v1553
        %1555 = vmatmul.bf16.gmra.mxu0 %v1527
        %v1556 = vpop.f32.mrf.mxu0
        %v1557 = vadd.f32 %v1513, %v1556
        %v1558 = vpop.f32.mrf.mxu0
        %v1559 = vadd.f32 %v1515, %v1558
        %1560 = vdwg.mxu0
        %1561 = vrot.lane.b32.xlu0 %v1018, 112
        %v1562 = vpop.permute.xlu0 %1561
        %1563 = vrot.lane.b32.xlu0 %v1019, 112
        %v1564 = vpop.permute.xlu0 %1563
        %1565 = vrot.lane.b32.xlu0 %v1020, 112
        %v1566 = vpop.permute.xlu0 %1565
        %1567 = vrot.lane.b32.xlu0 %v1021, 112
        %v1568 = vpop.permute.xlu0 %1567
        %1569 = vrot.lane.b32.xlu0 %v1018, 80
        %v1570 = vpop.permute.xlu0 %1569
        %1571 = vrot.lane.b32.xlu0 %v1019, 80
        %v1572 = vpop.permute.xlu0 %1571
        %1573 = vrot.lane.b32.xlu0 %v1020, 80
        %v1574 = vpop.permute.xlu0 %1573
        %1575 = vrot.lane.b32.xlu0 %v1021, 80
        %v1576 = vpop.permute.xlu0 %1575
        %v1578 = vsel %vm1034, %v1562, 0
        %v1581 = vsel %vm1034, %v1564, 0
        %v1584 = vsel %vm1034, %v1566, 0
        %v1587 = vsel %vm1034, %v1568, 0
        %v1590 = vsel %vm1034, %v1570, 0
        %v1593 = vsel %vm1034, %v1572, 0
        %v1596 = vsel %vm1034, %v1574, 0
        %v1599 = vsel %vm1034, %v1576, 0
        %1601 = vmatpush.bf16.xpose.msra.mxu0 0
        %1602 = vmatpush.bf16.xpose.msra.mxu0 0
        %1603 = vmatpush.bf16.xpose.msra.mxu0 0
        %1604 = vmatpush.bf16.xpose.msra.mxu0 0
        %1605 = vmatpush.bf16.xpose.msra.mxu0 %v1599
        %1606 = vmatpush.bf16.xpose.msra.mxu0 %v1596
        %1607 = vmatpush.bf16.xpose.msra.mxu0 %v1593
        %1608 = vmatpush.bf16.xpose.msra.mxu0 %v1590
        %1609 = vmatmul.bf16.gmra.mxu0 %v1578
        %v1610 = vpop.f32.mrf.mxu0
        %v1611 = vadd.f32 %v989, %v1610
        %v1612 = vpop.f32.mrf.mxu0
        %v1613 = vadd.f32 %v990, %v1612
        %1614 = vmatmul.bf16.gmra.mxu0 %v1581
        %v1615 = vpop.f32.mrf.mxu0
        %v1616 = vadd.f32 %v991, %v1615
        %v1617 = vpop.f32.mrf.mxu0
        %v1618 = vadd.f32 %v992, %v1617
        %1619 = vmatmul.bf16.gmra.mxu0 %v1584
        %v1620 = vpop.f32.mrf.mxu0
        %v1621 = vadd.f32 %v993, %v1620
        %v1622 = vpop.f32.mrf.mxu0
        %v1623 = vadd.f32 %v994, %v1622
        %1624 = vmatmul.bf16.gmra.mxu0 %v1587
        %v1625 = vpop.f32.mrf.mxu0
        %v1626 = vadd.f32 %v995, %v1625
        %v1627 = vpop.f32.mrf.mxu0
        %v1628 = vadd.f32 %v996, %v1627
        %1629 = vdwg.mxu0
        %v1630 = vadd.f32 %v1611, %v1010
        %v1631 = vadd.f32 %v1613, %v1011
        %v1632 = vadd.f32 %v1616, %v1012
        %v1633 = vadd.f32 %v1618, %v1013
        %v1634 = vadd.f32 %v1621, %v1014
        %v1635 = vadd.f32 %v1623, %v1015
        %v1636 = vadd.f32 %v1626, %v1016
        %v1637 = vadd.f32 %v1628, %v1017
        %v1638 = vsel %vm1096, %v1630, -inf
        %1639 = vmax.xlane.f32.xlu0 %v1638
        %v1640 = vpop.xlane.xlu0 %1639
        %v1641 = vsel %vm1096, %v1631, -inf
        %1642 = vmax.xlane.f32.xlu0 %v1641
        %v1643 = vpop.xlane.xlu0 %1642
        %v1644 = vsel %vm1096, %v1632, -inf
        %1645 = vmax.xlane.f32.xlu0 %v1644
        %v1646 = vpop.xlane.xlu0 %1645
        %v1647 = vsel %vm1096, %v1633, -inf
        %1648 = vmax.xlane.f32.xlu0 %v1647
        %v1649 = vpop.xlane.xlu0 %1648
        %v1650 = vsel %vm1096, %v1634, -inf
        %1651 = vmax.xlane.f32.xlu0 %v1650
        %v1652 = vpop.xlane.xlu0 %1651
        %v1653 = vsel %vm1096, %v1635, -inf
        %1654 = vmax.xlane.f32.xlu0 %v1653
        %v1655 = vpop.xlane.xlu0 %1654
        %v1656 = vsel %vm1096, %v1636, -inf
        %1657 = vmax.xlane.f32.xlu0 %v1656
        %v1658 = vpop.xlane.xlu0 %1657
        %v1659 = vsel %vm1096, %v1637, -inf
        %1660 = vmax.xlane.f32.xlu0 %v1659
        %v1661 = vpop.xlane.xlu0 %1660
        %v1662 = vsub.f32 %v1630, %v1640
        %v1663 = vsub.f32 %v1631, %v1643
        %v1664 = vsub.f32 %v1632, %v1646
        %v1665 = vsub.f32 %v1633, %v1649
        %v1666 = vsub.f32 %v1634, %v1652
        %v1667 = vsub.f32 %v1635, %v1655
        %v1668 = vsub.f32 %v1636, %v1658
        %v1669 = vsub.f32 %v1637, %v1661
        %v1670 = vmul.f32 %v1662, 1.442695
        %v1671 = vpow.pop %v1670
        %v1672 = vmul.f32 %v1663, 1.442695
        %v1673 = vpow.pop %v1672
        %v1674 = vmul.f32 %v1664, 1.442695
        %v1675 = vpow.pop %v1674
        %v1676 = vmul.f32 %v1665, 1.442695
        %v1677 = vpow.pop %v1676
        %v1678 = vmul.f32 %v1666, 1.442695
        %v1679 = vpow.pop %v1678
        %v1680 = vmul.f32 %v1667, 1.442695
        %v1681 = vpow.pop %v1680
        %v1682 = vmul.f32 %v1668, 1.442695
        %v1683 = vpow.pop %v1682
        %v1684 = vmul.f32 %v1669, 1.442695
        %v1685 = vpow.pop %v1684
        %v1686 = vsel %vm1096, %v1671, 0.0
        %1687 = vadd.xlane.f32.xlu0 %v1686
        %v1688 = vpop.xlane.xlu0 %1687
        %v1689 = vsel %vm1096, %v1673, 0.0
        %1690 = vadd.xlane.f32.xlu0 %v1689
        %v1691 = vpop.xlane.xlu0 %1690
        %v1692 = vsel %vm1096, %v1675, 0.0
        %1693 = vadd.xlane.f32.xlu0 %v1692
        %v1694 = vpop.xlane.xlu0 %1693
        %v1695 = vsel %vm1096, %v1677, 0.0
        %1696 = vadd.xlane.f32.xlu0 %v1695
        %v1697 = vpop.xlane.xlu0 %1696
        %v1698 = vsel %vm1096, %v1679, 0.0
        %1699 = vadd.xlane.f32.xlu0 %v1698
        %v1700 = vpop.xlane.xlu0 %1699
        %v1701 = vsel %vm1096, %v1681, 0.0
        %1702 = vadd.xlane.f32.xlu0 %v1701
        %v1703 = vpop.xlane.xlu0 %1702
        %v1704 = vsel %vm1096, %v1683, 0.0
        %1705 = vadd.xlane.f32.xlu0 %v1704
        %v1706 = vpop.xlane.xlu0 %1705
        %v1707 = vsel %vm1096, %v1685, 0.0
        %1708 = vadd.xlane.f32.xlu0 %v1707
        %v1709 = vpop.xlane.xlu0 %1708
        %v1710 = vrcp.pop %v1688
        %v1711 = vrcp.pop %v1691
        %v1712 = vrcp.pop %v1694
        %v1713 = vrcp.pop %v1697
        %v1714 = vrcp.pop %v1700
        %v1715 = vrcp.pop %v1703
        %v1716 = vrcp.pop %v1706
        %v1717 = vrcp.pop %v1709
        %v1718 = vmul.f32 %v1671, %v1710
        %v1719 = vmul.f32 %v1673, %v1711
        %v1720 = vmul.f32 %v1675, %v1712
        %v1721 = vmul.f32 %v1677, %v1713
        %v1722 = vmul.f32 %v1679, %v1714
        %v1723 = vmul.f32 %v1681, %v1715
        %v1724 = vmul.f32 %v1683, %v1716
        %v1725 = vmul.f32 %v1685, %v1717
        %v1726 = vpack.c.bf16 %v1719, %v1718
        %v1727 = vpack.c.bf16 %v1721, %v1720
        %v1728 = vpack.c.bf16 %v1723, %v1722
        %v1729 = vpack.c.bf16 %v1725, %v1724
        %1730 = vrot.lane.b32.xlu0 %v1018, 48
        %v1731 = vpop.permute.xlu0 %1730
        %1732 = vrot.lane.b32.xlu0 %v1019, 48
        %v1733 = vpop.permute.xlu0 %1732
        %1734 = vrot.lane.b32.xlu0 %v1020, 48
        %v1735 = vpop.permute.xlu0 %1734
        %1736 = vrot.lane.b32.xlu0 %v1021, 48
        %v1737 = vpop.permute.xlu0 %1736
        %v1743 = vsel %vm1096, %v1726, 0
        %v1746 = vsel %vm1096, %v1727, 0
        %v1749 = vsel %vm1096, %v1728, 0
        %v1752 = vsel %vm1096, %v1729, 0
        %1754 = vmatpush.bf16.msra.mxu0 0
        %1755 = vmatpush.bf16.msra.mxu0 0
        %1756 = vmatpush.bf16.msra.mxu0 0
        %1757 = vmatpush.bf16.msra.mxu0 0
        %1758 = vmatpush.bf16.msra.mxu0 %v1737
        %1759 = vmatpush.bf16.msra.mxu0 %v1735
        %1760 = vmatpush.bf16.msra.mxu0 %v1733
        %1761 = vmatpush.bf16.msra.mxu0 %v1731
        %1762 = vmatmul.bf16.gmra.mxu0 %v1743
        %v1763 = vpop.f32.mrf.mxu0
        %v1764 = vadd.f32 0.0, %v1763
        %v1765 = vpop.f32.mrf.mxu0
        %v1766 = vadd.f32 0.0, %v1765
        %1767 = vmatmul.bf16.gmra.mxu0 %v1746
        %v1768 = vpop.f32.mrf.mxu0
        %v1769 = vadd.f32 0.0, %v1768
        %v1770 = vpop.f32.mrf.mxu0
        %v1771 = vadd.f32 0.0, %v1770
        %1772 = vmatmul.bf16.gmra.mxu0 %v1749
        %v1773 = vpop.f32.mrf.mxu0
        %v1774 = vadd.f32 0.0, %v1773
        %v1775 = vpop.f32.mrf.mxu0
        %v1776 = vadd.f32 0.0, %v1775
        %1777 = vmatmul.bf16.gmra.mxu0 %v1752
        %v1778 = vpop.f32.mrf.mxu0
        %v1779 = vadd.f32 0.0, %v1778
        %v1780 = vpop.f32.mrf.mxu0
        %v1781 = vadd.f32 0.0, %v1780
        %1782 = vdwg.mxu0
        %v1783 = vpack.c.bf16 %v1766, %v1764
        %v1784 = vpack.c.bf16 %v1771, %v1769
        %v1785 = vpack.c.bf16 %v1776, %v1774
        %v1786 = vpack.c.bf16 %v1781, %v1779
        %v1788 = vsel %vm1034, %v1783, 0
        %v1791 = vsel %vm1034, %v1784, 0
        %v1794 = vsel %vm1034, %v1785, 0
        %v1797 = vsel %vm1034, %v1786, 0
        %v1800 = vsel %vm1484, %v1007, 0
        %1802 = vmatpush.bf16.msra.mxu0 0
        %1803 = vmatpush.bf16.msra.mxu0 0
        %1804 = vmatpush.bf16.msra.mxu0 0
        %1805 = vmatpush.bf16.msra.mxu0 0
        %1806 = vmatpush.bf16.msra.mxu0 0
        %1807 = vmatpush.bf16.msra.mxu0 0
        %1808 = vmatpush.bf16.msra.mxu0 0
        %1809 = vmatpush.bf16.msra.mxu0 %v1800
        %1810 = vmatmul.bf16.gmra.mxu0 %v1788
        %v1811 = vpop.f32.mrf.mxu0
        %v1812 = vadd.f32 0.0, %v1811
        %v1813 = vpop.f32.mrf.mxu0
        %v1814 = vadd.f32 0.0, %v1813
        %1815 = vmatmul.bf16.gmra.mxu0 %v1791
        %v1816 = vpop.f32.mrf.mxu0
        %v1817 = vadd.f32 0.0, %v1816
        %v1818 = vpop.f32.mrf.mxu0
        %v1819 = vadd.f32 0.0, %v1818
        %1820 = vmatmul.bf16.gmra.mxu0 %v1794
        %v1821 = vpop.f32.mrf.mxu0
        %v1822 = vadd.f32 0.0, %v1821
        %v1823 = vpop.f32.mrf.mxu0
        %v1824 = vadd.f32 0.0, %v1823
        %1825 = vmatmul.bf16.gmra.mxu0 %v1797
        %v1826 = vpop.f32.mrf.mxu0
        %v1827 = vadd.f32 0.0, %v1826
        %v1828 = vpop.f32.mrf.mxu0
        %v1829 = vadd.f32 0.0, %v1828
        %1830 = vdwg.mxu0
        %v1831 = vadd.f32 %v1542, %v1812
        %v1832 = vadd.f32 %v1544, %v1814
        %v1833 = vadd.f32 %v1547, %v1817
        %v1834 = vadd.f32 %v1549, %v1819
        %v1835 = vadd.f32 %v1552, %v1822
        %v1836 = vadd.f32 %v1554, %v1824
        %v1837 = vadd.f32 %v1557, %v1827
        %v1838 = vadd.f32 %v1559, %v1829
        %1839 = vrot.lane.b32.xlu0 %v1018, 104
        %v1840 = vpop.permute.xlu0 %1839
        %1841 = vrot.lane.b32.xlu0 %v1019, 104
        %v1842 = vpop.permute.xlu0 %1841
        %1843 = vrot.lane.b32.xlu0 %v1020, 104
        %v1844 = vpop.permute.xlu0 %1843
        %1845 = vrot.lane.b32.xlu0 %v1021, 104
        %v1846 = vpop.permute.xlu0 %1845
        %1847 = vrot.lane.b32.xlu0 %v1018, 72
        %v1848 = vpop.permute.xlu0 %1847
        %1849 = vrot.lane.b32.xlu0 %v1019, 72
        %v1850 = vpop.permute.xlu0 %1849
        %1851 = vrot.lane.b32.xlu0 %v1020, 72
        %v1852 = vpop.permute.xlu0 %1851
        %1853 = vrot.lane.b32.xlu0 %v1021, 72
        %v1854 = vpop.permute.xlu0 %1853
        %v1856 = vsel %vm1034, %v1840, 0
        %v1859 = vsel %vm1034, %v1842, 0
        %v1862 = vsel %vm1034, %v1844, 0
        %v1865 = vsel %vm1034, %v1846, 0
        %v1868 = vsel %vm1034, %v1848, 0
        %v1871 = vsel %vm1034, %v1850, 0
        %v1874 = vsel %vm1034, %v1852, 0
        %v1877 = vsel %vm1034, %v1854, 0
        %1879 = vmatpush.bf16.xpose.msra.mxu0 0
        %1880 = vmatpush.bf16.xpose.msra.mxu0 0
        %1881 = vmatpush.bf16.xpose.msra.mxu0 0
        %1882 = vmatpush.bf16.xpose.msra.mxu0 0
        %1883 = vmatpush.bf16.xpose.msra.mxu0 %v1877
        %1884 = vmatpush.bf16.xpose.msra.mxu0 %v1874
        %1885 = vmatpush.bf16.xpose.msra.mxu0 %v1871
        %1886 = vmatpush.bf16.xpose.msra.mxu0 %v1868
        %1887 = vmatmul.bf16.gmra.mxu0 %v1856
        %v1888 = vpop.f32.mrf.mxu0
        %v1889 = vadd.f32 %v997, %v1888
        %v1890 = vpop.f32.mrf.mxu0
        %v1891 = vadd.f32 %v998, %v1890
        %1892 = vmatmul.bf16.gmra.mxu0 %v1859
        %v1893 = vpop.f32.mrf.mxu0
        %v1894 = vadd.f32 %v999, %v1893
        %v1895 = vpop.f32.mrf.mxu0
        %v1896 = vadd.f32 %v1000, %v1895
        %1897 = vmatmul.bf16.gmra.mxu0 %v1862
        %v1898 = vpop.f32.mrf.mxu0
        %v1899 = vadd.f32 %v1001, %v1898
        %v1900 = vpop.f32.mrf.mxu0
        %v1901 = vadd.f32 %v1002, %v1900
        %1902 = vmatmul.bf16.gmra.mxu0 %v1865
        %v1903 = vpop.f32.mrf.mxu0
        %v1904 = vadd.f32 %v1003, %v1903
        %v1905 = vpop.f32.mrf.mxu0
        %v1906 = vadd.f32 %v1004, %v1905
        %1907 = vdwg.mxu0
        %v1908 = vadd.f32 %v1889, %v1010
        %v1909 = vadd.f32 %v1891, %v1011
        %v1910 = vadd.f32 %v1894, %v1012
        %v1911 = vadd.f32 %v1896, %v1013
        %v1912 = vadd.f32 %v1899, %v1014
        %v1913 = vadd.f32 %v1901, %v1015
        %v1914 = vadd.f32 %v1904, %v1016
        %v1915 = vadd.f32 %v1906, %v1017
        %v1916 = vsel %vm1096, %v1908, -inf
        %1917 = vmax.xlane.f32.xlu0 %v1916
        %v1918 = vpop.xlane.xlu0 %1917
        %v1919 = vsel %vm1096, %v1909, -inf
        %1920 = vmax.xlane.f32.xlu0 %v1919
        %v1921 = vpop.xlane.xlu0 %1920
        %v1922 = vsel %vm1096, %v1910, -inf
        %1923 = vmax.xlane.f32.xlu0 %v1922
        %v1924 = vpop.xlane.xlu0 %1923
        %v1925 = vsel %vm1096, %v1911, -inf
        %1926 = vmax.xlane.f32.xlu0 %v1925
        %v1927 = vpop.xlane.xlu0 %1926
        %v1928 = vsel %vm1096, %v1912, -inf
        %1929 = vmax.xlane.f32.xlu0 %v1928
        %v1930 = vpop.xlane.xlu0 %1929
        %v1931 = vsel %vm1096, %v1913, -inf
        %1932 = vmax.xlane.f32.xlu0 %v1931
        %v1933 = vpop.xlane.xlu0 %1932
        %v1934 = vsel %vm1096, %v1914, -inf
        %1935 = vmax.xlane.f32.xlu0 %v1934
        %v1936 = vpop.xlane.xlu0 %1935
        %v1937 = vsel %vm1096, %v1915, -inf
        %1938 = vmax.xlane.f32.xlu0 %v1937
        %v1939 = vpop.xlane.xlu0 %1938
        %v1940 = vsub.f32 %v1908, %v1918
        %v1941 = vsub.f32 %v1909, %v1921
        %v1942 = vsub.f32 %v1910, %v1924
        %v1943 = vsub.f32 %v1911, %v1927
        %v1944 = vsub.f32 %v1912, %v1930
        %v1945 = vsub.f32 %v1913, %v1933
        %v1946 = vsub.f32 %v1914, %v1936
        %v1947 = vsub.f32 %v1915, %v1939
        %v1948 = vmul.f32 %v1940, 1.442695
        %v1949 = vpow.pop %v1948
        %v1950 = vmul.f32 %v1941, 1.442695
        %v1951 = vpow.pop %v1950
        %v1952 = vmul.f32 %v1942, 1.442695
        %v1953 = vpow.pop %v1952
        %v1954 = vmul.f32 %v1943, 1.442695
        %v1955 = vpow.pop %v1954
        %v1956 = vmul.f32 %v1944, 1.442695
        %v1957 = vpow.pop %v1956
        %v1958 = vmul.f32 %v1945, 1.442695
        %v1959 = vpow.pop %v1958
        %v1960 = vmul.f32 %v1946, 1.442695
        %v1961 = vpow.pop %v1960
        %v1962 = vmul.f32 %v1947, 1.442695
        %v1963 = vpow.pop %v1962
        %v1964 = vsel %vm1096, %v1949, 0.0
        %1965 = vadd.xlane.f32.xlu0 %v1964
        %v1966 = vpop.xlane.xlu0 %1965
        %v1967 = vsel %vm1096, %v1951, 0.0
        %1968 = vadd.xlane.f32.xlu0 %v1967
        %v1969 = vpop.xlane.xlu0 %1968
        %v1970 = vsel %vm1096, %v1953, 0.0
        %1971 = vadd.xlane.f32.xlu0 %v1970
        %v1972 = vpop.xlane.xlu0 %1971
        %v1973 = vsel %vm1096, %v1955, 0.0
        %1974 = vadd.xlane.f32.xlu0 %v1973
        %v1975 = vpop.xlane.xlu0 %1974
        %v1976 = vsel %vm1096, %v1957, 0.0
        %1977 = vadd.xlane.f32.xlu0 %v1976
        %v1978 = vpop.xlane.xlu0 %1977
        %v1979 = vsel %vm1096, %v1959, 0.0
        %1980 = vadd.xlane.f32.xlu0 %v1979
        %v1981 = vpop.xlane.xlu0 %1980
        %v1982 = vsel %vm1096, %v1961, 0.0
        %1983 = vadd.xlane.f32.xlu0 %v1982
        %v1984 = vpop.xlane.xlu0 %1983
        %v1985 = vsel %vm1096, %v1963, 0.0
        %1986 = vadd.xlane.f32.xlu0 %v1985
        %v1987 = vpop.xlane.xlu0 %1986
        %v1988 = vrcp.pop %v1966
        %v1989 = vrcp.pop %v1969
        %v1990 = vrcp.pop %v1972
        %v1991 = vrcp.pop %v1975
        %v1992 = vrcp.pop %v1978
        %v1993 = vrcp.pop %v1981
        %v1994 = vrcp.pop %v1984
        %v1995 = vrcp.pop %v1987
        %v1996 = vmul.f32 %v1949, %v1988
        %v1997 = vmul.f32 %v1951, %v1989
        %v1998 = vmul.f32 %v1953, %v1990
        %v1999 = vmul.f32 %v1955, %v1991
        %v2000 = vmul.f32 %v1957, %v1992
        %v2001 = vmul.f32 %v1959, %v1993
        %v2002 = vmul.f32 %v1961, %v1994
        %v2003 = vmul.f32 %v1963, %v1995
        %v2004 = vpack.c.bf16 %v1997, %v1996
        %v2005 = vpack.c.bf16 %v1999, %v1998
        %v2006 = vpack.c.bf16 %v2001, %v2000
        %v2007 = vpack.c.bf16 %v2003, %v2002
        %2008 = vrot.lane.b32.xlu0 %v1018, 40
        %v2009 = vpop.permute.xlu0 %2008
        %2010 = vrot.lane.b32.xlu0 %v1019, 40
        %v2011 = vpop.permute.xlu0 %2010
        %2012 = vrot.lane.b32.xlu0 %v1020, 40
        %v2013 = vpop.permute.xlu0 %2012
        %2014 = vrot.lane.b32.xlu0 %v1021, 40
        %v2015 = vpop.permute.xlu0 %2014
        %v2021 = vsel %vm1096, %v2004, 0
        %v2024 = vsel %vm1096, %v2005, 0
        %v2027 = vsel %vm1096, %v2006, 0
        %v2030 = vsel %vm1096, %v2007, 0
        %2032 = vmatpush.bf16.msra.mxu0 0
        %2033 = vmatpush.bf16.msra.mxu0 0
        %2034 = vmatpush.bf16.msra.mxu0 0
        %2035 = vmatpush.bf16.msra.mxu0 0
        %2036 = vmatpush.bf16.msra.mxu0 %v2015
        %2037 = vmatpush.bf16.msra.mxu0 %v2013
        %2038 = vmatpush.bf16.msra.mxu0 %v2011
        %2039 = vmatpush.bf16.msra.mxu0 %v2009
        %2040 = vmatmul.bf16.gmra.mxu0 %v2021
        %v2041 = vpop.f32.mrf.mxu0
        %v2042 = vadd.f32 0.0, %v2041
        %v2043 = vpop.f32.mrf.mxu0
        %v2044 = vadd.f32 0.0, %v2043
        %2045 = vmatmul.bf16.gmra.mxu0 %v2024
        %v2046 = vpop.f32.mrf.mxu0
        %v2047 = vadd.f32 0.0, %v2046
        %v2048 = vpop.f32.mrf.mxu0
        %v2049 = vadd.f32 0.0, %v2048
        %2050 = vmatmul.bf16.gmra.mxu0 %v2027
        %v2051 = vpop.f32.mrf.mxu0
        %v2052 = vadd.f32 0.0, %v2051
        %v2053 = vpop.f32.mrf.mxu0
        %v2054 = vadd.f32 0.0, %v2053
        %2055 = vmatmul.bf16.gmra.mxu0 %v2030
        %v2056 = vpop.f32.mrf.mxu0
        %v2057 = vadd.f32 0.0, %v2056
        %v2058 = vpop.f32.mrf.mxu0
        %v2059 = vadd.f32 0.0, %v2058
        %2060 = vdwg.mxu0
        %v2061 = vpack.c.bf16 %v2044, %v2042
        %v2062 = vpack.c.bf16 %v2049, %v2047
        %v2063 = vpack.c.bf16 %v2054, %v2052
        %v2064 = vpack.c.bf16 %v2059, %v2057
        %v2066 = vsel %vm1034, %v2061, 0
        %v2069 = vsel %vm1034, %v2062, 0
        %v2072 = vsel %vm1034, %v2063, 0
        %v2075 = vsel %vm1034, %v2064, 0
        %v2078 = vsel %vm1484, %v1008, 0
        %2080 = vmatpush.bf16.msra.mxu0 0
        %2081 = vmatpush.bf16.msra.mxu0 0
        %2082 = vmatpush.bf16.msra.mxu0 0
        %2083 = vmatpush.bf16.msra.mxu0 0
        %2084 = vmatpush.bf16.msra.mxu0 0
        %2085 = vmatpush.bf16.msra.mxu0 0
        %2086 = vmatpush.bf16.msra.mxu0 0
        %2087 = vmatpush.bf16.msra.mxu0 %v2078
        %2088 = vmatmul.bf16.gmra.mxu0 %v2066
        %v2089 = vpop.f32.mrf.mxu0
        %v2090 = vadd.f32 0.0, %v2089
        %v2091 = vpop.f32.mrf.mxu0
        %v2092 = vadd.f32 0.0, %v2091
        %2093 = vmatmul.bf16.gmra.mxu0 %v2069
        %v2094 = vpop.f32.mrf.mxu0
        %v2095 = vadd.f32 0.0, %v2094
        %v2096 = vpop.f32.mrf.mxu0
        %v2097 = vadd.f32 0.0, %v2096
        %2098 = vmatmul.bf16.gmra.mxu0 %v2072
        %v2099 = vpop.f32.mrf.mxu0
        %v2100 = vadd.f32 0.0, %v2099
        %v2101 = vpop.f32.mrf.mxu0
        %v2102 = vadd.f32 0.0, %v2101
        %2103 = vmatmul.bf16.gmra.mxu0 %v2075
        %v2104 = vpop.f32.mrf.mxu0
        %v2105 = vadd.f32 0.0, %v2104
        %v2106 = vpop.f32.mrf.mxu0
        %v2107 = vadd.f32 0.0, %v2106
        %2108 = vdwg.mxu0
        %v2109 = vadd.f32 %v1831, %v2090
        %v2110 = vadd.f32 %v1832, %v2092
        %v2111 = vadd.f32 %v1833, %v2095
        %v2112 = vadd.f32 %v1834, %v2097
        %v2113 = vadd.f32 %v1835, %v2100
        %v2114 = vadd.f32 %v1836, %v2102
        %v2115 = vadd.f32 %v1837, %v2105
        %v2116 = vadd.f32 %v1838, %v2107
        %v2118 = vperm.slane %v1009, 0
        %v2120 = vadd.f32 %v2109, %v2118
        %v2121 = vadd.f32 %v2110, %v2118
        %v2122 = vadd.f32 %v2111, %v2118
        %v2123 = vadd.f32 %v2112, %v2118
        %v2124 = vadd.f32 %v2113, %v2118
        %v2125 = vadd.f32 %v2114, %v2118
        %v2126 = vadd.f32 %v2115, %v2118
        %v2127 = vadd.f32 %v2116, %v2118
        %2128 = vst.msk [vmem:[%s452] sm:$0xff] %vm474, %v2120
        %2129 = vst.msk [vmem:[%s452 + $0x10] sm:$0xff] %vm474, %v2121
        %2130 = vst.msk [vmem:[%s452 + $0x20] sm:$0xff] %vm474, %v2122
        %2131 = vst.msk [vmem:[%s452 + $0x30] sm:$0xff] %vm474, %v2123
        %2132 = vst.msk [vmem:[%s452 + $0x40] sm:$0xff] %vm474, %v2124
        %2133 = vst.msk [vmem:[%s452 + $0x50] sm:$0xff] %vm474, %v2125
        %2134 = vst.msk [vmem:[%s452 + $0x60] sm:$0xff] %vm474, %v2126
        %2135 = vst.msk [vmem:[%s452 + $0x70] sm:$0xff] %vm474, %v2127
        %v2136 = vld [vmem:[#allocation10] sm:$0xff]
        %v2137 = vld [vmem:[#allocation10 + $0x8] sm:$0xff]
        %v2138 = vld [vmem:[#allocation10 + $0x10] sm:$0xff]
        %v2139 = vld [vmem:[#allocation10 + $0x18] sm:$0xff]
        %v2140 = vld [vmem:[#allocation10 + $0x20] sm:$0xff]
        %v2141 = vld [vmem:[#allocation10 + $0x28] sm:$0xff]
        %v2142 = vld [vmem:[#allocation10 + $0x30] sm:$0xff]
        %v2143 = vld [vmem:[#allocation10 + $0x38] sm:$0xff]
        %v2144 = vpack.c.bf16 %v941, %v936
        %v2145 = vpack.c.bf16 %v951, %v946
        %v2146 = vpack.c.bf16 %v961, %v956
        %v2147 = vpack.c.bf16 %v971, %v966
        %2152 = vrot.lane.b32.xlu0 %v2144, 96
        %v2153 = vpop.permute.xlu0 %2152
        %2154 = vrot.lane.b32.xlu0 %v2145, 96
        %v2155 = vpop.permute.xlu0 %2154
        %2156 = vrot.lane.b32.xlu0 %v2146, 96
        %v2157 = vpop.permute.xlu0 %2156
        %2158 = vrot.lane.b32.xlu0 %v2147, 96
        %v2159 = vpop.permute.xlu0 %2158
        %v2161 = vsel %vm1034, %v2144, 0
        %v2164 = vsel %vm1034, %v2145, 0
        %v2167 = vsel %vm1034, %v2146, 0
        %v2170 = vsel %vm1034, %v2147, 0
        %v2173 = vsel %vm1034, %v2153, 0
        %v2176 = vsel %vm1034, %v2155, 0
        %v2179 = vsel %vm1034, %v2157, 0
        %v2182 = vsel %vm1034, %v2159, 0
        %2184 = vmatpush.bf16.xpose.msra.mxu0 0
        %2185 = vmatpush.bf16.xpose.msra.mxu0 0
        %2186 = vmatpush.bf16.xpose.msra.mxu0 0
        %2187 = vmatpush.bf16.xpose.msra.mxu0 0
        %2188 = vmatpush.bf16.xpose.msra.mxu0 %v2182
        %2189 = vmatpush.bf16.xpose.msra.mxu0 %v2179
        %2190 = vmatpush.bf16.xpose.msra.mxu0 %v2176
        %2191 = vmatpush.bf16.xpose.msra.mxu0 %v2173
        %2192 = vmatmul.bf16.gmra.mxu0 %v2161
        %v2193 = vpop.f32.mrf.mxu0
        %v2194 = vadd.f32 %v973, %v2193
        %v2195 = vpop.f32.mrf.mxu0
        %v2196 = vadd.f32 %v974, %v2195
        %2197 = vmatmul.bf16.gmra.mxu0 %v2164
        %v2198 = vpop.f32.mrf.mxu0
        %v2199 = vadd.f32 %v975, %v2198
        %v2200 = vpop.f32.mrf.mxu0
        %v2201 = vadd.f32 %v976, %v2200
        %2202 = vmatmul.bf16.gmra.mxu0 %v2167
        %v2203 = vpop.f32.mrf.mxu0
        %v2204 = vadd.f32 %v977, %v2203
        %v2205 = vpop.f32.mrf.mxu0
        %v2206 = vadd.f32 %v978, %v2205
        %2207 = vmatmul.bf16.gmra.mxu0 %v2170
        %v2208 = vpop.f32.mrf.mxu0
        %v2209 = vadd.f32 %v979, %v2208
        %v2210 = vpop.f32.mrf.mxu0
        %v2211 = vadd.f32 %v980, %v2210
        %2212 = vdwg.mxu0
        %v2213 = vadd.f32 %v2194, %v2136
        %v2214 = vadd.f32 %v2196, %v2137
        %v2215 = vadd.f32 %v2199, %v2138
        %v2216 = vadd.f32 %v2201, %v2139
        %v2217 = vadd.f32 %v2204, %v2140
        %v2218 = vadd.f32 %v2206, %v2141
        %v2219 = vadd.f32 %v2209, %v2142
        %v2220 = vadd.f32 %v2211, %v2143
        %v2221 = vsel %vm1096, %v2213, -inf
        %2222 = vmax.xlane.f32.xlu0 %v2221
        %v2223 = vpop.xlane.xlu0 %2222
        %v2224 = vsel %vm1096, %v2214, -inf
        %2225 = vmax.xlane.f32.xlu0 %v2224
        %v2226 = vpop.xlane.xlu0 %2225
        %v2227 = vsel %vm1096, %v2215, -inf
        %2228 = vmax.xlane.f32.xlu0 %v2227
        %v2229 = vpop.xlane.xlu0 %2228
        %v2230 = vsel %vm1096, %v2216, -inf
        %2231 = vmax.xlane.f32.xlu0 %v2230
        %v2232 = vpop.xlane.xlu0 %2231
        %v2233 = vsel %vm1096, %v2217, -inf
        %2234 = vmax.xlane.f32.xlu0 %v2233
        %v2235 = vpop.xlane.xlu0 %2234
        %v2236 = vsel %vm1096, %v2218, -inf
        %2237 = vmax.xlane.f32.xlu0 %v2236
        %v2238 = vpop.xlane.xlu0 %2237
        %v2239 = vsel %vm1096, %v2219, -inf
        %2240 = vmax.xlane.f32.xlu0 %v2239
        %v2241 = vpop.xlane.xlu0 %2240
        %v2242 = vsel %vm1096, %v2220, -inf
        %2243 = vmax.xlane.f32.xlu0 %v2242
        %v2244 = vpop.xlane.xlu0 %2243
        %v2245 = vsub.f32 %v2213, %v2223
        %v2246 = vsub.f32 %v2214, %v2226
        %v2247 = vsub.f32 %v2215, %v2229
        %v2248 = vsub.f32 %v2216, %v2232
        %v2249 = vsub.f32 %v2217, %v2235
        %v2250 = vsub.f32 %v2218, %v2238
        %v2251 = vsub.f32 %v2219, %v2241
        %v2252 = vsub.f32 %v2220, %v2244
        %v2253 = vmul.f32 %v2245, 1.442695
        %v2254 = vpow.pop %v2253
        %v2255 = vmul.f32 %v2246, 1.442695
        %v2256 = vpow.pop %v2255
        %v2257 = vmul.f32 %v2247, 1.442695
        %v2258 = vpow.pop %v2257
        %v2259 = vmul.f32 %v2248, 1.442695
        %v2260 = vpow.pop %v2259
        %v2261 = vmul.f32 %v2249, 1.442695
        %v2262 = vpow.pop %v2261
        %v2263 = vmul.f32 %v2250, 1.442695
        %v2264 = vpow.pop %v2263
        %v2265 = vmul.f32 %v2251, 1.442695
        %v2266 = vpow.pop %v2265
        %v2267 = vmul.f32 %v2252, 1.442695
        %v2268 = vpow.pop %v2267
        %v2269 = vsel %vm1096, %v2254, 0.0
        %2270 = vadd.xlane.f32.xlu0 %v2269
        %v2271 = vpop.xlane.xlu0 %2270
        %v2272 = vsel %vm1096, %v2256, 0.0
        %2273 = vadd.xlane.f32.xlu0 %v2272
        %v2274 = vpop.xlane.xlu0 %2273
        %v2275 = vsel %vm1096, %v2258, 0.0
        %2276 = vadd.xlane.f32.xlu0 %v2275
        %v2277 = vpop.xlane.xlu0 %2276
        %v2278 = vsel %vm1096, %v2260, 0.0
        %2279 = vadd.xlane.f32.xlu0 %v2278
        %v2280 = vpop.xlane.xlu0 %2279
        %v2281 = vsel %vm1096, %v2262, 0.0
        %2282 = vadd.xlane.f32.xlu0 %v2281
        %v2283 = vpop.xlane.xlu0 %2282
        %v2284 = vsel %vm1096, %v2264, 0.0
        %2285 = vadd.xlane.f32.xlu0 %v2284
        %v2286 = vpop.xlane.xlu0 %2285
        %v2287 = vsel %vm1096, %v2266, 0.0
        %2288 = vadd.xlane.f32.xlu0 %v2287
        %v2289 = vpop.xlane.xlu0 %2288
        %v2290 = vsel %vm1096, %v2268, 0.0
        %2291 = vadd.xlane.f32.xlu0 %v2290
        %v2292 = vpop.xlane.xlu0 %2291
        %v2293 = vrcp.pop %v2271
        %v2294 = vrcp.pop %v2274
        %v2295 = vrcp.pop %v2277
        %v2296 = vrcp.pop %v2280
        %v2297 = vrcp.pop %v2283
        %v2298 = vrcp.pop %v2286
        %v2299 = vrcp.pop %v2289
        %v2300 = vrcp.pop %v2292
        %v2301 = vmul.f32 %v2254, %v2293
        %v2302 = vmul.f32 %v2256, %v2294
        %v2303 = vmul.f32 %v2258, %v2295
        %v2304 = vmul.f32 %v2260, %v2296
        %v2305 = vmul.f32 %v2262, %v2297
        %v2306 = vmul.f32 %v2264, %v2298
        %v2307 = vmul.f32 %v2266, %v2299
        %v2308 = vmul.f32 %v2268, %v2300
        %v2309 = vpack.c.bf16 %v2302, %v2301
        %v2310 = vpack.c.bf16 %v2304, %v2303
        %v2311 = vpack.c.bf16 %v2306, %v2305
        %v2312 = vpack.c.bf16 %v2308, %v2307
        %2313 = vrot.lane.b32.xlu0 %v2144, 64
        %v2314 = vpop.permute.xlu0 %2313
        %2315 = vrot.lane.b32.xlu0 %v2145, 64
        %v2316 = vpop.permute.xlu0 %2315
        %2317 = vrot.lane.b32.xlu0 %v2146, 64
        %v2318 = vpop.permute.xlu0 %2317
        %2319 = vrot.lane.b32.xlu0 %v2147, 64
        %v2320 = vpop.permute.xlu0 %2319
        %v2326 = vsel %vm1096, %v2309, 0
        %v2329 = vsel %vm1096, %v2310, 0
        %v2332 = vsel %vm1096, %v2311, 0
        %v2335 = vsel %vm1096, %v2312, 0
        %2337 = vmatpush.bf16.msra.mxu0 0
        %2338 = vmatpush.bf16.msra.mxu0 0
        %2339 = vmatpush.bf16.msra.mxu0 0
        %2340 = vmatpush.bf16.msra.mxu0 0
        %2341 = vmatpush.bf16.msra.mxu0 %v2320
        %2342 = vmatpush.bf16.msra.mxu0 %v2318
        %2343 = vmatpush.bf16.msra.mxu0 %v2316
        %2344 = vmatpush.bf16.msra.mxu0 %v2314
        %2345 = vmatmul.bf16.gmra.mxu0 %v2326
        %v2346 = vpop.f32.mrf.mxu0
        %v2347 = vadd.f32 0.0, %v2346
        %v2348 = vpop.f32.mrf.mxu0
        %v2349 = vadd.f32 0.0, %v2348
        %2350 = vmatmul.bf16.gmra.mxu0 %v2329
        %v2351 = vpop.f32.mrf.mxu0
        %v2352 = vadd.f32 0.0, %v2351
        %v2353 = vpop.f32.mrf.mxu0
        %v2354 = vadd.f32 0.0, %v2353
        %2355 = vmatmul.bf16.gmra.mxu0 %v2332
        %v2356 = vpop.f32.mrf.mxu0
        %v2357 = vadd.f32 0.0, %v2356
        %v2358 = vpop.f32.mrf.mxu0
        %v2359 = vadd.f32 0.0, %v2358
        %2360 = vmatmul.bf16.gmra.mxu0 %v2335
        %v2361 = vpop.f32.mrf.mxu0
        %v2362 = vadd.f32 0.0, %v2361
        %v2363 = vpop.f32.mrf.mxu0
        %v2364 = vadd.f32 0.0, %v2363
        %2365 = vdwg.mxu0
        %v2366 = vpack.c.bf16 %v2349, %v2347
        %v2367 = vpack.c.bf16 %v2354, %v2352
        %v2368 = vpack.c.bf16 %v2359, %v2357
        %v2369 = vpack.c.bf16 %v2364, %v2362
        %2370 = vrot.lane.b32.xlu0 %v2144, 120
        %v2371 = vpop.permute.xlu0 %2370
        %2372 = vrot.lane.b32.xlu0 %v2145, 120
        %v2373 = vpop.permute.xlu0 %2372
        %2374 = vrot.lane.b32.xlu0 %v2146, 120
        %v2375 = vpop.permute.xlu0 %2374
        %2376 = vrot.lane.b32.xlu0 %v2147, 120
        %v2377 = vpop.permute.xlu0 %2376
        %2378 = vrot.lane.b32.xlu0 %v2144, 88
        %v2379 = vpop.permute.xlu0 %2378
        %2380 = vrot.lane.b32.xlu0 %v2145, 88
        %v2381 = vpop.permute.xlu0 %2380
        %2382 = vrot.lane.b32.xlu0 %v2146, 88
        %v2383 = vpop.permute.xlu0 %2382
        %2384 = vrot.lane.b32.xlu0 %v2147, 88
        %v2385 = vpop.permute.xlu0 %2384
        %v2387 = vsel %vm1034, %v2371, 0
        %v2390 = vsel %vm1034, %v2373, 0
        %v2393 = vsel %vm1034, %v2375, 0
        %v2396 = vsel %vm1034, %v2377, 0
        %v2399 = vsel %vm1034, %v2379, 0
        %v2402 = vsel %vm1034, %v2381, 0
        %v2405 = vsel %vm1034, %v2383, 0
        %v2408 = vsel %vm1034, %v2385, 0
        %2410 = vmatpush.bf16.xpose.msra.mxu0 0
        %2411 = vmatpush.bf16.xpose.msra.mxu0 0
        %2412 = vmatpush.bf16.xpose.msra.mxu0 0
        %2413 = vmatpush.bf16.xpose.msra.mxu0 0
        %2414 = vmatpush.bf16.xpose.msra.mxu0 %v2408
        %2415 = vmatpush.bf16.xpose.msra.mxu0 %v2405
        %2416 = vmatpush.bf16.xpose.msra.mxu0 %v2402
        %2417 = vmatpush.bf16.xpose.msra.mxu0 %v2399
        %2418 = vmatmul.bf16.gmra.mxu0 %v2387
        %v2419 = vpop.f32.mrf.mxu0
        %v2420 = vadd.f32 %v981, %v2419
        %v2421 = vpop.f32.mrf.mxu0
        %v2422 = vadd.f32 %v982, %v2421
        %2423 = vmatmul.bf16.gmra.mxu0 %v2390
        %v2424 = vpop.f32.mrf.mxu0
        %v2425 = vadd.f32 %v983, %v2424
        %v2426 = vpop.f32.mrf.mxu0
        %v2427 = vadd.f32 %v984, %v2426
        %2428 = vmatmul.bf16.gmra.mxu0 %v2393
        %v2429 = vpop.f32.mrf.mxu0
        %v2430 = vadd.f32 %v985, %v2429
        %v2431 = vpop.f32.mrf.mxu0
        %v2432 = vadd.f32 %v986, %v2431
        %2433 = vmatmul.bf16.gmra.mxu0 %v2396
        %v2434 = vpop.f32.mrf.mxu0
        %v2435 = vadd.f32 %v987, %v2434
        %v2436 = vpop.f32.mrf.mxu0
        %v2437 = vadd.f32 %v988, %v2436
        %2438 = vdwg.mxu0
        %v2439 = vadd.f32 %v2420, %v2136
        %v2440 = vadd.f32 %v2422, %v2137
        %v2441 = vadd.f32 %v2425, %v2138
        %v2442 = vadd.f32 %v2427, %v2139
        %v2443 = vadd.f32 %v2430, %v2140
        %v2444 = vadd.f32 %v2432, %v2141
        %v2445 = vadd.f32 %v2435, %v2142
        %v2446 = vadd.f32 %v2437, %v2143
        %v2447 = vsel %vm1096, %v2439, -inf
        %2448 = vmax.xlane.f32.xlu0 %v2447
        %v2449 = vpop.xlane.xlu0 %2448
        %v2450 = vsel %vm1096, %v2440, -inf
        %2451 = vmax.xlane.f32.xlu0 %v2450
        %v2452 = vpop.xlane.xlu0 %2451
        %v2453 = vsel %vm1096, %v2441, -inf
        %2454 = vmax.xlane.f32.xlu0 %v2453
        %v2455 = vpop.xlane.xlu0 %2454
        %v2456 = vsel %vm1096, %v2442, -inf
        %2457 = vmax.xlane.f32.xlu0 %v2456
        %v2458 = vpop.xlane.xlu0 %2457
        %v2459 = vsel %vm1096, %v2443, -inf
        %2460 = vmax.xlane.f32.xlu0 %v2459
        %v2461 = vpop.xlane.xlu0 %2460
        %v2462 = vsel %vm1096, %v2444, -inf
        %2463 = vmax.xlane.f32.xlu0 %v2462
        %v2464 = vpop.xlane.xlu0 %2463
        %v2465 = vsel %vm1096, %v2445, -inf
        %2466 = vmax.xlane.f32.xlu0 %v2465
        %v2467 = vpop.xlane.xlu0 %2466
        %v2468 = vsel %vm1096, %v2446, -inf
        %2469 = vmax.xlane.f32.xlu0 %v2468
        %v2470 = vpop.xlane.xlu0 %2469
        %v2471 = vsub.f32 %v2439, %v2449
        %v2472 = vsub.f32 %v2440, %v2452
        %v2473 = vsub.f32 %v2441, %v2455
        %v2474 = vsub.f32 %v2442, %v2458
        %v2475 = vsub.f32 %v2443, %v2461
        %v2476 = vsub.f32 %v2444, %v2464
        %v2477 = vsub.f32 %v2445, %v2467
        %v2478 = vsub.f32 %v2446, %v2470
        %v2479 = vmul.f32 %v2471, 1.442695
        %v2480 = vpow.pop %v2479
        %v2481 = vmul.f32 %v2472, 1.442695
        %v2482 = vpow.pop %v2481
        %v2483 = vmul.f32 %v2473, 1.442695
        %v2484 = vpow.pop %v2483
        %v2485 = vmul.f32 %v2474, 1.442695
        %v2486 = vpow.pop %v2485
        %v2487 = vmul.f32 %v2475, 1.442695
        %v2488 = vpow.pop %v2487
        %v2489 = vmul.f32 %v2476, 1.442695
        %v2490 = vpow.pop %v2489
        %v2491 = vmul.f32 %v2477, 1.442695
        %v2492 = vpow.pop %v2491
        %v2493 = vmul.f32 %v2478, 1.442695
        %v2494 = vpow.pop %v2493
        %v2495 = vsel %vm1096, %v2480, 0.0
        %2496 = vadd.xlane.f32.xlu0 %v2495
        %v2497 = vpop.xlane.xlu0 %2496
        %v2498 = vsel %vm1096, %v2482, 0.0
        %2499 = vadd.xlane.f32.xlu0 %v2498
        %v2500 = vpop.xlane.xlu0 %2499
        %v2501 = vsel %vm1096, %v2484, 0.0
        %2502 = vadd.xlane.f32.xlu0 %v2501
        %v2503 = vpop.xlane.xlu0 %2502
        %v2504 = vsel %vm1096, %v2486, 0.0
        %2505 = vadd.xlane.f32.xlu0 %v2504
        %v2506 = vpop.xlane.xlu0 %2505
        %v2507 = vsel %vm1096, %v2488, 0.0
        %2508 = vadd.xlane.f32.xlu0 %v2507
        %v2509 = vpop.xlane.xlu0 %2508
        %v2510 = vsel %vm1096, %v2490, 0.0
        %2511 = vadd.xlane.f32.xlu0 %v2510
        %v2512 = vpop.xlane.xlu0 %2511
        %v2513 = vsel %vm1096, %v2492, 0.0
        %2514 = vadd.xlane.f32.xlu0 %v2513
        %v2515 = vpop.xlane.xlu0 %2514
        %v2516 = vsel %vm1096, %v2494, 0.0
        %2517 = vadd.xlane.f32.xlu0 %v2516
        %v2518 = vpop.xlane.xlu0 %2517
        %v2519 = vrcp.pop %v2497
        %v2520 = vrcp.pop %v2500
        %v2521 = vrcp.pop %v2503
        %v2522 = vrcp.pop %v2506
        %v2523 = vrcp.pop %v2509
        %v2524 = vrcp.pop %v2512
        %v2525 = vrcp.pop %v2515
        %v2526 = vrcp.pop %v2518
        %v2527 = vmul.f32 %v2480, %v2519
        %v2528 = vmul.f32 %v2482, %v2520
        %v2529 = vmul.f32 %v2484, %v2521
        %v2530 = vmul.f32 %v2486, %v2522
        %v2531 = vmul.f32 %v2488, %v2523
        %v2532 = vmul.f32 %v2490, %v2524
        %v2533 = vmul.f32 %v2492, %v2525
        %v2534 = vmul.f32 %v2494, %v2526
        %v2535 = vpack.c.bf16 %v2528, %v2527
        %v2536 = vpack.c.bf16 %v2530, %v2529
        %v2537 = vpack.c.bf16 %v2532, %v2531
        %v2538 = vpack.c.bf16 %v2534, %v2533
        %2539 = vrot.lane.b32.xlu0 %v2144, 56
        %v2540 = vpop.permute.xlu0 %2539
        %2541 = vrot.lane.b32.xlu0 %v2145, 56
        %v2542 = vpop.permute.xlu0 %2541
        %2543 = vrot.lane.b32.xlu0 %v2146, 56
        %v2544 = vpop.permute.xlu0 %2543
        %2545 = vrot.lane.b32.xlu0 %v2147, 56
        %v2546 = vpop.permute.xlu0 %2545
        %v2552 = vsel %vm1096, %v2535, 0
        %v2555 = vsel %vm1096, %v2536, 0
        %v2558 = vsel %vm1096, %v2537, 0
        %v2561 = vsel %vm1096, %v2538, 0
        %2563 = vmatpush.bf16.msra.mxu0 0
        %2564 = vmatpush.bf16.msra.mxu0 0
        %2565 = vmatpush.bf16.msra.mxu0 0
        %2566 = vmatpush.bf16.msra.mxu0 0
        %2567 = vmatpush.bf16.msra.mxu0 %v2546
        %2568 = vmatpush.bf16.msra.mxu0 %v2544
        %2569 = vmatpush.bf16.msra.mxu0 %v2542
        %2570 = vmatpush.bf16.msra.mxu0 %v2540
        %2571 = vmatmul.bf16.gmra.mxu0 %v2552
        %v2572 = vpop.f32.mrf.mxu0
        %v2573 = vadd.f32 0.0, %v2572
        %v2574 = vpop.f32.mrf.mxu0
        %v2575 = vadd.f32 0.0, %v2574
        %2576 = vmatmul.bf16.gmra.mxu0 %v2555
        %v2577 = vpop.f32.mrf.mxu0
        %v2578 = vadd.f32 0.0, %v2577
        %v2579 = vpop.f32.mrf.mxu0
        %v2580 = vadd.f32 0.0, %v2579
        %2581 = vmatmul.bf16.gmra.mxu0 %v2558
        %v2582 = vpop.f32.mrf.mxu0
        %v2583 = vadd.f32 0.0, %v2582
        %v2584 = vpop.f32.mrf.mxu0
        %v2585 = vadd.f32 0.0, %v2584
        %2586 = vmatmul.bf16.gmra.mxu0 %v2561
        %v2587 = vpop.f32.mrf.mxu0
        %v2588 = vadd.f32 0.0, %v2587
        %v2589 = vpop.f32.mrf.mxu0
        %v2590 = vadd.f32 0.0, %v2589
        %2591 = vdwg.mxu0
        %v2592 = vpack.c.bf16 %v2575, %v2573
        %v2593 = vpack.c.bf16 %v2580, %v2578
        %v2594 = vpack.c.bf16 %v2585, %v2583
        %v2595 = vpack.c.bf16 %v2590, %v2588
        %v2597 = vsel %vm1034, %v2592, 0
        %v2600 = vsel %vm1034, %v2593, 0
        %v2603 = vsel %vm1034, %v2594, 0
        %v2606 = vsel %vm1034, %v2595, 0
        %2608 = vmatpush.bf16.msra.mxu0 0
        %2609 = vmatpush.bf16.msra.mxu0 0
        %2610 = vmatpush.bf16.msra.mxu0 0
        %2611 = vmatpush.bf16.msra.mxu0 0
        %2612 = vmatpush.bf16.msra.mxu0 0
        %2613 = vmatpush.bf16.msra.mxu0 0
        %2614 = vmatpush.bf16.msra.mxu0 0
        %2615 = vmatpush.bf16.msra.mxu0 %v1486
        %2616 = vmatmul.bf16.gmra.mxu0 %v2597
        %v2617 = vpop.f32.mrf.mxu0
        %v2618 = vadd.f32 0.0, %v2617
        %v2619 = vpop.f32.mrf.mxu0
        %v2620 = vadd.f32 0.0, %v2619
        %2621 = vmatmul.bf16.gmra.mxu0 %v2600
        %v2622 = vpop.f32.mrf.mxu0
        %v2623 = vadd.f32 0.0, %v2622
        %v2624 = vpop.f32.mrf.mxu0
        %v2625 = vadd.f32 0.0, %v2624
        %2626 = vmatmul.bf16.gmra.mxu0 %v2603
        %v2627 = vpop.f32.mrf.mxu0
        %v2628 = vadd.f32 0.0, %v2627
        %v2629 = vpop.f32.mrf.mxu0
        %v2630 = vadd.f32 0.0, %v2629
        %2631 = vmatmul.bf16.gmra.mxu0 %v2606
        %v2632 = vpop.f32.mrf.mxu0
        %v2633 = vadd.f32 0.0, %v2632
        %v2634 = vpop.f32.mrf.mxu0
        %v2635 = vadd.f32 0.0, %v2634
        %2636 = vdwg.mxu0
        %v2638 = vsel %vm1034, %v2366, 0
        %v2641 = vsel %vm1034, %v2367, 0
        %v2644 = vsel %vm1034, %v2368, 0
        %v2647 = vsel %vm1034, %v2369, 0
        %2649 = vmatpush.bf16.msra.mxu0 0
        %2650 = vmatpush.bf16.msra.mxu0 0
        %2651 = vmatpush.bf16.msra.mxu0 0
        %2652 = vmatpush.bf16.msra.mxu0 0
        %2653 = vmatpush.bf16.msra.mxu0 0
        %2654 = vmatpush.bf16.msra.mxu0 0
        %2655 = vmatpush.bf16.msra.mxu0 0
        %2656 = vmatpush.bf16.msra.mxu0 %v1530
        %2657 = vmatmul.bf16.gmra.mxu0 %v2638
        %v2658 = vpop.f32.mrf.mxu0
        %v2659 = vadd.f32 %v2618, %v2658
        %v2660 = vpop.f32.mrf.mxu0
        %v2661 = vadd.f32 %v2620, %v2660
        %2662 = vmatmul.bf16.gmra.mxu0 %v2641
        %v2663 = vpop.f32.mrf.mxu0
        %v2664 = vadd.f32 %v2623, %v2663
        %v2665 = vpop.f32.mrf.mxu0
        %v2666 = vadd.f32 %v2625, %v2665
        %2667 = vmatmul.bf16.gmra.mxu0 %v2644
        %v2668 = vpop.f32.mrf.mxu0
        %v2669 = vadd.f32 %v2628, %v2668
        %v2670 = vpop.f32.mrf.mxu0
        %v2671 = vadd.f32 %v2630, %v2670
        %2672 = vmatmul.bf16.gmra.mxu0 %v2647
        %v2673 = vpop.f32.mrf.mxu0
        %v2674 = vadd.f32 %v2633, %v2673
        %v2675 = vpop.f32.mrf.mxu0
        %v2676 = vadd.f32 %v2635, %v2675
        %2677 = vdwg.mxu0
        %2678 = vrot.lane.b32.xlu0 %v2144, 112
        %v2679 = vpop.permute.xlu0 %2678
        %2680 = vrot.lane.b32.xlu0 %v2145, 112
        %v2681 = vpop.permute.xlu0 %2680
        %2682 = vrot.lane.b32.xlu0 %v2146, 112
        %v2683 = vpop.permute.xlu0 %2682
        %2684 = vrot.lane.b32.xlu0 %v2147, 112
        %v2685 = vpop.permute.xlu0 %2684
        %2686 = vrot.lane.b32.xlu0 %v2144, 80
        %v2687 = vpop.permute.xlu0 %2686
        %2688 = vrot.lane.b32.xlu0 %v2145, 80
        %v2689 = vpop.permute.xlu0 %2688
        %2690 = vrot.lane.b32.xlu0 %v2146, 80
        %v2691 = vpop.permute.xlu0 %2690
        %2692 = vrot.lane.b32.xlu0 %v2147, 80
        %v2693 = vpop.permute.xlu0 %2692
        %v2695 = vsel %vm1034, %v2679, 0
        %v2698 = vsel %vm1034, %v2681, 0
        %v2701 = vsel %vm1034, %v2683, 0
        %v2704 = vsel %vm1034, %v2685, 0
        %v2707 = vsel %vm1034, %v2687, 0
        %v2710 = vsel %vm1034, %v2689, 0
        %v2713 = vsel %vm1034, %v2691, 0
        %v2716 = vsel %vm1034, %v2693, 0
        %2718 = vmatpush.bf16.xpose.msra.mxu0 0
        %2719 = vmatpush.bf16.xpose.msra.mxu0 0
        %2720 = vmatpush.bf16.xpose.msra.mxu0 0
        %2721 = vmatpush.bf16.xpose.msra.mxu0 0
        %2722 = vmatpush.bf16.xpose.msra.mxu0 %v2716
        %2723 = vmatpush.bf16.xpose.msra.mxu0 %v2713
        %2724 = vmatpush.bf16.xpose.msra.mxu0 %v2710
        %2725 = vmatpush.bf16.xpose.msra.mxu0 %v2707
        %2726 = vmatmul.bf16.gmra.mxu0 %v2695
        %v2727 = vpop.f32.mrf.mxu0
        %v2728 = vadd.f32 %v989, %v2727
        %v2729 = vpop.f32.mrf.mxu0
        %v2730 = vadd.f32 %v990, %v2729
        %2731 = vmatmul.bf16.gmra.mxu0 %v2698
        %v2732 = vpop.f32.mrf.mxu0
        %v2733 = vadd.f32 %v991, %v2732
        %v2734 = vpop.f32.mrf.mxu0
        %v2735 = vadd.f32 %v992, %v2734
        %2736 = vmatmul.bf16.gmra.mxu0 %v2701
        %v2737 = vpop.f32.mrf.mxu0
        %v2738 = vadd.f32 %v993, %v2737
        %v2739 = vpop.f32.mrf.mxu0
        %v2740 = vadd.f32 %v994, %v2739
        %2741 = vmatmul.bf16.gmra.mxu0 %v2704
        %v2742 = vpop.f32.mrf.mxu0
        %v2743 = vadd.f32 %v995, %v2742
        %v2744 = vpop.f32.mrf.mxu0
        %v2745 = vadd.f32 %v996, %v2744
        %2746 = vdwg.mxu0
        %v2747 = vadd.f32 %v2728, %v2136
        %v2748 = vadd.f32 %v2730, %v2137
        %v2749 = vadd.f32 %v2733, %v2138
        %v2750 = vadd.f32 %v2735, %v2139
        %v2751 = vadd.f32 %v2738, %v2140
        %v2752 = vadd.f32 %v2740, %v2141
        %v2753 = vadd.f32 %v2743, %v2142
        %v2754 = vadd.f32 %v2745, %v2143
        %v2755 = vsel %vm1096, %v2747, -inf
        %2756 = vmax.xlane.f32.xlu0 %v2755
        %v2757 = vpop.xlane.xlu0 %2756
        %v2758 = vsel %vm1096, %v2748, -inf
        %2759 = vmax.xlane.f32.xlu0 %v2758
        %v2760 = vpop.xlane.xlu0 %2759
        %v2761 = vsel %vm1096, %v2749, -inf
        %2762 = vmax.xlane.f32.xlu0 %v2761
        %v2763 = vpop.xlane.xlu0 %2762
        %v2764 = vsel %vm1096, %v2750, -inf
        %2765 = vmax.xlane.f32.xlu0 %v2764
        %v2766 = vpop.xlane.xlu0 %2765
        %v2767 = vsel %vm1096, %v2751, -inf
        %2768 = vmax.xlane.f32.xlu0 %v2767
        %v2769 = vpop.xlane.xlu0 %2768
        %v2770 = vsel %vm1096, %v2752, -inf
        %2771 = vmax.xlane.f32.xlu0 %v2770
        %v2772 = vpop.xlane.xlu0 %2771
        %v2773 = vsel %vm1096, %v2753, -inf
        %2774 = vmax.xlane.f32.xlu0 %v2773
        %v2775 = vpop.xlane.xlu0 %2774
        %v2776 = vsel %vm1096, %v2754, -inf
        %2777 = vmax.xlane.f32.xlu0 %v2776
        %v2778 = vpop.xlane.xlu0 %2777
        %v2779 = vsub.f32 %v2747, %v2757
        %v2780 = vsub.f32 %v2748, %v2760
        %v2781 = vsub.f32 %v2749, %v2763
        %v2782 = vsub.f32 %v2750, %v2766
        %v2783 = vsub.f32 %v2751, %v2769
        %v2784 = vsub.f32 %v2752, %v2772
        %v2785 = vsub.f32 %v2753, %v2775
        %v2786 = vsub.f32 %v2754, %v2778
        %v2787 = vmul.f32 %v2779, 1.442695
        %v2788 = vpow.pop %v2787
        %v2789 = vmul.f32 %v2780, 1.442695
        %v2790 = vpow.pop %v2789
        %v2791 = vmul.f32 %v2781, 1.442695
        %v2792 = vpow.pop %v2791
        %v2793 = vmul.f32 %v2782, 1.442695
        %v2794 = vpow.pop %v2793
        %v2795 = vmul.f32 %v2783, 1.442695
        %v2796 = vpow.pop %v2795
        %v2797 = vmul.f32 %v2784, 1.442695
        %v2798 = vpow.pop %v2797
        %v2799 = vmul.f32 %v2785, 1.442695
        %v2800 = vpow.pop %v2799
        %v2801 = vmul.f32 %v2786, 1.442695
        %v2802 = vpow.pop %v2801
        %v2803 = vsel %vm1096, %v2788, 0.0
        %2804 = vadd.xlane.f32.xlu0 %v2803
        %v2805 = vpop.xlane.xlu0 %2804
        %v2806 = vsel %vm1096, %v2790, 0.0
        %2807 = vadd.xlane.f32.xlu0 %v2806
        %v2808 = vpop.xlane.xlu0 %2807
        %v2809 = vsel %vm1096, %v2792, 0.0
        %2810 = vadd.xlane.f32.xlu0 %v2809
        %v2811 = vpop.xlane.xlu0 %2810
        %v2812 = vsel %vm1096, %v2794, 0.0
        %2813 = vadd.xlane.f32.xlu0 %v2812
        %v2814 = vpop.xlane.xlu0 %2813
        %v2815 = vsel %vm1096, %v2796, 0.0
        %2816 = vadd.xlane.f32.xlu0 %v2815
        %v2817 = vpop.xlane.xlu0 %2816
        %v2818 = vsel %vm1096, %v2798, 0.0
        %2819 = vadd.xlane.f32.xlu0 %v2818
        %v2820 = vpop.xlane.xlu0 %2819
        %v2821 = vsel %vm1096, %v2800, 0.0
        %2822 = vadd.xlane.f32.xlu0 %v2821
        %v2823 = vpop.xlane.xlu0 %2822
        %v2824 = vsel %vm1096, %v2802, 0.0
        %2825 = vadd.xlane.f32.xlu0 %v2824
        %v2826 = vpop.xlane.xlu0 %2825
        %v2827 = vrcp.pop %v2805
        %v2828 = vrcp.pop %v2808
        %v2829 = vrcp.pop %v2811
        %v2830 = vrcp.pop %v2814
        %v2831 = vrcp.pop %v2817
        %v2832 = vrcp.pop %v2820
        %v2833 = vrcp.pop %v2823
        %v2834 = vrcp.pop %v2826
        %v2835 = vmul.f32 %v2788, %v2827
        %v2836 = vmul.f32 %v2790, %v2828
        %v2837 = vmul.f32 %v2792, %v2829
        %v2838 = vmul.f32 %v2794, %v2830
        %v2839 = vmul.f32 %v2796, %v2831
        %v2840 = vmul.f32 %v2798, %v2832
        %v2841 = vmul.f32 %v2800, %v2833
        %v2842 = vmul.f32 %v2802, %v2834
        %v2843 = vpack.c.bf16 %v2836, %v2835
        %v2844 = vpack.c.bf16 %v2838, %v2837
        %v2845 = vpack.c.bf16 %v2840, %v2839
        %v2846 = vpack.c.bf16 %v2842, %v2841
        %2847 = vrot.lane.b32.xlu0 %v2144, 48
        %v2848 = vpop.permute.xlu0 %2847
        %2849 = vrot.lane.b32.xlu0 %v2145, 48
        %v2850 = vpop.permute.xlu0 %2849
        %2851 = vrot.lane.b32.xlu0 %v2146, 48
        %v2852 = vpop.permute.xlu0 %2851
        %2853 = vrot.lane.b32.xlu0 %v2147, 48
        %v2854 = vpop.permute.xlu0 %2853
        %v2860 = vsel %vm1096, %v2843, 0
        %v2863 = vsel %vm1096, %v2844, 0
        %v2866 = vsel %vm1096, %v2845, 0
        %v2869 = vsel %vm1096, %v2846, 0
        %2871 = vmatpush.bf16.msra.mxu0 0
        %2872 = vmatpush.bf16.msra.mxu0 0
        %2873 = vmatpush.bf16.msra.mxu0 0
        %2874 = vmatpush.bf16.msra.mxu0 0
        %2875 = vmatpush.bf16.msra.mxu0 %v2854
        %2876 = vmatpush.bf16.msra.mxu0 %v2852
        %2877 = vmatpush.bf16.msra.mxu0 %v2850
        %2878 = vmatpush.bf16.msra.mxu0 %v2848
        %2879 = vmatmul.bf16.gmra.mxu0 %v2860
        %v2880 = vpop.f32.mrf.mxu0
        %v2881 = vadd.f32 0.0, %v2880
        %v2882 = vpop.f32.mrf.mxu0
        %v2883 = vadd.f32 0.0, %v2882
        %2884 = vmatmul.bf16.gmra.mxu0 %v2863
        %v2885 = vpop.f32.mrf.mxu0
        %v2886 = vadd.f32 0.0, %v2885
        %v2887 = vpop.f32.mrf.mxu0
        %v2888 = vadd.f32 0.0, %v2887
        %2889 = vmatmul.bf16.gmra.mxu0 %v2866
        %v2890 = vpop.f32.mrf.mxu0
        %v2891 = vadd.f32 0.0, %v2890
        %v2892 = vpop.f32.mrf.mxu0
        %v2893 = vadd.f32 0.0, %v2892
        %2894 = vmatmul.bf16.gmra.mxu0 %v2869
        %v2895 = vpop.f32.mrf.mxu0
        %v2896 = vadd.f32 0.0, %v2895
        %v2897 = vpop.f32.mrf.mxu0
        %v2898 = vadd.f32 0.0, %v2897
        %2899 = vdwg.mxu0
        %v2900 = vpack.c.bf16 %v2883, %v2881
        %v2901 = vpack.c.bf16 %v2888, %v2886
        %v2902 = vpack.c.bf16 %v2893, %v2891
        %v2903 = vpack.c.bf16 %v2898, %v2896
        %v2905 = vsel %vm1034, %v2900, 0
        %v2908 = vsel %vm1034, %v2901, 0
        %v2911 = vsel %vm1034, %v2902, 0
        %v2914 = vsel %vm1034, %v2903, 0
        %2916 = vmatpush.bf16.msra.mxu0 0
        %2917 = vmatpush.bf16.msra.mxu0 0
        %2918 = vmatpush.bf16.msra.mxu0 0
        %2919 = vmatpush.bf16.msra.mxu0 0
        %2920 = vmatpush.bf16.msra.mxu0 0
        %2921 = vmatpush.bf16.msra.mxu0 0
        %2922 = vmatpush.bf16.msra.mxu0 0
        %2923 = vmatpush.bf16.msra.mxu0 %v1800
        %2924 = vmatmul.bf16.gmra.mxu0 %v2905
        %v2925 = vpop.f32.mrf.mxu0
        %v2926 = vadd.f32 0.0, %v2925
        %v2927 = vpop.f32.mrf.mxu0
        %v2928 = vadd.f32 0.0, %v2927
        %2929 = vmatmul.bf16.gmra.mxu0 %v2908
        %v2930 = vpop.f32.mrf.mxu0
        %v2931 = vadd.f32 0.0, %v2930
        %v2932 = vpop.f32.mrf.mxu0
        %v2933 = vadd.f32 0.0, %v2932
        %2934 = vmatmul.bf16.gmra.mxu0 %v2911
        %v2935 = vpop.f32.mrf.mxu0
        %v2936 = vadd.f32 0.0, %v2935
        %v2937 = vpop.f32.mrf.mxu0
        %v2938 = vadd.f32 0.0, %v2937
        %2939 = vmatmul.bf16.gmra.mxu0 %v2914
        %v2940 = vpop.f32.mrf.mxu0
        %v2941 = vadd.f32 0.0, %v2940
        %v2942 = vpop.f32.mrf.mxu0
        %v2943 = vadd.f32 0.0, %v2942
        %2944 = vdwg.mxu0
        %v2945 = vadd.f32 %v2659, %v2926
        %v2946 = vadd.f32 %v2661, %v2928
        %v2947 = vadd.f32 %v2664, %v2931
        %v2948 = vadd.f32 %v2666, %v2933
        %v2949 = vadd.f32 %v2669, %v2936
        %v2950 = vadd.f32 %v2671, %v2938
        %v2951 = vadd.f32 %v2674, %v2941
        %v2952 = vadd.f32 %v2676, %v2943
        %2953 = vrot.lane.b32.xlu0 %v2144, 104
        %v2954 = vpop.permute.xlu0 %2953
        %2955 = vrot.lane.b32.xlu0 %v2145, 104
        %v2956 = vpop.permute.xlu0 %2955
        %2957 = vrot.lane.b32.xlu0 %v2146, 104
        %v2958 = vpop.permute.xlu0 %2957
        %2959 = vrot.lane.b32.xlu0 %v2147, 104
        %v2960 = vpop.permute.xlu0 %2959
        %2961 = vrot.lane.b32.xlu0 %v2144, 72
        %v2962 = vpop.permute.xlu0 %2961
        %2963 = vrot.lane.b32.xlu0 %v2145, 72
        %v2964 = vpop.permute.xlu0 %2963
        %2965 = vrot.lane.b32.xlu0 %v2146, 72
        %v2966 = vpop.permute.xlu0 %2965
        %2967 = vrot.lane.b32.xlu0 %v2147, 72
        %v2968 = vpop.permute.xlu0 %2967
        %v2970 = vsel %vm1034, %v2954, 0
        %v2973 = vsel %vm1034, %v2956, 0
        %v2976 = vsel %vm1034, %v2958, 0
        %v2979 = vsel %vm1034, %v2960, 0
        %v2982 = vsel %vm1034, %v2962, 0
        %v2985 = vsel %vm1034, %v2964, 0
        %v2988 = vsel %vm1034, %v2966, 0
        %v2991 = vsel %vm1034, %v2968, 0
        %2993 = vmatpush.bf16.xpose.msra.mxu0 0
        %2994 = vmatpush.bf16.xpose.msra.mxu0 0
        %2995 = vmatpush.bf16.xpose.msra.mxu0 0
        %2996 = vmatpush.bf16.xpose.msra.mxu0 0
        %2997 = vmatpush.bf16.xpose.msra.mxu0 %v2991
        %2998 = vmatpush.bf16.xpose.msra.mxu0 %v2988
        %2999 = vmatpush.bf16.xpose.msra.mxu0 %v2985
        %3000 = vmatpush.bf16.xpose.msra.mxu0 %v2982
        %3001 = vmatmul.bf16.gmra.mxu0 %v2970
        %v3002 = vpop.f32.mrf.mxu0
        %v3003 = vadd.f32 %v997, %v3002
        %v3004 = vpop.f32.mrf.mxu0
        %v3005 = vadd.f32 %v998, %v3004
        %3006 = vmatmul.bf16.gmra.mxu0 %v2973
        %v3007 = vpop.f32.mrf.mxu0
        %v3008 = vadd.f32 %v999, %v3007
        %v3009 = vpop.f32.mrf.mxu0
        %v3010 = vadd.f32 %v1000, %v3009
        %3011 = vmatmul.bf16.gmra.mxu0 %v2976
        %v3012 = vpop.f32.mrf.mxu0
        %v3013 = vadd.f32 %v1001, %v3012
        %v3014 = vpop.f32.mrf.mxu0
        %v3015 = vadd.f32 %v1002, %v3014
        %3016 = vmatmul.bf16.gmra.mxu0 %v2979
        %v3017 = vpop.f32.mrf.mxu0
        %v3018 = vadd.f32 %v1003, %v3017
        %v3019 = vpop.f32.mrf.mxu0
        %v3020 = vadd.f32 %v1004, %v3019
        %3021 = vdwg.mxu0
        %v3022 = vadd.f32 %v3003, %v2136
        %v3023 = vadd.f32 %v3005, %v2137
        %v3024 = vadd.f32 %v3008, %v2138
        %v3025 = vadd.f32 %v3010, %v2139
        %v3026 = vadd.f32 %v3013, %v2140
        %v3027 = vadd.f32 %v3015, %v2141
        %v3028 = vadd.f32 %v3018, %v2142
        %v3029 = vadd.f32 %v3020, %v2143
        %v3030 = vsel %vm1096, %v3022, -inf
        %3031 = vmax.xlane.f32.xlu0 %v3030
        %v3032 = vpop.xlane.xlu0 %3031
        %v3033 = vsel %vm1096, %v3023, -inf
        %3034 = vmax.xlane.f32.xlu0 %v3033
        %v3035 = vpop.xlane.xlu0 %3034
        %v3036 = vsel %vm1096, %v3024, -inf
        %3037 = vmax.xlane.f32.xlu0 %v3036
        %v3038 = vpop.xlane.xlu0 %3037
        %v3039 = vsel %vm1096, %v3025, -inf
        %3040 = vmax.xlane.f32.xlu0 %v3039
        %v3041 = vpop.xlane.xlu0 %3040
        %v3042 = vsel %vm1096, %v3026, -inf
        %3043 = vmax.xlane.f32.xlu0 %v3042
        %v3044 = vpop.xlane.xlu0 %3043
        %v3045 = vsel %vm1096, %v3027, -inf
        %3046 = vmax.xlane.f32.xlu0 %v3045
        %v3047 = vpop.xlane.xlu0 %3046
        %v3048 = vsel %vm1096, %v3028, -inf
        %3049 = vmax.xlane.f32.xlu0 %v3048
        %v3050 = vpop.xlane.xlu0 %3049
        %v3051 = vsel %vm1096, %v3029, -inf
        %3052 = vmax.xlane.f32.xlu0 %v3051
        %v3053 = vpop.xlane.xlu0 %3052
        %v3054 = vsub.f32 %v3022, %v3032
        %v3055 = vsub.f32 %v3023, %v3035
        %v3056 = vsub.f32 %v3024, %v3038
        %v3057 = vsub.f32 %v3025, %v3041
        %v3058 = vsub.f32 %v3026, %v3044
        %v3059 = vsub.f32 %v3027, %v3047
        %v3060 = vsub.f32 %v3028, %v3050
        %v3061 = vsub.f32 %v3029, %v3053
        %v3062 = vmul.f32 %v3054, 1.442695
        %v3063 = vpow.pop %v3062
        %v3064 = vmul.f32 %v3055, 1.442695
        %v3065 = vpow.pop %v3064
        %v3066 = vmul.f32 %v3056, 1.442695
        %v3067 = vpow.pop %v3066
        %v3068 = vmul.f32 %v3057, 1.442695
        %v3069 = vpow.pop %v3068
        %v3070 = vmul.f32 %v3058, 1.442695
        %v3071 = vpow.pop %v3070
        %v3072 = vmul.f32 %v3059, 1.442695
        %v3073 = vpow.pop %v3072
        %v3074 = vmul.f32 %v3060, 1.442695
        %v3075 = vpow.pop %v3074
        %v3076 = vmul.f32 %v3061, 1.442695
        %v3077 = vpow.pop %v3076
        %v3078 = vsel %vm1096, %v3063, 0.0
        %3079 = vadd.xlane.f32.xlu0 %v3078
        %v3080 = vpop.xlane.xlu0 %3079
        %v3081 = vsel %vm1096, %v3065, 0.0
        %3082 = vadd.xlane.f32.xlu0 %v3081
        %v3083 = vpop.xlane.xlu0 %3082
        %v3084 = vsel %vm1096, %v3067, 0.0
        %3085 = vadd.xlane.f32.xlu0 %v3084
        %v3086 = vpop.xlane.xlu0 %3085
        %v3087 = vsel %vm1096, %v3069, 0.0
        %3088 = vadd.xlane.f32.xlu0 %v3087
        %v3089 = vpop.xlane.xlu0 %3088
        %v3090 = vsel %vm1096, %v3071, 0.0
        %3091 = vadd.xlane.f32.xlu0 %v3090
        %v3092 = vpop.xlane.xlu0 %3091
        %v3093 = vsel %vm1096, %v3073, 0.0
        %3094 = vadd.xlane.f32.xlu0 %v3093
        %v3095 = vpop.xlane.xlu0 %3094
        %v3096 = vsel %vm1096, %v3075, 0.0
        %3097 = vadd.xlane.f32.xlu0 %v3096
        %v3098 = vpop.xlane.xlu0 %3097
        %v3099 = vsel %vm1096, %v3077, 0.0
        %3100 = vadd.xlane.f32.xlu0 %v3099
        %v3101 = vpop.xlane.xlu0 %3100
        %v3102 = vrcp.pop %v3080
        %v3103 = vrcp.pop %v3083
        %v3104 = vrcp.pop %v3086
        %v3105 = vrcp.pop %v3089
        %v3106 = vrcp.pop %v3092
        %v3107 = vrcp.pop %v3095
        %v3108 = vrcp.pop %v3098
        %v3109 = vrcp.pop %v3101
        %v3110 = vmul.f32 %v3063, %v3102
        %v3111 = vmul.f32 %v3065, %v3103
        %v3112 = vmul.f32 %v3067, %v3104
        %v3113 = vmul.f32 %v3069, %v3105
        %v3114 = vmul.f32 %v3071, %v3106
        %v3115 = vmul.f32 %v3073, %v3107
        %v3116 = vmul.f32 %v3075, %v3108
        %v3117 = vmul.f32 %v3077, %v3109
        %v3118 = vpack.c.bf16 %v3111, %v3110
        %v3119 = vpack.c.bf16 %v3113, %v3112
        %v3120 = vpack.c.bf16 %v3115, %v3114
        %v3121 = vpack.c.bf16 %v3117, %v3116
        %3122 = vrot.lane.b32.xlu0 %v2144, 40
        %v3123 = vpop.permute.xlu0 %3122
        %3124 = vrot.lane.b32.xlu0 %v2145, 40
        %v3125 = vpop.permute.xlu0 %3124
        %3126 = vrot.lane.b32.xlu0 %v2146, 40
        %v3127 = vpop.permute.xlu0 %3126
        %3128 = vrot.lane.b32.xlu0 %v2147, 40
        %v3129 = vpop.permute.xlu0 %3128
        %v3135 = vsel %vm1096, %v3118, 0
        %v3138 = vsel %vm1096, %v3119, 0
        %v3141 = vsel %vm1096, %v3120, 0
        %v3144 = vsel %vm1096, %v3121, 0
        %3146 = vmatpush.bf16.msra.mxu0 0
        %3147 = vmatpush.bf16.msra.mxu0 0
        %3148 = vmatpush.bf16.msra.mxu0 0
        %3149 = vmatpush.bf16.msra.mxu0 0
        %3150 = vmatpush.bf16.msra.mxu0 %v3129
        %3151 = vmatpush.bf16.msra.mxu0 %v3127
        %3152 = vmatpush.bf16.msra.mxu0 %v3125
        %3153 = vmatpush.bf16.msra.mxu0 %v3123
        %3154 = vmatmul.bf16.gmra.mxu0 %v3135
        %v3155 = vpop.f32.mrf.mxu0
        %v3156 = vadd.f32 0.0, %v3155
        %v3157 = vpop.f32.mrf.mxu0
        %v3158 = vadd.f32 0.0, %v3157
        %3159 = vmatmul.bf16.gmra.mxu0 %v3138
        %v3160 = vpop.f32.mrf.mxu0
        %v3161 = vadd.f32 0.0, %v3160
        %v3162 = vpop.f32.mrf.mxu0
        %v3163 = vadd.f32 0.0, %v3162
        %3164 = vmatmul.bf16.gmra.mxu0 %v3141
        %v3165 = vpop.f32.mrf.mxu0
        %v3166 = vadd.f32 0.0, %v3165
        %v3167 = vpop.f32.mrf.mxu0
        %v3168 = vadd.f32 0.0, %v3167
        %3169 = vmatmul.bf16.gmra.mxu0 %v3144
        %v3170 = vpop.f32.mrf.mxu0
        %v3171 = vadd.f32 0.0, %v3170
        %v3172 = vpop.f32.mrf.mxu0
        %v3173 = vadd.f32 0.0, %v3172
        %3174 = vdwg.mxu0
        %v3175 = vpack.c.bf16 %v3158, %v3156
        %v3176 = vpack.c.bf16 %v3163, %v3161
        %v3177 = vpack.c.bf16 %v3168, %v3166
        %v3178 = vpack.c.bf16 %v3173, %v3171
        %v3180 = vsel %vm1034, %v3175, 0
        %v3183 = vsel %vm1034, %v3176, 0
        %v3186 = vsel %vm1034, %v3177, 0
        %v3189 = vsel %vm1034, %v3178, 0
        %3191 = vmatpush.bf16.msra.mxu0 0
        %3192 = vmatpush.bf16.msra.mxu0 0
        %3193 = vmatpush.bf16.msra.mxu0 0
        %3194 = vmatpush.bf16.msra.mxu0 0
        %3195 = vmatpush.bf16.msra.mxu0 0
        %3196 = vmatpush.bf16.msra.mxu0 0
        %3197 = vmatpush.bf16.msra.mxu0 0
        %3198 = vmatpush.bf16.msra.mxu0 %v2078
        %3199 = vmatmul.bf16.gmra.mxu0 %v3180
        %v3200 = vpop.f32.mrf.mxu0
        %v3201 = vadd.f32 0.0, %v3200
        %v3202 = vpop.f32.mrf.mxu0
        %v3203 = vadd.f32 0.0, %v3202
        %3204 = vmatmul.bf16.gmra.mxu0 %v3183
        %v3205 = vpop.f32.mrf.mxu0
        %v3206 = vadd.f32 0.0, %v3205
        %v3207 = vpop.f32.mrf.mxu0
        %v3208 = vadd.f32 0.0, %v3207
        %3209 = vmatmul.bf16.gmra.mxu0 %v3186
        %v3210 = vpop.f32.mrf.mxu0
        %v3211 = vadd.f32 0.0, %v3210
        %v3212 = vpop.f32.mrf.mxu0
        %v3213 = vadd.f32 0.0, %v3212
        %3214 = vmatmul.bf16.gmra.mxu0 %v3189
        %v3215 = vpop.f32.mrf.mxu0
        %v3216 = vadd.f32 0.0, %v3215
        %v3217 = vpop.f32.mrf.mxu0
        %v3218 = vadd.f32 0.0, %v3217
        %3219 = vdwg.mxu0
        %v3220 = vadd.f32 %v2945, %v3201
        %v3221 = vadd.f32 %v2946, %v3203
        %v3222 = vadd.f32 %v2947, %v3206
        %v3223 = vadd.f32 %v2948, %v3208
        %v3224 = vadd.f32 %v2949, %v3211
        %v3225 = vadd.f32 %v2950, %v3213
        %v3226 = vadd.f32 %v2951, %v3216
        %v3227 = vadd.f32 %v2952, %v3218
        %v3228 = vadd.f32 %v3220, %v2118
        %v3229 = vadd.f32 %v3221, %v2118
        %v3230 = vadd.f32 %v3222, %v2118
        %v3231 = vadd.f32 %v3223, %v2118
        %v3232 = vadd.f32 %v3224, %v2118
        %v3233 = vadd.f32 %v3225, %v2118
        %v3234 = vadd.f32 %v3226, %v2118
        %v3235 = vadd.f32 %v3227, %v2118
        %3236 = vst.msk [vmem:[%s452 + $0x8] sm:$0xff] %vm474, %v3228
        %3237 = vst.msk [vmem:[%s452 + $0x18] sm:$0xff] %vm474, %v3229
        %3238 = vst.msk [vmem:[%s452 + $0x28] sm:$0xff] %vm474, %v3230
        %3239 = vst.msk [vmem:[%s452 + $0x38] sm:$0xff] %vm474, %v3231
        %3240 = vst.msk [vmem:[%s452 + $0x48] sm:$0xff] %vm474, %v3232
        %3241 = vst.msk [vmem:[%s452 + $0x58] sm:$0xff] %vm474, %v3233
        %3242 = vst.msk [vmem:[%s452 + $0x68] sm:$0xff] %vm474, %v3234
        %3243 = vst.msk [vmem:[%s452 + $0x78] sm:$0xff] %vm474, %v3235
        %s3244 = sand.u32 %s247, 1
        %s3245 = scalar_lea.sflag [#allocation4], %s3244
        %s3246 = sand.u32 %s247, 1
        %s3247 = smul.addr %s3246, 128
        %s3248 = scalar_lea.vmem [#allocation13], %s3247
        // Predicated region
        $region81: #{tpu_custom_call.1} parent=55 // pred_check
          %p3249 = pneg %p257
        $region82: #{tpu_custom_call.1} parent=55 // pred_check_branch
          %3251 = sbr.rel (%p3249) target = $region84
        $region83: #{tpu_custom_call.1} parent=55 // pred_region
          %s3252 = smul.u32 8, %s34
          %3254 = vsyncadd %s3245, 0
          %s3255 = smul.addr %s3252, 2
          %s3256 = smul.addr %s33, 32
          %s3257 = sadd.s32 %s3255, %s3256
          %s3258 = smul.addr %s3257, 8
          %s3259 = scalar_lea.hbm %s9, %s3258
          %s3260 = sshll.u32 %s3248, 4
          %s3261 = int_to_ptr.vmem [resolvable:$true] %s3260
          %s3262 = sshll.u32 %s3259, 4
          %s3263 = int_to_ptr.hbm [resolvable:$true] %s3262
          %3268 = dma.vmem_to_hbm [thread:$0]  %s3261, 2048, %s3263, %s3245, 128, 128, 8
        $region84: #{tpu_custom_call.1} parent=55 // pred_fallthru
          _
      $region56: #{tpu_custom_call.1} parent=5 // pred_fallthru
        _
      %p3269 = scmp.le.s32.totalorder 2, %s24
      // Predicated region
      $region85: #{tpu_custom_call.1} parent=5 // pred_check
        %p3270 = pneg %p3269
      $region86: #{tpu_custom_call.1} parent=5 // pred_check_branch
        %3272 = sbr.rel (%p3270) target = $region88
      $region87: #{tpu_custom_call.1} parent=5 // pred_region
        %s3273 = ssub.s32 %s24, 2
        // Predicated region
        $region89: #{tpu_custom_call.1} parent=87 // pred_check
          %p3274 = pneg %p263
        $region90: #{tpu_custom_call.1} parent=87 // pred_check_branch
          %3276 = sbr.rel (%p3274) target = $region92
        $region91: #{tpu_custom_call.1} parent=87 // pred_region
          %s3277 = sand.u32 %s248, 1
          %s3278 = scalar_lea.sflag [#allocation4], %s3277
          %s3279 = sand.u32 %s248, 1
          %s3280 = smul.addr %s3279, 128
          %s3281 = scalar_lea.vmem [#allocation13], %s3280
          %3283 = dma.done %s3278, 2048
        $region92: #{tpu_custom_call.1} parent=87 // pred_fallthru
          _
      $region88: #{tpu_custom_call.1} parent=5 // pred_fallthru
        _
    $region6: #{tpu_custom_call.1} parent=1 // loop_footer
      %s28 = sadd.s32 1, %s24
    $region7: #{tpu_custom_call.1} parent=1 // loop_footer_branch
      %23 = sbr.rel target = $region3
    $region8: #{tpu_custom_call.1} parent=1 // loop_exit
      _
    %3284 = vsyncpa [#allocation3], 1
    %s3285 = scalar_lea.sflag [#allocation3], 1
    %3286 = vsyncpa %s3285, 1
    %3287 = vsyncpa [#allocation6], 1
    %3288 = vsyncpa [#allocation9], 1
    %3289 = vsyncpa [#allocation12], 1
    %3290 = vsyncpa [#allocation4], 1
    %s3291 = scalar_lea.sflag [#allocation4], 1
    %3292 = vsyncpa %s3291, 1

</llo_original>
